<compile_context>
chip_gen: v7x
topology: tpu7x:2x2x1
jax: 0.10.0
libtpu: 0.0.40
codegen_flags: <defaults>
</compile_context>

<pallas_src>
import functools
import math

import jax
import jax.numpy as jnp
from jax.experimental import pallas as pl
from jax.experimental.pallas import tpu as pltpu

# ----------------------------- model config (small) -----------------------------
D_MODEL = 32
N_HEADS = 4
N_LAYERS = 2
VOCAB = 256
SEQ = 8
BATCH = 2
LN_EPS = 1e-5


# ----------------------------- in-kernel helpers -----------------------------
def _erf_approx(z):
    # Abramowitz & Stegun 7.1.26 rational approximation (|err| < 1.5e-7).
    # TODO(synk): lax.erf may not have a Mosaic lowering rule; use polynomial erf.
    a1, a2, a3, a4, a5 = 0.254829592, -0.284496736, 1.421413741, -1.453152027, 1.061405429
    p = 0.3275911
    sign = jnp.where(z >= 0.0, 1.0, -1.0)
    az = jnp.abs(z)
    t = 1.0 / (1.0 + p * az)
    poly = ((((a5 * t + a4) * t + a3) * t + a2) * t + a1) * t
    return sign * (1.0 - poly * jnp.exp(-az * az))


def _gelu_exact(x):
    # Matches torch.nn.GELU() default (approximate='none'): 0.5*x*(1+erf(x/sqrt(2)))
    return 0.5 * x * (1.0 + _erf_approx(x * (1.0 / math.sqrt(2.0))))


def _layer_norm(y, gamma, beta):
    mu = jnp.mean(y, axis=-1, keepdims=True)
    var = jnp.mean((y - mu) ** 2, axis=-1, keepdims=True)
    return (y - mu) * jax.lax.rsqrt(var + LN_EPS) * gamma + beta


# ----------------------------- fused whole-model kernel -----------------------------
def fused_decoder_kernel(n_layers, n_heads,
                         x_ref,
                         wqkv_ref, bqkv_ref, wo_ref, bo_ref,
                         g1_ref, be1_ref,
                         w1_ref, bf1_ref, w2_ref, bf2_ref,
                         g2_ref, be2_ref,
                         wout_ref, bout_ref,
                         logits_ref):
    x = x_ref[...]                        # (B, S, D)
    B, S, D = x.shape
    hd = D // n_heads
    scale = 1.0 / math.sqrt(hd)

    xf = x.reshape(B * S, D)              # activations stay resident in VMEM/vregs

    for l in range(n_layers):             # static unroll over layers
        # ---- fused QKV projection (pre-transposed weight: (D, 3D)) ----
        qkv = jnp.dot(xf, wqkv_ref[l], preferred_element_type=jnp.float32) + bqkv_ref[l]
        qkv = qkv.reshape(B, S, 3 * D)

        # ---- multi-head attention: batched over B per head (no mask) ----
        ctx_heads = []
        for h in range(n_heads):          # static, small head loop
            qh = qkv[:, :, h * hd:(h + 1) * hd] * scale                  # (B, S, hd)
            kh = qkv[:, :, D + h * hd:D + (h + 1) * hd]                  # (B, S, hd)
            vh = qkv[:, :, 2 * D + h * hd:2 * D + (h + 1) * hd]          # (B, S, hd)
            s_bst = jnp.einsum('bsd,btd->bst', qh, kh,
                               preferred_element_type=jnp.float32)       # (B, S, S)
            s_max = jnp.max(s_bst, axis=-1, keepdims=True)
            e = jnp.exp(s_bst - s_max)
            inv = pl.reciprocal(jnp.sum(e, axis=-1, keepdims=True), approx=True)
            p_bst = e * inv
            ctx_heads.append(jnp.einsum('bst,btd->bsd', p_bst, vh,
                                        preferred_element_type=jnp.float32))
        ctx = jnp.concatenate(ctx_heads, axis=-1).reshape(B * S, D)

        # ---- output projection (single (B*S, D) @ (D, D)) ----
        attn_out = jnp.dot(ctx, wo_ref[l], preferred_element_type=jnp.float32) + bo_ref[l]

        # ---- residual + LayerNorm 1 ----
        x1 = _layer_norm(xf + attn_out, g1_ref[l], be1_ref[l])

        # ---- feed-forward: Linear(D,4D) -> GELU -> Linear(4D,D) ----
        h1 = jnp.dot(x1, w1_ref[l], preferred_element_type=jnp.float32) + bf1_ref[l]
        h1 = _gelu_exact(h1)
        ff = jnp.dot(h1, w2_ref[l], preferred_element_type=jnp.float32) + bf2_ref[l]

        # ---- residual + LayerNorm 2 ----
        xf = _layer_norm(x1 + ff, g2_ref[l], be2_ref[l])

    # ---- final vocab projection: lane-dense (B*S, V) store ----
    logits_ref[...] = (jnp.dot(xf, wout_ref[...], preferred_element_type=jnp.float32)
                       + bout_ref[...])


@functools.partial(jax.jit, static_argnames=("n_layers", "n_heads"))
def gpt2_decoder_forward(x_sbd, stacked_params, w_out_t, b_out, *, n_layers, n_heads):
    S, B, D = x_sbd.shape
    V = w_out_t.shape[1]
    x_bsd = jnp.transpose(x_sbd, (1, 0, 2))        # host-side layout change only

    vmem = pl.BlockSpec(memory_space=pltpu.MemorySpace.VMEM)
    n_in = 1 + len(stacked_params) + 2

    logits_flat = pl.pallas_call(
        functools.partial(fused_decoder_kernel, n_layers, n_heads),
        out_shape=jax.ShapeDtypeStruct((B * S, V), jnp.float32),
        in_specs=[vmem] * n_in,
        out_specs=vmem,
    )(x_bsd, *stacked_params, w_out_t, b_out)

    # (B*S, V) -> (S, B, V) to match the PyTorch (seq, batch, vocab) layout.
    return jnp.transpose(logits_flat.reshape(B, S, V), (1, 0, 2))


# ----------------------------- pure-JAX reference (for verification) -----------------------------
def ref_layer(x, p, n_heads):
    (wqkv, bqkv, wo, bo, g1, be1, w1, bf1, w2, bf2, g2, be2) = p
    S, B, D = x.shape
    hd = D // n_heads
    scale = 1.0 / math.sqrt(hd)
    qkv = x @ wqkv.T + bqkv
    q, k, v = qkv[..., :D], qkv[..., D:2 * D], qkv[..., 2 * D:]
    q = (q * scale).reshape(S, B, n_heads, hd)
    k = k.reshape(S, B, n_heads, hd)
    v = v.reshape(S, B, n_heads, hd)
    scores = jnp.einsum('sbhd,tbhd->bhst', q, k)
    attn = jax.nn.softmax(scores, axis=-1)
    ctx = jnp.einsum('bhst,tbhd->sbhd', attn, v).reshape(S, B, D)
    attn_out = ctx @ wo.T + bo
    x1 = _layer_norm(x + attn_out, g1, be1)
    h = jax.nn.gelu(x1 @ w1.T + bf1, approximate=False)
    ff = h @ w2.T + bf2
    return _layer_norm(x1 + ff, g2, be2)


def ref_forward(x, layer_params, w_out, b_out, n_heads):
    with jax.default_matmul_precision('highest'):
        for p in layer_params:
            x = ref_layer(x, p, n_heads)
        return x @ w_out.T + b_out


# ----------------------------- parameter init / packing -----------------------------
def init_layer_params(key, d_model):
    ks = jax.random.split(key, 8)
    std = 0.02
    f32 = jnp.float32
    w_qkv = std * jax.random.normal(ks[0], (3 * d_model, d_model), f32)
    b_qkv = 0.01 * jax.random.normal(ks[1], (1, 3 * d_model), f32)
    w_o = std * jax.random.normal(ks[2], (d_model, d_model), f32)
    b_o = 0.01 * jax.random.normal(ks[3], (1, d_model), f32)
    g1 = jnp.ones((1, d_model), f32)
    be1 = jnp.zeros((1, d_model), f32)
    w1 = std * jax.random.normal(ks[4], (4 * d_model, d_model), f32)
    bf1 = 0.01 * jax.random.normal(ks[5], (1, 4 * d_model), f32)
    w2 = std * jax.random.normal(ks[6], (d_model, 4 * d_model), f32)
    bf2 = 0.01 * jax.random.normal(ks[7], (1, d_model), f32)
    g2 = jnp.ones((1, d_model), f32)
    be2 = jnp.zeros((1, d_model), f32)
    return (w_qkv, b_qkv, w_o, b_o, g1, be1, w1, bf1, w2, bf2, g2, be2)


def stack_layer_params(layer_params):
    """Stack per-layer params with a leading layer axis, pre-transposing weights
    so the kernel computes x @ W with lane-dense weight loads."""
    def stack(i, transpose=False):
        arrs = [p[i] for p in layer_params]
        if transpose:
            arrs = [jnp.transpose(a) for a in arrs]
        return jnp.stack(arrs, axis=0)

    return (
        stack(0, True),    # wqkv_t (L, D, 3D)
        stack(1),          # bqkv   (L, 1, 3D)
        stack(2, True),    # wo_t   (L, D, D)
        stack(3),          # bo     (L, 1, D)
        stack(4),          # g1     (L, 1, D)
        stack(5),          # be1    (L, 1, D)
        stack(6, True),    # w1_t   (L, D, 4D)
        stack(7),          # bf1    (L, 1, 4D)
        stack(8, True),    # w2_t   (L, 4D, D)
        stack(9),          # bf2    (L, 1, D)
        stack(10),         # g2     (L, 1, D)
        stack(11),         # be2    (L, 1, D)
    )


# ----------------------------- main -----------------------------
if __name__ == "__main__":
    root = jax.random.PRNGKey(0)
    kx, kp, ko = jax.random.split(root, 3)

    x = jax.random.normal(kx, (SEQ, BATCH, D_MODEL), jnp.float32)

    layer_keys = jax.random.split(kp, N_LAYERS)
    layer_params = [init_layer_params(k, D_MODEL) for k in layer_keys]
    stacked_params = stack_layer_params(layer_params)

    ko1, ko2 = jax.random.split(ko)
    w_out = 0.02 * jax.random.normal(ko1, (VOCAB, D_MODEL), jnp.float32)
    b_out = 0.01 * jax.random.normal(ko2, (1, VOCAB), jnp.float32)
    w_out_t = jnp.transpose(w_out)          # (D, V), lane-dense vocab axis last

    logits = gpt2_decoder_forward(x, stacked_params, w_out_t, b_out,
                                  n_layers=N_LAYERS, n_heads=N_HEADS)
    logits = jax.block_until_ready(logits)

    assert logits.shape == (SEQ, BATCH, VOCAB)
    assert bool(jnp.all(jnp.isfinite(logits)))

    ref = ref_forward(x, layer_params, w_out, b_out, N_HEADS)
    max_err = float(jnp.max(jnp.abs(logits - ref)))
    assert max_err < 5e-3, f"mismatch vs reference: {max_err}"

    print("KERNEL_OK")
</pallas_src>

<mosaic_0001>
module attributes {stable_mosaic.version = 11 : i64} {
  func.func @fused_decoder_kernel(%arg0: memref<2x8x32xf32, #tpu.memory_space<vmem>>, %arg1: memref<2x32x96xf32, #tpu.memory_space<vmem>>, %arg2: memref<2x1x96xf32, #tpu.memory_space<vmem>>, %arg3: memref<2x32x32xf32, #tpu.memory_space<vmem>>, %arg4: memref<2x1x32xf32, #tpu.memory_space<vmem>>, %arg5: memref<2x1x32xf32, #tpu.memory_space<vmem>>, %arg6: memref<2x1x32xf32, #tpu.memory_space<vmem>>, %arg7: memref<2x32x128xf32, #tpu.memory_space<vmem>>, %arg8: memref<2x1x128xf32, #tpu.memory_space<vmem>>, %arg9: memref<2x128x32xf32, #tpu.memory_space<vmem>>, %arg10: memref<2x1x32xf32, #tpu.memory_space<vmem>>, %arg11: memref<2x1x32xf32, #tpu.memory_space<vmem>>, %arg12: memref<2x1x32xf32, #tpu.memory_space<vmem>>, %arg13: memref<32x256xf32, #tpu.memory_space<vmem>>, %arg14: memref<1x256xf32, #tpu.memory_space<vmem>>, %arg15: memref<16x256xf32, #tpu.memory_space<vmem>>) attributes {dimension_semantics = [], scalar_prefetch = 0 : i64, scratch_operands = 0 : i64, tpu.core_type = #tpu.core_type<tc>} {
    %c0 = arith.constant 0 : index
    %c0_0 = arith.constant 0 : index
    %c0_1 = arith.constant 0 : index
    %0 = vector.load %arg0[%c0, %c0_0, %c0_1] : memref<2x8x32xf32, #tpu.memory_space<vmem>>, vector<2x8x32xf32>
    %1 = vector.shape_cast %0 : vector<2x8x32xf32> to vector<16x32xf32>
    %c0_2 = arith.constant 0 : index
    %c0_3 = arith.constant 0 : index
    %c0_4 = arith.constant 0 : index
    %2 = vector.load %arg1[%c0_2, %c0_3, %c0_4] : memref<2x32x96xf32, #tpu.memory_space<vmem>>, vector<1x32x96xf32>
    %3 = vector.shape_cast %2 : vector<1x32x96xf32> to vector<32x96xf32>
    %cst = arith.constant dense<0.000000e+00> : vector<16x96xf32>
    %4 = tpu.matmul %1, %3, %cst {dimension_numbers = #tpu.dot_dimension_numbers<[1], [0], [0], [1], [0, 0, 1, 1], [], []>} : vector<16x32xf32>, vector<32x96xf32>, vector<16x96xf32> -> vector<16x96xf32>
    %c0_5 = arith.constant 0 : index
    %c0_6 = arith.constant 0 : index
    %c0_7 = arith.constant 0 : index
    %5 = vector.load %arg2[%c0_5, %c0_6, %c0_7] : memref<2x1x96xf32, #tpu.memory_space<vmem>>, vector<1x1x96xf32>
    %6 = vector.shape_cast %5 : vector<1x1x96xf32> to vector<1x96xf32>
    %7 = vector.broadcast %6 : vector<1x96xf32> to vector<16x96xf32>
    %8 = arith.addf %4, %7 : vector<16x96xf32>
    %9 = vector.shape_cast %8 : vector<16x96xf32> to vector<2x8x96xf32>
    %10 = vector.extract_strided_slice %9 {offsets = [0, 0, 0], sizes = [2, 8, 8], strides = [1, 1, 1]} : vector<2x8x96xf32> to vector<2x8x8xf32>
    %cst_8 = arith.constant 0.353553385 : f32
    %11 = vector.broadcast %cst_8 : f32 to vector<2x8x8xf32>
    %12 = arith.mulf %10, %11 : vector<2x8x8xf32>
    %13 = vector.extract_strided_slice %9 {offsets = [0, 0, 32], sizes = [2, 8, 8], strides = [1, 1, 1]} : vector<2x8x96xf32> to vector<2x8x8xf32>
    %14 = vector.extract_strided_slice %9 {offsets = [0, 0, 64], sizes = [2, 8, 8], strides = [1, 1, 1]} : vector<2x8x96xf32> to vector<2x8x8xf32>
    "tpu.trace_start"() <{level = 10 : i32, message = "bsd,btd->bst"}> : () -> ()
    %cst_9 = arith.constant dense<0.000000e+00> : vector<2x8x8xf32>
    %15 = tpu.matmul %12, %13, %cst_9 {dimension_numbers = #tpu.dot_dimension_numbers<[2], [2], [1], [1], [0, 0, 0, 1, 1, 1], [0], [0]>} : vector<2x8x8xf32>, vector<2x8x8xf32>, vector<2x8x8xf32> -> vector<2x8x8xf32>
    "tpu.trace_stop"() : () -> ()
    %cst_10 = arith.constant dense<0xFF800000> : vector<2x8xf32>
    %16 = vector.multi_reduction <maximumf>, %15, %cst_10 [2] : vector<2x8x8xf32> to vector<2x8xf32>
    %17 = vector.shape_cast %16 : vector<2x8xf32> to vector<2x8x1xf32>
    %18 = vector.broadcast %17 : vector<2x8x1xf32> to vector<2x8x8xf32>
    %19 = arith.subf %15, %18 : vector<2x8x8xf32>
    %20 = math.exp %19 : vector<2x8x8xf32>
    %cst_11 = arith.constant dense<0.000000e+00> : vector<2x8xf32>
    %21 = vector.multi_reduction <add>, %20, %cst_11 [2] : vector<2x8x8xf32> to vector<2x8xf32>
    %22 = vector.shape_cast %21 : vector<2x8xf32> to vector<2x8x1xf32>
    %23 = tpu.reciprocal %22 {approx = true} : vector<2x8x1xf32> -> vector<2x8x1xf32>
    %24 = vector.broadcast %23 : vector<2x8x1xf32> to vector<2x8x8xf32>
    %25 = arith.mulf %20, %24 : vector<2x8x8xf32>
    "tpu.trace_start"() <{level = 10 : i32, message = "bst,btd->bsd"}> : () -> ()
    %cst_12 = arith.constant dense<0.000000e+00> : vector<2x8x8xf32>
    %26 = tpu.matmul %25, %14, %cst_12 {dimension_numbers = #tpu.dot_dimension_numbers<[2], [1], [1], [2], [0, 0, 0, 1, 1, 2], [0], [0]>} : vector<2x8x8xf32>, vector<2x8x8xf32>, vector<2x8x8xf32> -> vector<2x8x8xf32>
    "tpu.trace_stop"() : () -> ()
    %27 = vector.extract_strided_slice %9 {offsets = [0, 0, 8], sizes = [2, 8, 8], strides = [1, 1, 1]} : vector<2x8x96xf32> to vector<2x8x8xf32>
    %cst_13 = arith.constant 0.353553385 : f32
    %28 = vector.broadcast %cst_13 : f32 to vector<2x8x8xf32>
    %29 = arith.mulf %27, %28 : vector<2x8x8xf32>
    %30 = vector.extract_strided_slice %9 {offsets = [0, 0, 40], sizes = [2, 8, 8], strides = [1, 1, 1]} : vector<2x8x96xf32> to vector<2x8x8xf32>
    %31 = vector.extract_strided_slice %9 {offsets = [0, 0, 72], sizes = [2, 8, 8], strides = [1, 1, 1]} : vector<2x8x96xf32> to vector<2x8x8xf32>
    "tpu.trace_start"() <{level = 10 : i32, message = "bsd,btd->bst"}> : () -> ()
    %cst_14 = arith.constant dense<0.000000e+00> : vector<2x8x8xf32>
    %32 = tpu.matmul %29, %30, %cst_14 {dimension_numbers = #tpu.dot_dimension_numbers<[2], [2], [1], [1], [0, 0, 0, 1, 1, 1], [0], [0]>} : vector<2x8x8xf32>, vector<2x8x8xf32>, vector<2x8x8xf32> -> vector<2x8x8xf32>
    "tpu.trace_stop"() : () -> ()
    %cst_15 = arith.constant dense<0xFF800000> : vector<2x8xf32>
    %33 = vector.multi_reduction <maximumf>, %32, %cst_15 [2] : vector<2x8x8xf32> to vector<2x8xf32>
    %34 = vector.shape_cast %33 : vector<2x8xf32> to vector<2x8x1xf32>
    %35 = vector.broadcast %34 : vector<2x8x1xf32> to vector<2x8x8xf32>
    %36 = arith.subf %32, %35 : vector<2x8x8xf32>
    %37 = math.exp %36 : vector<2x8x8xf32>
    %cst_16 = arith.constant dense<0.000000e+00> : vector<2x8xf32>
    %38 = vector.multi_reduction <add>, %37, %cst_16 [2] : vector<2x8x8xf32> to vector<2x8xf32>
    %39 = vector.shape_cast %38 : vector<2x8xf32> to vector<2x8x1xf32>
    %40 = tpu.reciprocal %39 {approx = true} : vector<2x8x1xf32> -> vector<2x8x1xf32>
    %41 = vector.broadcast %40 : vector<2x8x1xf32> to vector<2x8x8xf32>
    %42 = arith.mulf %37, %41 : vector<2x8x8xf32>
    "tpu.trace_start"() <{level = 10 : i32, message = "bst,btd->bsd"}> : () -> ()
    %cst_17 = arith.constant dense<0.000000e+00> : vector<2x8x8xf32>
    %43 = tpu.matmul %42, %31, %cst_17 {dimension_numbers = #tpu.dot_dimension_numbers<[2], [1], [1], [2], [0, 0, 0, 1, 1, 2], [0], [0]>} : vector<2x8x8xf32>, vector<2x8x8xf32>, vector<2x8x8xf32> -> vector<2x8x8xf32>
    "tpu.trace_stop"() : () -> ()
    %44 = vector.extract_strided_slice %9 {offsets = [0, 0, 16], sizes = [2, 8, 8], strides = [1, 1, 1]} : vector<2x8x96xf32> to vector<2x8x8xf32>
    %cst_18 = arith.constant 0.353553385 : f32
    %45 = vector.broadcast %cst_18 : f32 to vector<2x8x8xf32>
    %46 = arith.mulf %44, %45 : vector<2x8x8xf32>
    %47 = vector.extract_strided_slice %9 {offsets = [0, 0, 48], sizes = [2, 8, 8], strides = [1, 1, 1]} : vector<2x8x96xf32> to vector<2x8x8xf32>
    %48 = vector.extract_strided_slice %9 {offsets = [0, 0, 80], sizes = [2, 8, 8], strides = [1, 1, 1]} : vector<2x8x96xf32> to vector<2x8x8xf32>
    "tpu.trace_start"() <{level = 10 : i32, message = "bsd,btd->bst"}> : () -> ()
    %cst_19 = arith.constant dense<0.000000e+00> : vector<2x8x8xf32>
    %49 = tpu.matmul %46, %47, %cst_19 {dimension_numbers = #tpu.dot_dimension_numbers<[2], [2], [1], [1], [0, 0, 0, 1, 1, 1], [0], [0]>} : vector<2x8x8xf32>, vector<2x8x8xf32>, vector<2x8x8xf32> -> vector<2x8x8xf32>
    "tpu.trace_stop"() : () -> ()
    %cst_20 = arith.constant dense<0xFF800000> : vector<2x8xf32>
    %50 = vector.multi_reduction <maximumf>, %49, %cst_20 [2] : vector<2x8x8xf32> to vector<2x8xf32>
    %51 = vector.shape_cast %50 : vector<2x8xf32> to vector<2x8x1xf32>
    %52 = vector.broadcast %51 : vector<2x8x1xf32> to vector<2x8x8xf32>
    %53 = arith.subf %49, %52 : vector<2x8x8xf32>
    %54 = math.exp %53 : vector<2x8x8xf32>
    %cst_21 = arith.constant dense<0.000000e+00> : vector<2x8xf32>
    %55 = vector.multi_reduction <add>, %54, %cst_21 [2] : vector<2x8x8xf32> to vector<2x8xf32>
    %56 = vector.shape_cast %55 : vector<2x8xf32> to vector<2x8x1xf32>
    %57 = tpu.reciprocal %56 {approx = true} : vector<2x8x1xf32> -> vector<2x8x1xf32>
    %58 = vector.broadcast %57 : vector<2x8x1xf32> to vector<2x8x8xf32>
    %59 = arith.mulf %54, %58 : vector<2x8x8xf32>
    "tpu.trace_start"() <{level = 10 : i32, message = "bst,btd->bsd"}> : () -> ()
    %cst_22 = arith.constant dense<0.000000e+00> : vector<2x8x8xf32>
    %60 = tpu.matmul %59, %48, %cst_22 {dimension_numbers = #tpu.dot_dimension_numbers<[2], [1], [1], [2], [0, 0, 0, 1, 1, 2], [0], [0]>} : vector<2x8x8xf32>, vector<2x8x8xf32>, vector<2x8x8xf32> -> vector<2x8x8xf32>
    "tpu.trace_stop"() : () -> ()
    %61 = vector.extract_strided_slice %9 {offsets = [0, 0, 24], sizes = [2, 8, 8], strides = [1, 1, 1]} : vector<2x8x96xf32> to vector<2x8x8xf32>
    %cst_23 = arith.constant 0.353553385 : f32
    %62 = vector.broadcast %cst_23 : f32 to vector<2x8x8xf32>
    %63 = arith.mulf %61, %62 : vector<2x8x8xf32>
    %64 = vector.extract_strided_slice %9 {offsets = [0, 0, 56], sizes = [2, 8, 8], strides = [1, 1, 1]} : vector<2x8x96xf32> to vector<2x8x8xf32>
    %65 = vector.extract_strided_slice %9 {offsets = [0, 0, 88], sizes = [2, 8, 8], strides = [1, 1, 1]} : vector<2x8x96xf32> to vector<2x8x8xf32>
    "tpu.trace_start"() <{level = 10 : i32, message = "bsd,btd->bst"}> : () -> ()
    %cst_24 = arith.constant dense<0.000000e+00> : vector<2x8x8xf32>
    %66 = tpu.matmul %63, %64, %cst_24 {dimension_numbers = #tpu.dot_dimension_numbers<[2], [2], [1], [1], [0, 0, 0, 1, 1, 1], [0], [0]>} : vector<2x8x8xf32>, vector<2x8x8xf32>, vector<2x8x8xf32> -> vector<2x8x8xf32>
    "tpu.trace_stop"() : () -> ()
    %cst_25 = arith.constant dense<0xFF800000> : vector<2x8xf32>
    %67 = vector.multi_reduction <maximumf>, %66, %cst_25 [2] : vector<2x8x8xf32> to vector<2x8xf32>
    %68 = vector.shape_cast %67 : vector<2x8xf32> to vector<2x8x1xf32>
    %69 = vector.broadcast %68 : vector<2x8x1xf32> to vector<2x8x8xf32>
    %70 = arith.subf %66, %69 : vector<2x8x8xf32>
    %71 = math.exp %70 : vector<2x8x8xf32>
    %cst_26 = arith.constant dense<0.000000e+00> : vector<2x8xf32>
    %72 = vector.multi_reduction <add>, %71, %cst_26 [2] : vector<2x8x8xf32> to vector<2x8xf32>
    %73 = vector.shape_cast %72 : vector<2x8xf32> to vector<2x8x1xf32>
    %74 = tpu.reciprocal %73 {approx = true} : vector<2x8x1xf32> -> vector<2x8x1xf32>
    %75 = vector.broadcast %74 : vector<2x8x1xf32> to vector<2x8x8xf32>
    %76 = arith.mulf %71, %75 : vector<2x8x8xf32>
    "tpu.trace_start"() <{level = 10 : i32, message = "bst,btd->bsd"}> : () -> ()
    %cst_27 = arith.constant dense<0.000000e+00> : vector<2x8x8xf32>
    %77 = tpu.matmul %76, %65, %cst_27 {dimension_numbers = #tpu.dot_dimension_numbers<[2], [1], [1], [2], [0, 0, 0, 1, 1, 2], [0], [0]>} : vector<2x8x8xf32>, vector<2x8x8xf32>, vector<2x8x8xf32> -> vector<2x8x8xf32>
    "tpu.trace_stop"() : () -> ()
    %78 = tpu.concatenate %26, %43, %60, %77 in 2 : vector<2x8x8xf32>, vector<2x8x8xf32>, vector<2x8x8xf32>, vector<2x8x8xf32> -> vector<2x8x32xf32>
    %79 = vector.shape_cast %78 : vector<2x8x32xf32> to vector<16x32xf32>
    %c0_28 = arith.constant 0 : index
    %c0_29 = arith.constant 0 : index
    %c0_30 = arith.constant 0 : index
    %80 = vector.load %arg3[%c0_28, %c0_29, %c0_30] : memref<2x32x32xf32, #tpu.memory_space<vmem>>, vector<1x32x32xf32>
    %81 = vector.shape_cast %80 : vector<1x32x32xf32> to vector<32x32xf32>
    %cst_31 = arith.constant dense<0.000000e+00> : vector<16x32xf32>
    %82 = tpu.matmul %79, %81, %cst_31 {dimension_numbers = #tpu.dot_dimension_numbers<[1], [0], [0], [1], [0, 0, 1, 1], [], []>} : vector<16x32xf32>, vector<32x32xf32>, vector<16x32xf32> -> vector<16x32xf32>
    %c0_32 = arith.constant 0 : index
    %c0_33 = arith.constant 0 : index
    %c0_34 = arith.constant 0 : index
    %83 = vector.load %arg4[%c0_32, %c0_33, %c0_34] : memref<2x1x32xf32, #tpu.memory_space<vmem>>, vector<1x1x32xf32>
    %84 = vector.shape_cast %83 : vector<1x1x32xf32> to vector<1x32xf32>
    %85 = vector.broadcast %84 : vector<1x32xf32> to vector<16x32xf32>
    %86 = arith.addf %82, %85 : vector<16x32xf32>
    %87 = arith.addf %1, %86 : vector<16x32xf32>
    %c0_35 = arith.constant 0 : index
    %c0_36 = arith.constant 0 : index
    %c0_37 = arith.constant 0 : index
    %88 = vector.load %arg5[%c0_35, %c0_36, %c0_37] : memref<2x1x32xf32, #tpu.memory_space<vmem>>, vector<1x1x32xf32>
    %89 = vector.shape_cast %88 : vector<1x1x32xf32> to vector<1x32xf32>
    %c0_38 = arith.constant 0 : index
    %c0_39 = arith.constant 0 : index
    %c0_40 = arith.constant 0 : index
    %90 = vector.load %arg6[%c0_38, %c0_39, %c0_40] : memref<2x1x32xf32, #tpu.memory_space<vmem>>, vector<1x1x32xf32>
    %91 = vector.shape_cast %90 : vector<1x1x32xf32> to vector<1x32xf32>
    %cst_41 = arith.constant dense<0.000000e+00> : vector<16xf32>
    %92 = vector.multi_reduction <add>, %87, %cst_41 [1] : vector<16x32xf32> to vector<16xf32>
    %93 = vector.shape_cast %92 : vector<16xf32> to vector<16x1xf32>
    %cst_42 = arith.constant 3.200000e+01 : f32
    %94 = vector.broadcast %cst_42 : f32 to vector<16x1xf32>
    %95 = arith.divf %93, %94 : vector<16x1xf32>
    %96 = vector.broadcast %95 : vector<16x1xf32> to vector<16x32xf32>
    %97 = arith.subf %87, %96 : vector<16x32xf32>
    %98 = arith.mulf %97, %97 : vector<16x32xf32>
    %cst_43 = arith.constant dense<0.000000e+00> : vector<16xf32>
    %99 = vector.multi_reduction <add>, %98, %cst_43 [1] : vector<16x32xf32> to vector<16xf32>
    %100 = vector.shape_cast %99 : vector<16xf32> to vector<16x1xf32>
    %cst_44 = arith.constant 3.200000e+01 : f32
    %101 = vector.broadcast %cst_44 : f32 to vector<16x1xf32>
    %102 = arith.divf %100, %101 : vector<16x1xf32>
    %103 = vector.broadcast %95 : vector<16x1xf32> to vector<16x32xf32>
    %104 = arith.subf %87, %103 : vector<16x32xf32>
    %cst_45 = arith.constant 9.99999974E-6 : f32
    %105 = vector.broadcast %cst_45 : f32 to vector<16x1xf32>
    %106 = arith.addf %102, %105 : vector<16x1xf32>
    %107 = math.rsqrt %106 : vector<16x1xf32>
    %108 = vector.broadcast %107 : vector<16x1xf32> to vector<16x32xf32>
    %109 = arith.mulf %104, %108 : vector<16x32xf32>
    %110 = vector.broadcast %89 : vector<1x32xf32> to vector<16x32xf32>
    %111 = arith.mulf %109, %110 : vector<16x32xf32>
    %112 = vector.broadcast %91 : vector<1x32xf32> to vector<16x32xf32>
    %113 = arith.addf %111, %112 : vector<16x32xf32>
    %c0_46 = arith.constant 0 : index
    %c0_47 = arith.constant 0 : index
    %c0_48 = arith.constant 0 : index
    %114 = vector.load %arg7[%c0_46, %c0_47, %c0_48] : memref<2x32x128xf32, #tpu.memory_space<vmem>>, vector<1x32x128xf32>
    %115 = vector.shape_cast %114 : vector<1x32x128xf32> to vector<32x128xf32>
    %cst_49 = arith.constant dense<0.000000e+00> : vector<16x128xf32>
    %116 = tpu.matmul %113, %115, %cst_49 {dimension_numbers = #tpu.dot_dimension_numbers<[1], [0], [0], [1], [0, 0, 1, 1], [], []>} : vector<16x32xf32>, vector<32x128xf32>, vector<16x128xf32> -> vector<16x128xf32>
    %c0_50 = arith.constant 0 : index
    %c0_51 = arith.constant 0 : index
    %c0_52 = arith.constant 0 : index
    %117 = vector.load %arg8[%c0_50, %c0_51, %c0_52] : memref<2x1x128xf32, #tpu.memory_space<vmem>>, vector<1x1x128xf32>
    %118 = vector.shape_cast %117 : vector<1x1x128xf32> to vector<1x128xf32>
    %119 = vector.broadcast %118 : vector<1x128xf32> to vector<16x128xf32>
    %120 = arith.addf %116, %119 : vector<16x128xf32>
    %cst_53 = arith.constant 5.000000e-01 : f32
    %121 = vector.broadcast %cst_53 : f32 to vector<16x128xf32>
    %122 = arith.mulf %121, %120 : vector<16x128xf32>
    %cst_54 = arith.constant 0.707106769 : f32
    %123 = vector.broadcast %cst_54 : f32 to vector<16x128xf32>
    %124 = arith.mulf %120, %123 : vector<16x128xf32>
    %cst_55 = arith.constant 0.000000e+00 : f32
    %125 = vector.broadcast %cst_55 : f32 to vector<16x128xf32>
    %126 = arith.cmpf oge, %124, %125 : vector<16x128xf32>
    %cst_56 = arith.constant 1.000000e+00 : f32
    %cst_57 = arith.constant -1.000000e+00 : f32
    %127 = vector.broadcast %cst_56 : f32 to vector<16x128xf32>
    %128 = vector.broadcast %cst_57 : f32 to vector<16x128xf32>
    %129 = arith.select %126, %127, %128 : vector<16x128xi1>, vector<16x128xf32>
    %130 = math.absf %124 : vector<16x128xf32>
    %cst_58 = arith.constant 0.327591091 : f32
    %131 = vector.broadcast %cst_58 : f32 to vector<16x128xf32>
    %132 = arith.mulf %131, %130 : vector<16x128xf32>
    %cst_59 = arith.constant 1.000000e+00 : f32
    %133 = vector.broadcast %cst_59 : f32 to vector<16x128xf32>
    %134 = arith.addf %133, %132 : vector<16x128xf32>
    %cst_60 = arith.constant 1.000000e+00 : f32
    %135 = vector.broadcast %cst_60 : f32 to vector<16x128xf32>
    %136 = arith.divf %135, %134 : vector<16x128xf32>
    %cst_61 = arith.constant 1.06140542 : f32
    %137 = vector.broadcast %cst_61 : f32 to vector<16x128xf32>
    %138 = arith.mulf %137, %136 : vector<16x128xf32>
    %cst_62 = arith.constant -1.45315206 : f32
    %139 = vector.broadcast %cst_62 : f32 to vector<16x128xf32>
    %140 = arith.addf %138, %139 : vector<16x128xf32>
    %141 = arith.mulf %140, %136 : vector<16x128xf32>
    %cst_63 = arith.constant 1.42141378 : f32
    %142 = vector.broadcast %cst_63 : f32 to vector<16x128xf32>
    %143 = arith.addf %141, %142 : vector<16x128xf32>
    %144 = arith.mulf %143, %136 : vector<16x128xf32>
    %cst_64 = arith.constant -0.284496725 : f32
    %145 = vector.broadcast %cst_64 : f32 to vector<16x128xf32>
    %146 = arith.addf %144, %145 : vector<16x128xf32>
    %147 = arith.mulf %146, %136 : vector<16x128xf32>
    %cst_65 = arith.constant 0.254829586 : f32
    %148 = vector.broadcast %cst_65 : f32 to vector<16x128xf32>
    %149 = arith.addf %147, %148 : vector<16x128xf32>
    %150 = arith.mulf %149, %136 : vector<16x128xf32>
    %cst_66 = arith.constant 0.000000e+00 : f32
    %151 = vector.broadcast %cst_66 : f32 to vector<16x128xf32>
    %152 = arith.subf %151, %130 : vector<16x128xf32>
    %153 = arith.mulf %152, %130 : vector<16x128xf32>
    %154 = math.exp %153 : vector<16x128xf32>
    %155 = arith.mulf %150, %154 : vector<16x128xf32>
    %cst_67 = arith.constant 1.000000e+00 : f32
    %156 = vector.broadcast %cst_67 : f32 to vector<16x128xf32>
    %157 = arith.subf %156, %155 : vector<16x128xf32>
    %158 = arith.mulf %129, %157 : vector<16x128xf32>
    %cst_68 = arith.constant 1.000000e+00 : f32
    %159 = vector.broadcast %cst_68 : f32 to vector<16x128xf32>
    %160 = arith.addf %159, %158 : vector<16x128xf32>
    %161 = arith.mulf %122, %160 : vector<16x128xf32>
    %c0_69 = arith.constant 0 : index
    %c0_70 = arith.constant 0 : index
    %c0_71 = arith.constant 0 : index
    %162 = vector.load %arg9[%c0_69, %c0_70, %c0_71] : memref<2x128x32xf32, #tpu.memory_space<vmem>>, vector<1x128x32xf32>
    %163 = vector.shape_cast %162 : vector<1x128x32xf32> to vector<128x32xf32>
    %cst_72 = arith.constant dense<0.000000e+00> : vector<16x32xf32>
    %164 = tpu.matmul %161, %163, %cst_72 {dimension_numbers = #tpu.dot_dimension_numbers<[1], [0], [0], [1], [0, 0, 1, 1], [], []>} : vector<16x128xf32>, vector<128x32xf32>, vector<16x32xf32> -> vector<16x32xf32>
    %c0_73 = arith.constant 0 : index
    %c0_74 = arith.constant 0 : index
    %c0_75 = arith.constant 0 : index
    %165 = vector.load %arg10[%c0_73, %c0_74, %c0_75] : memref<2x1x32xf32, #tpu.memory_space<vmem>>, vector<1x1x32xf32>
    %166 = vector.shape_cast %165 : vector<1x1x32xf32> to vector<1x32xf32>
    %167 = vector.broadcast %166 : vector<1x32xf32> to vector<16x32xf32>
    %168 = arith.addf %164, %167 : vector<16x32xf32>
    %169 = arith.addf %113, %168 : vector<16x32xf32>
    %c0_76 = arith.constant 0 : index
    %c0_77 = arith.constant 0 : index
    %c0_78 = arith.constant 0 : index
    %170 = vector.load %arg11[%c0_76, %c0_77, %c0_78] : memref<2x1x32xf32, #tpu.memory_space<vmem>>, vector<1x1x32xf32>
    %171 = vector.shape_cast %170 : vector<1x1x32xf32> to vector<1x32xf32>
    %c0_79 = arith.constant 0 : index
    %c0_80 = arith.constant 0 : index
    %c0_81 = arith.constant 0 : index
    %172 = vector.load %arg12[%c0_79, %c0_80, %c0_81] : memref<2x1x32xf32, #tpu.memory_space<vmem>>, vector<1x1x32xf32>
    %173 = vector.shape_cast %172 : vector<1x1x32xf32> to vector<1x32xf32>
    %cst_82 = arith.constant dense<0.000000e+00> : vector<16xf32>
    %174 = vector.multi_reduction <add>, %169, %cst_82 [1] : vector<16x32xf32> to vector<16xf32>
    %175 = vector.shape_cast %174 : vector<16xf32> to vector<16x1xf32>
    %cst_83 = arith.constant 3.200000e+01 : f32
    %176 = vector.broadcast %cst_83 : f32 to vector<16x1xf32>
    %177 = arith.divf %175, %176 : vector<16x1xf32>
    %178 = vector.broadcast %177 : vector<16x1xf32> to vector<16x32xf32>
    %179 = arith.subf %169, %178 : vector<16x32xf32>
    %180 = arith.mulf %179, %179 : vector<16x32xf32>
    %cst_84 = arith.constant dense<0.000000e+00> : vector<16xf32>
    %181 = vector.multi_reduction <add>, %180, %cst_84 [1] : vector<16x32xf32> to vector<16xf32>
    %182 = vector.shape_cast %181 : vector<16xf32> to vector<16x1xf32>
    %cst_85 = arith.constant 3.200000e+01 : f32
    %183 = vector.broadcast %cst_85 : f32 to vector<16x1xf32>
    %184 = arith.divf %182, %183 : vector<16x1xf32>
    %185 = vector.broadcast %177 : vector<16x1xf32> to vector<16x32xf32>
    %186 = arith.subf %169, %185 : vector<16x32xf32>
    %cst_86 = arith.constant 9.99999974E-6 : f32
    %187 = vector.broadcast %cst_86 : f32 to vector<16x1xf32>
    %188 = arith.addf %184, %187 : vector<16x1xf32>
    %189 = math.rsqrt %188 : vector<16x1xf32>
    %190 = vector.broadcast %189 : vector<16x1xf32> to vector<16x32xf32>
    %191 = arith.mulf %186, %190 : vector<16x32xf32>
    %192 = vector.broadcast %171 : vector<1x32xf32> to vector<16x32xf32>
    %193 = arith.mulf %191, %192 : vector<16x32xf32>
    %194 = vector.broadcast %173 : vector<1x32xf32> to vector<16x32xf32>
    %195 = arith.addf %193, %194 : vector<16x32xf32>
    %c1 = arith.constant 1 : index
    %c0_87 = arith.constant 0 : index
    %c0_88 = arith.constant 0 : index
    %196 = vector.load %arg1[%c1, %c0_87, %c0_88] : memref<2x32x96xf32, #tpu.memory_space<vmem>>, vector<1x32x96xf32>
    %197 = vector.shape_cast %196 : vector<1x32x96xf32> to vector<32x96xf32>
    %cst_89 = arith.constant dense<0.000000e+00> : vector<16x96xf32>
    %198 = tpu.matmul %195, %197, %cst_89 {dimension_numbers = #tpu.dot_dimension_numbers<[1], [0], [0], [1], [0, 0, 1, 1], [], []>} : vector<16x32xf32>, vector<32x96xf32>, vector<16x96xf32> -> vector<16x96xf32>
    %c1_90 = arith.constant 1 : index
    %c0_91 = arith.constant 0 : index
    %c0_92 = arith.constant 0 : index
    %199 = vector.load %arg2[%c1_90, %c0_91, %c0_92] : memref<2x1x96xf32, #tpu.memory_space<vmem>>, vector<1x1x96xf32>
    %200 = vector.shape_cast %199 : vector<1x1x96xf32> to vector<1x96xf32>
    %201 = vector.broadcast %200 : vector<1x96xf32> to vector<16x96xf32>
    %202 = arith.addf %198, %201 : vector<16x96xf32>
    %203 = vector.shape_cast %202 : vector<16x96xf32> to vector<2x8x96xf32>
    %204 = vector.extract_strided_slice %203 {offsets = [0, 0, 0], sizes = [2, 8, 8], strides = [1, 1, 1]} : vector<2x8x96xf32> to vector<2x8x8xf32>
    %cst_93 = arith.constant 0.353553385 : f32
    %205 = vector.broadcast %cst_93 : f32 to vector<2x8x8xf32>
    %206 = arith.mulf %204, %205 : vector<2x8x8xf32>
    %207 = vector.extract_strided_slice %203 {offsets = [0, 0, 32], sizes = [2, 8, 8], strides = [1, 1, 1]} : vector<2x8x96xf32> to vector<2x8x8xf32>
    %208 = vector.extract_strided_slice %203 {offsets = [0, 0, 64], sizes = [2, 8, 8], strides = [1, 1, 1]} : vector<2x8x96xf32> to vector<2x8x8xf32>
    "tpu.trace_start"() <{level = 10 : i32, message = "bsd,btd->bst"}> : () -> ()
    %cst_94 = arith.constant dense<0.000000e+00> : vector<2x8x8xf32>
    %209 = tpu.matmul %206, %207, %cst_94 {dimension_numbers = #tpu.dot_dimension_numbers<[2], [2], [1], [1], [0, 0, 0, 1, 1, 1], [0], [0]>} : vector<2x8x8xf32>, vector<2x8x8xf32>, vector<2x8x8xf32> -> vector<2x8x8xf32>
    "tpu.trace_stop"() : () -> ()
    %cst_95 = arith.constant dense<0xFF800000> : vector<2x8xf32>
    %210 = vector.multi_reduction <maximumf>, %209, %cst_95 [2] : vector<2x8x8xf32> to vector<2x8xf32>
    %211 = vector.shape_cast %210 : vector<2x8xf32> to vector<2x8x1xf32>
    %212 = vector.broadcast %211 : vector<2x8x1xf32> to vector<2x8x8xf32>
    %213 = arith.subf %209, %212 : vector<2x8x8xf32>
    %214 = math.exp %213 : vector<2x8x8xf32>
    %cst_96 = arith.constant dense<0.000000e+00> : vector<2x8xf32>
    %215 = vector.multi_reduction <add>, %214, %cst_96 [2] : vector<2x8x8xf32> to vector<2x8xf32>
    %216 = vector.shape_cast %215 : vector<2x8xf32> to vector<2x8x1xf32>
    %217 = tpu.reciprocal %216 {approx = true} : vector<2x8x1xf32> -> vector<2x8x1xf32>
    %218 = vector.broadcast %217 : vector<2x8x1xf32> to vector<2x8x8xf32>
    %219 = arith.mulf %214, %218 : vector<2x8x8xf32>
    "tpu.trace_start"() <{level = 10 : i32, message = "bst,btd->bsd"}> : () -> ()
    %cst_97 = arith.constant dense<0.000000e+00> : vector<2x8x8xf32>
    %220 = tpu.matmul %219, %208, %cst_97 {dimension_numbers = #tpu.dot_dimension_numbers<[2], [1], [1], [2], [0, 0, 0, 1, 1, 2], [0], [0]>} : vector<2x8x8xf32>, vector<2x8x8xf32>, vector<2x8x8xf32> -> vector<2x8x8xf32>
    "tpu.trace_stop"() : () -> ()
    %221 = vector.extract_strided_slice %203 {offsets = [0, 0, 8], sizes = [2, 8, 8], strides = [1, 1, 1]} : vector<2x8x96xf32> to vector<2x8x8xf32>
    %cst_98 = arith.constant 0.353553385 : f32
    %222 = vector.broadcast %cst_98 : f32 to vector<2x8x8xf32>
    %223 = arith.mulf %221, %222 : vector<2x8x8xf32>
    %224 = vector.extract_strided_slice %203 {offsets = [0, 0, 40], sizes = [2, 8, 8], strides = [1, 1, 1]} : vector<2x8x96xf32> to vector<2x8x8xf32>
    %225 = vector.extract_strided_slice %203 {offsets = [0, 0, 72], sizes = [2, 8, 8], strides = [1, 1, 1]} : vector<2x8x96xf32> to vector<2x8x8xf32>
    "tpu.trace_start"() <{level = 10 : i32, message = "bsd,btd->bst"}> : () -> ()
    %cst_99 = arith.constant dense<0.000000e+00> : vector<2x8x8xf32>
    %226 = tpu.matmul %223, %224, %cst_99 {dimension_numbers = #tpu.dot_dimension_numbers<[2], [2], [1], [1], [0, 0, 0, 1, 1, 1], [0], [0]>} : vector<2x8x8xf32>, vector<2x8x8xf32>, vector<2x8x8xf32> -> vector<2x8x8xf32>
    "tpu.trace_stop"() : () -> ()
    %cst_100 = arith.constant dense<0xFF800000> : vector<2x8xf32>
    %227 = vector.multi_reduction <maximumf>, %226, %cst_100 [2] : vector<2x8x8xf32> to vector<2x8xf32>
    %228 = vector.shape_cast %227 : vector<2x8xf32> to vector<2x8x1xf32>
    %229 = vector.broadcast %228 : vector<2x8x1xf32> to vector<2x8x8xf32>
    %230 = arith.subf %226, %229 : vector<2x8x8xf32>
    %231 = math.exp %230 : vector<2x8x8xf32>
    %cst_101 = arith.constant dense<0.000000e+00> : vector<2x8xf32>
    %232 = vector.multi_reduction <add>, %231, %cst_101 [2] : vector<2x8x8xf32> to vector<2x8xf32>
    %233 = vector.shape_cast %232 : vector<2x8xf32> to vector<2x8x1xf32>
    %234 = tpu.reciprocal %233 {approx = true} : vector<2x8x1xf32> -> vector<2x8x1xf32>
    %235 = vector.broadcast %234 : vector<2x8x1xf32> to vector<2x8x8xf32>
    %236 = arith.mulf %231, %235 : vector<2x8x8xf32>
    "tpu.trace_start"() <{level = 10 : i32, message = "bst,btd->bsd"}> : () -> ()
    %cst_102 = arith.constant dense<0.000000e+00> : vector<2x8x8xf32>
    %237 = tpu.matmul %236, %225, %cst_102 {dimension_numbers = #tpu.dot_dimension_numbers<[2], [1], [1], [2], [0, 0, 0, 1, 1, 2], [0], [0]>} : vector<2x8x8xf32>, vector<2x8x8xf32>, vector<2x8x8xf32> -> vector<2x8x8xf32>
    "tpu.trace_stop"() : () -> ()
    %238 = vector.extract_strided_slice %203 {offsets = [0, 0, 16], sizes = [2, 8, 8], strides = [1, 1, 1]} : vector<2x8x96xf32> to vector<2x8x8xf32>
    %cst_103 = arith.constant 0.353553385 : f32
    %239 = vector.broadcast %cst_103 : f32 to vector<2x8x8xf32>
    %240 = arith.mulf %238, %239 : vector<2x8x8xf32>
    %241 = vector.extract_strided_slice %203 {offsets = [0, 0, 48], sizes = [2, 8, 8], strides = [1, 1, 1]} : vector<2x8x96xf32> to vector<2x8x8xf32>
    %242 = vector.extract_strided_slice %203 {offsets = [0, 0, 80], sizes = [2, 8, 8], strides = [1, 1, 1]} : vector<2x8x96xf32> to vector<2x8x8xf32>
    "tpu.trace_start"() <{level = 10 : i32, message = "bsd,btd->bst"}> : () -> ()
    %cst_104 = arith.constant dense<0.000000e+00> : vector<2x8x8xf32>
    %243 = tpu.matmul %240, %241, %cst_104 {dimension_numbers = #tpu.dot_dimension_numbers<[2], [2], [1], [1], [0, 0, 0, 1, 1, 1], [0], [0]>} : vector<2x8x8xf32>, vector<2x8x8xf32>, vector<2x8x8xf32> -> vector<2x8x8xf32>
    "tpu.trace_stop"() : () -> ()
    %cst_105 = arith.constant dense<0xFF800000> : vector<2x8xf32>
    %244 = vector.multi_reduction <maximumf>, %243, %cst_105 [2] : vector<2x8x8xf32> to vector<2x8xf32>
    %245 = vector.shape_cast %244 : vector<2x8xf32> to vector<2x8x1xf32>
    %246 = vector.broadcast %245 : vector<2x8x1xf32> to vector<2x8x8xf32>
    %247 = arith.subf %243, %246 : vector<2x8x8xf32>
    %248 = math.exp %247 : vector<2x8x8xf32>
    %cst_106 = arith.constant dense<0.000000e+00> : vector<2x8xf32>
    %249 = vector.multi_reduction <add>, %248, %cst_106 [2] : vector<2x8x8xf32> to vector<2x8xf32>
    %250 = vector.shape_cast %249 : vector<2x8xf32> to vector<2x8x1xf32>
    %251 = tpu.reciprocal %250 {approx = true} : vector<2x8x1xf32> -> vector<2x8x1xf32>
    %252 = vector.broadcast %251 : vector<2x8x1xf32> to vector<2x8x8xf32>
    %253 = arith.mulf %248, %252 : vector<2x8x8xf32>
    "tpu.trace_start"() <{level = 10 : i32, message = "bst,btd->bsd"}> : () -> ()
    %cst_107 = arith.constant dense<0.000000e+00> : vector<2x8x8xf32>
    %254 = tpu.matmul %253, %242, %cst_107 {dimension_numbers = #tpu.dot_dimension_numbers<[2], [1], [1], [2], [0, 0, 0, 1, 1, 2], [0], [0]>} : vector<2x8x8xf32>, vector<2x8x8xf32>, vector<2x8x8xf32> -> vector<2x8x8xf32>
    "tpu.trace_stop"() : () -> ()
    %255 = vector.extract_strided_slice %203 {offsets = [0, 0, 24], sizes = [2, 8, 8], strides = [1, 1, 1]} : vector<2x8x96xf32> to vector<2x8x8xf32>
    %cst_108 = arith.constant 0.353553385 : f32
    %256 = vector.broadcast %cst_108 : f32 to vector<2x8x8xf32>
    %257 = arith.mulf %255, %256 : vector<2x8x8xf32>
    %258 = vector.extract_strided_slice %203 {offsets = [0, 0, 56], sizes = [2, 8, 8], strides = [1, 1, 1]} : vector<2x8x96xf32> to vector<2x8x8xf32>
    %259 = vector.extract_strided_slice %203 {offsets = [0, 0, 88], sizes = [2, 8, 8], strides = [1, 1, 1]} : vector<2x8x96xf32> to vector<2x8x8xf32>
    "tpu.trace_start"() <{level = 10 : i32, message = "bsd,btd->bst"}> : () -> ()
    %cst_109 = arith.constant dense<0.000000e+00> : vector<2x8x8xf32>
    %260 = tpu.matmul %257, %258, %cst_109 {dimension_numbers = #tpu.dot_dimension_numbers<[2], [2], [1], [1], [0, 0, 0, 1, 1, 1], [0], [0]>} : vector<2x8x8xf32>, vector<2x8x8xf32>, vector<2x8x8xf32> -> vector<2x8x8xf32>
    "tpu.trace_stop"() : () -> ()
    %cst_110 = arith.constant dense<0xFF800000> : vector<2x8xf32>
    %261 = vector.multi_reduction <maximumf>, %260, %cst_110 [2] : vector<2x8x8xf32> to vector<2x8xf32>
    %262 = vector.shape_cast %261 : vector<2x8xf32> to vector<2x8x1xf32>
    %263 = vector.broadcast %262 : vector<2x8x1xf32> to vector<2x8x8xf32>
    %264 = arith.subf %260, %263 : vector<2x8x8xf32>
    %265 = math.exp %264 : vector<2x8x8xf32>
    %cst_111 = arith.constant dense<0.000000e+00> : vector<2x8xf32>
    %266 = vector.multi_reduction <add>, %265, %cst_111 [2] : vector<2x8x8xf32> to vector<2x8xf32>
    %267 = vector.shape_cast %266 : vector<2x8xf32> to vector<2x8x1xf32>
    %268 = tpu.reciprocal %267 {approx = true} : vector<2x8x1xf32> -> vector<2x8x1xf32>
    %269 = vector.broadcast %268 : vector<2x8x1xf32> to vector<2x8x8xf32>
    %270 = arith.mulf %265, %269 : vector<2x8x8xf32>
    "tpu.trace_start"() <{level = 10 : i32, message = "bst,btd->bsd"}> : () -> ()
    %cst_112 = arith.constant dense<0.000000e+00> : vector<2x8x8xf32>
    %271 = tpu.matmul %270, %259, %cst_112 {dimension_numbers = #tpu.dot_dimension_numbers<[2], [1], [1], [2], [0, 0, 0, 1, 1, 2], [0], [0]>} : vector<2x8x8xf32>, vector<2x8x8xf32>, vector<2x8x8xf32> -> vector<2x8x8xf32>
    "tpu.trace_stop"() : () -> ()
    %272 = tpu.concatenate %220, %237, %254, %271 in 2 : vector<2x8x8xf32>, vector<2x8x8xf32>, vector<2x8x8xf32>, vector<2x8x8xf32> -> vector<2x8x32xf32>
    %273 = vector.shape_cast %272 : vector<2x8x32xf32> to vector<16x32xf32>
    %c1_113 = arith.constant 1 : index
    %c0_114 = arith.constant 0 : index
    %c0_115 = arith.constant 0 : index
    %274 = vector.load %arg3[%c1_113, %c0_114, %c0_115] : memref<2x32x32xf32, #tpu.memory_space<vmem>>, vector<1x32x32xf32>
    %275 = vector.shape_cast %274 : vector<1x32x32xf32> to vector<32x32xf32>
    %cst_116 = arith.constant dense<0.000000e+00> : vector<16x32xf32>
    %276 = tpu.matmul %273, %275, %cst_116 {dimension_numbers = #tpu.dot_dimension_numbers<[1], [0], [0], [1], [0, 0, 1, 1], [], []>} : vector<16x32xf32>, vector<32x32xf32>, vector<16x32xf32> -> vector<16x32xf32>
    %c1_117 = arith.constant 1 : index
    %c0_118 = arith.constant 0 : index
    %c0_119 = arith.constant 0 : index
    %277 = vector.load %arg4[%c1_117, %c0_118, %c0_119] : memref<2x1x32xf32, #tpu.memory_space<vmem>>, vector<1x1x32xf32>
    %278 = vector.shape_cast %277 : vector<1x1x32xf32> to vector<1x32xf32>
    %279 = vector.broadcast %278 : vector<1x32xf32> to vector<16x32xf32>
    %280 = arith.addf %276, %279 : vector<16x32xf32>
    %281 = arith.addf %195, %280 : vector<16x32xf32>
    %c1_120 = arith.constant 1 : index
    %c0_121 = arith.constant 0 : index
    %c0_122 = arith.constant 0 : index
    %282 = vector.load %arg5[%c1_120, %c0_121, %c0_122] : memref<2x1x32xf32, #tpu.memory_space<vmem>>, vector<1x1x32xf32>
    %283 = vector.shape_cast %282 : vector<1x1x32xf32> to vector<1x32xf32>
    %c1_123 = arith.constant 1 : index
    %c0_124 = arith.constant 0 : index
    %c0_125 = arith.constant 0 : index
    %284 = vector.load %arg6[%c1_123, %c0_124, %c0_125] : memref<2x1x32xf32, #tpu.memory_space<vmem>>, vector<1x1x32xf32>
    %285 = vector.shape_cast %284 : vector<1x1x32xf32> to vector<1x32xf32>
    %cst_126 = arith.constant dense<0.000000e+00> : vector<16xf32>
    %286 = vector.multi_reduction <add>, %281, %cst_126 [1] : vector<16x32xf32> to vector<16xf32>
    %287 = vector.shape_cast %286 : vector<16xf32> to vector<16x1xf32>
    %cst_127 = arith.constant 3.200000e+01 : f32
    %288 = vector.broadcast %cst_127 : f32 to vector<16x1xf32>
    %289 = arith.divf %287, %288 : vector<16x1xf32>
    %290 = vector.broadcast %289 : vector<16x1xf32> to vector<16x32xf32>
    %291 = arith.subf %281, %290 : vector<16x32xf32>
    %292 = arith.mulf %291, %291 : vector<16x32xf32>
    %cst_128 = arith.constant dense<0.000000e+00> : vector<16xf32>
    %293 = vector.multi_reduction <add>, %292, %cst_128 [1] : vector<16x32xf32> to vector<16xf32>
    %294 = vector.shape_cast %293 : vector<16xf32> to vector<16x1xf32>
    %cst_129 = arith.constant 3.200000e+01 : f32
    %295 = vector.broadcast %cst_129 : f32 to vector<16x1xf32>
    %296 = arith.divf %294, %295 : vector<16x1xf32>
    %297 = vector.broadcast %289 : vector<16x1xf32> to vector<16x32xf32>
    %298 = arith.subf %281, %297 : vector<16x32xf32>
    %cst_130 = arith.constant 9.99999974E-6 : f32
    %299 = vector.broadcast %cst_130 : f32 to vector<16x1xf32>
    %300 = arith.addf %296, %299 : vector<16x1xf32>
    %301 = math.rsqrt %300 : vector<16x1xf32>
    %302 = vector.broadcast %301 : vector<16x1xf32> to vector<16x32xf32>
    %303 = arith.mulf %298, %302 : vector<16x32xf32>
    %304 = vector.broadcast %283 : vector<1x32xf32> to vector<16x32xf32>
    %305 = arith.mulf %303, %304 : vector<16x32xf32>
    %306 = vector.broadcast %285 : vector<1x32xf32> to vector<16x32xf32>
    %307 = arith.addf %305, %306 : vector<16x32xf32>
    %c1_131 = arith.constant 1 : index
    %c0_132 = arith.constant 0 : index
    %c0_133 = arith.constant 0 : index
    %308 = vector.load %arg7[%c1_131, %c0_132, %c0_133] : memref<2x32x128xf32, #tpu.memory_space<vmem>>, vector<1x32x128xf32>
    %309 = vector.shape_cast %308 : vector<1x32x128xf32> to vector<32x128xf32>
    %cst_134 = arith.constant dense<0.000000e+00> : vector<16x128xf32>
    %310 = tpu.matmul %307, %309, %cst_134 {dimension_numbers = #tpu.dot_dimension_numbers<[1], [0], [0], [1], [0, 0, 1, 1], [], []>} : vector<16x32xf32>, vector<32x128xf32>, vector<16x128xf32> -> vector<16x128xf32>
    %c1_135 = arith.constant 1 : index
    %c0_136 = arith.constant 0 : index
    %c0_137 = arith.constant 0 : index
    %311 = vector.load %arg8[%c1_135, %c0_136, %c0_137] : memref<2x1x128xf32, #tpu.memory_space<vmem>>, vector<1x1x128xf32>
    %312 = vector.shape_cast %311 : vector<1x1x128xf32> to vector<1x128xf32>
    %313 = vector.broadcast %312 : vector<1x128xf32> to vector<16x128xf32>
    %314 = arith.addf %310, %313 : vector<16x128xf32>
    %cst_138 = arith.constant 5.000000e-01 : f32
    %315 = vector.broadcast %cst_138 : f32 to vector<16x128xf32>
    %316 = arith.mulf %315, %314 : vector<16x128xf32>
    %cst_139 = arith.constant 0.707106769 : f32
    %317 = vector.broadcast %cst_139 : f32 to vector<16x128xf32>
    %318 = arith.mulf %314, %317 : vector<16x128xf32>
    %cst_140 = arith.constant 0.000000e+00 : f32
    %319 = vector.broadcast %cst_140 : f32 to vector<16x128xf32>
    %320 = arith.cmpf oge, %318, %319 : vector<16x128xf32>
    %cst_141 = arith.constant 1.000000e+00 : f32
    %cst_142 = arith.constant -1.000000e+00 : f32
    %321 = vector.broadcast %cst_141 : f32 to vector<16x128xf32>
    %322 = vector.broadcast %cst_142 : f32 to vector<16x128xf32>
    %323 = arith.select %320, %321, %322 : vector<16x128xi1>, vector<16x128xf32>
    %324 = math.absf %318 : vector<16x128xf32>
    %cst_143 = arith.constant 0.327591091 : f32
    %325 = vector.broadcast %cst_143 : f32 to vector<16x128xf32>
    %326 = arith.mulf %325, %324 : vector<16x128xf32>
    %cst_144 = arith.constant 1.000000e+00 : f32
    %327 = vector.broadcast %cst_144 : f32 to vector<16x128xf32>
    %328 = arith.addf %327, %326 : vector<16x128xf32>
    %cst_145 = arith.constant 1.000000e+00 : f32
    %329 = vector.broadcast %cst_145 : f32 to vector<16x128xf32>
    %330 = arith.divf %329, %328 : vector<16x128xf32>
    %cst_146 = arith.constant 1.06140542 : f32
    %331 = vector.broadcast %cst_146 : f32 to vector<16x128xf32>
    %332 = arith.mulf %331, %330 : vector<16x128xf32>
    %cst_147 = arith.constant -1.45315206 : f32
    %333 = vector.broadcast %cst_147 : f32 to vector<16x128xf32>
    %334 = arith.addf %332, %333 : vector<16x128xf32>
    %335 = arith.mulf %334, %330 : vector<16x128xf32>
    %cst_148 = arith.constant 1.42141378 : f32
    %336 = vector.broadcast %cst_148 : f32 to vector<16x128xf32>
    %337 = arith.addf %335, %336 : vector<16x128xf32>
    %338 = arith.mulf %337, %330 : vector<16x128xf32>
    %cst_149 = arith.constant -0.284496725 : f32
    %339 = vector.broadcast %cst_149 : f32 to vector<16x128xf32>
    %340 = arith.addf %338, %339 : vector<16x128xf32>
    %341 = arith.mulf %340, %330 : vector<16x128xf32>
    %cst_150 = arith.constant 0.254829586 : f32
    %342 = vector.broadcast %cst_150 : f32 to vector<16x128xf32>
    %343 = arith.addf %341, %342 : vector<16x128xf32>
    %344 = arith.mulf %343, %330 : vector<16x128xf32>
    %cst_151 = arith.constant 0.000000e+00 : f32
    %345 = vector.broadcast %cst_151 : f32 to vector<16x128xf32>
    %346 = arith.subf %345, %324 : vector<16x128xf32>
    %347 = arith.mulf %346, %324 : vector<16x128xf32>
    %348 = math.exp %347 : vector<16x128xf32>
    %349 = arith.mulf %344, %348 : vector<16x128xf32>
    %cst_152 = arith.constant 1.000000e+00 : f32
    %350 = vector.broadcast %cst_152 : f32 to vector<16x128xf32>
    %351 = arith.subf %350, %349 : vector<16x128xf32>
    %352 = arith.mulf %323, %351 : vector<16x128xf32>
    %cst_153 = arith.constant 1.000000e+00 : f32
    %353 = vector.broadcast %cst_153 : f32 to vector<16x128xf32>
    %354 = arith.addf %353, %352 : vector<16x128xf32>
    %355 = arith.mulf %316, %354 : vector<16x128xf32>
    %c1_154 = arith.constant 1 : index
    %c0_155 = arith.constant 0 : index
    %c0_156 = arith.constant 0 : index
    %356 = vector.load %arg9[%c1_154, %c0_155, %c0_156] : memref<2x128x32xf32, #tpu.memory_space<vmem>>, vector<1x128x32xf32>
    %357 = vector.shape_cast %356 : vector<1x128x32xf32> to vector<128x32xf32>
    %cst_157 = arith.constant dense<0.000000e+00> : vector<16x32xf32>
    %358 = tpu.matmul %355, %357, %cst_157 {dimension_numbers = #tpu.dot_dimension_numbers<[1], [0], [0], [1], [0, 0, 1, 1], [], []>} : vector<16x128xf32>, vector<128x32xf32>, vector<16x32xf32> -> vector<16x32xf32>
    %c1_158 = arith.constant 1 : index
    %c0_159 = arith.constant 0 : index
    %c0_160 = arith.constant 0 : index
    %359 = vector.load %arg10[%c1_158, %c0_159, %c0_160] : memref<2x1x32xf32, #tpu.memory_space<vmem>>, vector<1x1x32xf32>
    %360 = vector.shape_cast %359 : vector<1x1x32xf32> to vector<1x32xf32>
    %361 = vector.broadcast %360 : vector<1x32xf32> to vector<16x32xf32>
    %362 = arith.addf %358, %361 : vector<16x32xf32>
    %363 = arith.addf %307, %362 : vector<16x32xf32>
    %c1_161 = arith.constant 1 : index
    %c0_162 = arith.constant 0 : index
    %c0_163 = arith.constant 0 : index
    %364 = vector.load %arg11[%c1_161, %c0_162, %c0_163] : memref<2x1x32xf32, #tpu.memory_space<vmem>>, vector<1x1x32xf32>
    %365 = vector.shape_cast %364 : vector<1x1x32xf32> to vector<1x32xf32>
    %c1_164 = arith.constant 1 : index
    %c0_165 = arith.constant 0 : index
    %c0_166 = arith.constant 0 : index
    %366 = vector.load %arg12[%c1_164, %c0_165, %c0_166] : memref<2x1x32xf32, #tpu.memory_space<vmem>>, vector<1x1x32xf32>
    %367 = vector.shape_cast %366 : vector<1x1x32xf32> to vector<1x32xf32>
    %cst_167 = arith.constant dense<0.000000e+00> : vector<16xf32>
    %368 = vector.multi_reduction <add>, %363, %cst_167 [1] : vector<16x32xf32> to vector<16xf32>
    %369 = vector.shape_cast %368 : vector<16xf32> to vector<16x1xf32>
    %cst_168 = arith.constant 3.200000e+01 : f32
    %370 = vector.broadcast %cst_168 : f32 to vector<16x1xf32>
    %371 = arith.divf %369, %370 : vector<16x1xf32>
    %372 = vector.broadcast %371 : vector<16x1xf32> to vector<16x32xf32>
    %373 = arith.subf %363, %372 : vector<16x32xf32>
    %374 = arith.mulf %373, %373 : vector<16x32xf32>
    %cst_169 = arith.constant dense<0.000000e+00> : vector<16xf32>
    %375 = vector.multi_reduction <add>, %374, %cst_169 [1] : vector<16x32xf32> to vector<16xf32>
    %376 = vector.shape_cast %375 : vector<16xf32> to vector<16x1xf32>
    %cst_170 = arith.constant 3.200000e+01 : f32
    %377 = vector.broadcast %cst_170 : f32 to vector<16x1xf32>
    %378 = arith.divf %376, %377 : vector<16x1xf32>
    %379 = vector.broadcast %371 : vector<16x1xf32> to vector<16x32xf32>
    %380 = arith.subf %363, %379 : vector<16x32xf32>
    %cst_171 = arith.constant 9.99999974E-6 : f32
    %381 = vector.broadcast %cst_171 : f32 to vector<16x1xf32>
    %382 = arith.addf %378, %381 : vector<16x1xf32>
    %383 = math.rsqrt %382 : vector<16x1xf32>
    %384 = vector.broadcast %383 : vector<16x1xf32> to vector<16x32xf32>
    %385 = arith.mulf %380, %384 : vector<16x32xf32>
    %386 = vector.broadcast %365 : vector<1x32xf32> to vector<16x32xf32>
    %387 = arith.mulf %385, %386 : vector<16x32xf32>
    %388 = vector.broadcast %367 : vector<1x32xf32> to vector<16x32xf32>
    %389 = arith.addf %387, %388 : vector<16x32xf32>
    %c0_172 = arith.constant 0 : index
    %c0_173 = arith.constant 0 : index
    %390 = vector.load %arg13[%c0_172, %c0_173] : memref<32x256xf32, #tpu.memory_space<vmem>>, vector<32x256xf32>
    %cst_174 = arith.constant dense<0.000000e+00> : vector<16x256xf32>
    %391 = tpu.matmul %389, %390, %cst_174 {dimension_numbers = #tpu.dot_dimension_numbers<[1], [0], [0], [1], [0, 0, 1, 1], [], []>} : vector<16x32xf32>, vector<32x256xf32>, vector<16x256xf32> -> vector<16x256xf32>
    %c0_175 = arith.constant 0 : index
    %c0_176 = arith.constant 0 : index
    %392 = vector.load %arg14[%c0_175, %c0_176] : memref<1x256xf32, #tpu.memory_space<vmem>>, vector<1x256xf32>
    %393 = vector.broadcast %392 : vector<1x256xf32> to vector<16x256xf32>
    %394 = arith.addf %391, %393 : vector<16x256xf32>
    %c0_177 = arith.constant 0 : index
    %c0_178 = arith.constant 0 : index
    %395 = vector.load %arg15[%c0_177, %c0_178] : memref<16x256xf32, #tpu.memory_space<vmem>>, vector<16x256xf32>
    tpu.vector_store %arg15[%c0_177, %c0_178], %394 {strides = array<i32>} : memref<16x256xf32, #tpu.memory_space<vmem>>, vector<16x256xf32>,
    return
  }
}

</mosaic_0001>

<llo_original>
// kernel: gpt2_decoder_forward.1
$region0: #{gpt2_decoder_forward.1}
  #allocation0 [shape = 'u32[]', space=smem, size = 0x4, offset = 0x4, fixed_abs, tag = 'smem constant byte address 0x4 - core index']
  #allocation1 [shape = 'u32[144,128]{1,0:T(1,128)}', space=vmem, size = 0x12000, scoped, tag = 'internal scratch']
  %s0 = inlined_call_operand.vmem [shape: f32[2,8,32], index: 0, kind: input, shape index: {}]
  %s1 = inlined_call_operand.vmem [shape: f32[2,32,96], index: 1, kind: input, shape index: {}]
  %s2 = inlined_call_operand.vmem [shape: f32[2,1,96], index: 2, kind: input, shape index: {}]
  %s3 = inlined_call_operand.vmem [shape: f32[2,32,32], index: 3, kind: input, shape index: {}]
  %s4 = inlined_call_operand.vmem [shape: f32[2,1,32], index: 4, kind: input, shape index: {}]
  %s5 = inlined_call_operand.vmem [shape: f32[2,1,32], index: 5, kind: input, shape index: {}]
  %s6 = inlined_call_operand.vmem [shape: f32[2,1,32], index: 6, kind: input, shape index: {}]
  %s7 = inlined_call_operand.vmem [shape: f32[2,32,128], index: 7, kind: input, shape index: {}]
  %s8 = inlined_call_operand.vmem [shape: f32[2,1,128], index: 8, kind: input, shape index: {}]
  %s9 = inlined_call_operand.vmem [shape: f32[2,128,32], index: 9, kind: input, shape index: {}]
  %s10 = inlined_call_operand.vmem [shape: f32[2,1,32], index: 10, kind: input, shape index: {}]
  %s11 = inlined_call_operand.vmem [shape: f32[2,1,32], index: 11, kind: input, shape index: {}]
  %s12 = inlined_call_operand.vmem [shape: f32[2,1,32], index: 12, kind: input, shape index: {}]
  %s13 = inlined_call_operand.vmem [shape: f32[32,256], index: 13, kind: input, shape index: {}]
  %s14 = inlined_call_operand.vmem [shape: f32[1,256], index: 14, kind: input, shape index: {}]
  %s15 = inlined_call_operand.vmem [shape: f32[16,256], index: 15, kind: output, shape index: {}]
  %s16 = sld [smem:[#allocation0]]
  $region70: #{gpt2_decoder_forward.1} parent=0
    _
  %s18 = ssub.s32 1, %s16
  %s19 = scalar_select 0, %s18, %s16
  // Predicated region
  $region2: #{gpt2_decoder_forward.1} parent=0 // pred_check
    _
  $region3: #{gpt2_decoder_forward.1} parent=0 // pred_check_branch
    %21 = sbr.rel (0) target = $region5
  $region4: #{gpt2_decoder_forward.1} parent=0 // pred_region
    _
  $region5: #{gpt2_decoder_forward.1} parent=0 // pred_fallthru
    _
  // Predicated region
  $region6: #{gpt2_decoder_forward.1} parent=0 // pred_check
    _
  $region7: #{gpt2_decoder_forward.1} parent=0 // pred_check_branch
    %23 = sbr.rel (0) target = $region9
  $region8: #{gpt2_decoder_forward.1} parent=0 // pred_region
    _
  $region9: #{gpt2_decoder_forward.1} parent=0 // pred_fallthru
    _
  // Predicated region
  $region10: #{gpt2_decoder_forward.1} parent=0 // pred_check
    _
  $region11: #{gpt2_decoder_forward.1} parent=0 // pred_check_branch
    %25 = sbr.rel (0) target = $region13
  $region12: #{gpt2_decoder_forward.1} parent=0 // pred_region
    _
  $region13: #{gpt2_decoder_forward.1} parent=0 // pred_fallthru
    _
  // Predicated region
  $region14: #{gpt2_decoder_forward.1} parent=0 // pred_check
    _
  $region15: #{gpt2_decoder_forward.1} parent=0 // pred_check_branch
    %27 = sbr.rel (0) target = $region17
  $region16: #{gpt2_decoder_forward.1} parent=0 // pred_region
    _
  $region17: #{gpt2_decoder_forward.1} parent=0 // pred_fallthru
    _
  // Predicated region
  $region18: #{gpt2_decoder_forward.1} parent=0 // pred_check
    _
  $region19: #{gpt2_decoder_forward.1} parent=0 // pred_check_branch
    %29 = sbr.rel (0) target = $region21
  $region20: #{gpt2_decoder_forward.1} parent=0 // pred_region
    _
  $region21: #{gpt2_decoder_forward.1} parent=0 // pred_fallthru
    _
  // Predicated region
  $region22: #{gpt2_decoder_forward.1} parent=0 // pred_check
    _
  $region23: #{gpt2_decoder_forward.1} parent=0 // pred_check_branch
    %31 = sbr.rel (0) target = $region25
  $region24: #{gpt2_decoder_forward.1} parent=0 // pred_region
    _
  $region25: #{gpt2_decoder_forward.1} parent=0 // pred_fallthru
    _
  // Predicated region
  $region26: #{gpt2_decoder_forward.1} parent=0 // pred_check
    _
  $region27: #{gpt2_decoder_forward.1} parent=0 // pred_check_branch
    %33 = sbr.rel (0) target = $region29
  $region28: #{gpt2_decoder_forward.1} parent=0 // pred_region
    _
  $region29: #{gpt2_decoder_forward.1} parent=0 // pred_fallthru
    _
  // Predicated region
  $region30: #{gpt2_decoder_forward.1} parent=0 // pred_check
    _
  $region31: #{gpt2_decoder_forward.1} parent=0 // pred_check_branch
    %35 = sbr.rel (0) target = $region33
  $region32: #{gpt2_decoder_forward.1} parent=0 // pred_region
    _
  $region33: #{gpt2_decoder_forward.1} parent=0 // pred_fallthru
    _
  // Predicated region
  $region34: #{gpt2_decoder_forward.1} parent=0 // pred_check
    _
  $region35: #{gpt2_decoder_forward.1} parent=0 // pred_check_branch
    %37 = sbr.rel (0) target = $region37
  $region36: #{gpt2_decoder_forward.1} parent=0 // pred_region
    _
  $region37: #{gpt2_decoder_forward.1} parent=0 // pred_fallthru
    _
  // Predicated region
  $region38: #{gpt2_decoder_forward.1} parent=0 // pred_check
    _
  $region39: #{gpt2_decoder_forward.1} parent=0 // pred_check_branch
    %39 = sbr.rel (0) target = $region41
  $region40: #{gpt2_decoder_forward.1} parent=0 // pred_region
    _
  $region41: #{gpt2_decoder_forward.1} parent=0 // pred_fallthru
    _
  // Predicated region
  $region42: #{gpt2_decoder_forward.1} parent=0 // pred_check
    _
  $region43: #{gpt2_decoder_forward.1} parent=0 // pred_check_branch
    %41 = sbr.rel (0) target = $region45
  $region44: #{gpt2_decoder_forward.1} parent=0 // pred_region
    _
  $region45: #{gpt2_decoder_forward.1} parent=0 // pred_fallthru
    _
  // Predicated region
  $region46: #{gpt2_decoder_forward.1} parent=0 // pred_check
    _
  $region47: #{gpt2_decoder_forward.1} parent=0 // pred_check_branch
    %43 = sbr.rel (0) target = $region49
  $region48: #{gpt2_decoder_forward.1} parent=0 // pred_region
    _
  $region49: #{gpt2_decoder_forward.1} parent=0 // pred_fallthru
    _
  // Predicated region
  $region50: #{gpt2_decoder_forward.1} parent=0 // pred_check
    _
  $region51: #{gpt2_decoder_forward.1} parent=0 // pred_check_branch
    %45 = sbr.rel (0) target = $region53
  $region52: #{gpt2_decoder_forward.1} parent=0 // pred_region
    _
  $region53: #{gpt2_decoder_forward.1} parent=0 // pred_fallthru
    _
  // Predicated region
  $region54: #{gpt2_decoder_forward.1} parent=0 // pred_check
    _
  $region55: #{gpt2_decoder_forward.1} parent=0 // pred_check_branch
    %47 = sbr.rel (0) target = $region57
  $region56: #{gpt2_decoder_forward.1} parent=0 // pred_region
    _
  $region57: #{gpt2_decoder_forward.1} parent=0 // pred_fallthru
    _
  // Predicated region
  $region58: #{gpt2_decoder_forward.1} parent=0 // pred_check
    _
  $region59: #{gpt2_decoder_forward.1} parent=0 // pred_check_branch
    %49 = sbr.rel (0) target = $region61
  $region60: #{gpt2_decoder_forward.1} parent=0 // pred_region
    _
  $region61: #{gpt2_decoder_forward.1} parent=0 // pred_fallthru
    _
  %v50 = vld [vmem:[%s0] sm:$0xff]
  %v51 = vld [vmem:[%s0 + $0x8] sm:$0xff]
  %v52 = vld [vmem:[%s1] sm:$0xff]
  %v53 = vld [vmem:[%s1 + $0x8] sm:$0xff]
  %v54 = vld [vmem:[%s1 + $0x10] sm:$0xff]
  %v55 = vld [vmem:[%s1 + $0x18] sm:$0xff]
  %v56 = vld [vmem:[%s2] sm:$0x1]
  %v58 = vlaneseq
  %v59 = vshrl.u32 %v58, 7
  %v60 = vsub.s32 0, %v59
  %v61 = vrot.slane %v56, %v60
  %vm63 = vcmask 261120
  %v65 = vsel %vm63, %v50, 0
  %v68 = vsel %vm63, %v51, 0
  %70 = vmatprep.subr.mxu0 0.0
  %71 = vmatpush1.msra.mxu0 %v52
  %72 = vmatprep.subr.mxu0 0.0
  %73 = vmatpush1.msra.mxu0 %v53
  %74 = vmatprep.subr.mxu0 0.0
  %75 = vmatpush1.msra.mxu0 %v54
  %76 = vmatprep.subr.mxu0 0.0
  %77 = vmatpush1.msra.mxu0 %v55
  %78 = vmatprep.subr.mxu0 0.0
  %79 = vmatpush1.msra.mxu0 0.0
  %80 = vmatprep.subr.mxu0 0.0
  %81 = vmatpush1.msra.mxu0 0.0
  %82 = vmatprep.subr.mxu0 0.0
  %83 = vmatpush1.msra.mxu0 0.0
  %84 = vmatprep.subr.mxu0 0.0
  %85 = vmatpush1.msra.mxu0 0.0
  %86 = vmatprep.subr.mxu0 0.0
  %87 = vmatpush1.msra.mxu0 0.0
  %88 = vmatprep.subr.mxu0 0.0
  %89 = vmatpush1.msra.mxu0 0.0
  %90 = vmatprep.subr.mxu0 0.0
  %91 = vmatpush1.msra.mxu0 0.0
  %92 = vmatprep.subr.mxu0 0.0
  %93 = vmatpush1.msra.mxu0 0.0
  %94 = vmatprep.subr.mxu0 0.0
  %95 = vmatpush1.msra.mxu0 0.0
  %96 = vmatprep.subr.mxu0 0.0
  %97 = vmatpush1.msra.mxu0 0.0
  %98 = vmatprep.subr.mxu0 0.0
  %99 = vmatpush1.msra.mxu0 0.0
  %100 = vmatprep.subr.mxu0 0.0
  %101 = vmatpush1.msra.mxu0 0.0
  %102 = vmatprep.subr.mxu0 0.0
  %103 = vmatpush1.msra.mxu0 0.0
  %104 = vmatprep.subr.mxu0 0.0
  %105 = vmatpush1.msra.mxu0 0.0
  %106 = vmatprep.subr.mxu0 0.0
  %107 = vmatpush1.msra.mxu0 0.0
  %108 = vmatprep.subr.mxu0 0.0
  %109 = vmatpush1.msra.mxu0 0.0
  %110 = vmatprep.subr.mxu0 0.0
  %111 = vmatpush1.msra.mxu0 0.0
  %112 = vmatprep.subr.mxu0 0.0
  %113 = vmatpush1.msra.mxu0 0.0
  %114 = vmatprep.subr.mxu0 0.0
  %115 = vmatpush1.msra.mxu0 0.0
  %116 = vmatprep.subr.mxu0 0.0
  %117 = vmatpush1.msra.mxu0 0.0
  %118 = vmatprep.subr.mxu0 0.0
  %119 = vmatpush1.msra.mxu0 0.0
  %120 = vmatprep.subr.mxu0 0.0
  %121 = vmatpush1.msra.mxu0 0.0
  %122 = vmatprep.subr.mxu0 0.0
  %123 = vmatpush1.msra.mxu0 0.0
  %124 = vmatprep.subr.mxu0 0.0
  %125 = vmatpush1.msra.mxu0 0.0
  %126 = vmatprep.subr.mxu0 0.0
  %127 = vmatpush1.msra.mxu0 0.0
  %128 = vmatprep.subr.mxu0 0.0
  %129 = vmatpush1.msra.mxu0 0.0
  %130 = vmatprep.subr.mxu0 0.0
  %131 = vmatpush1.msra.mxu0 0.0
  %132 = vmatprep.subr.mxu0 0.0
  %133 = vmatpush1.msra.mxu0 0.0
  %134 = vmatprep.mubr.f32.mxu0 0.0
  %135 = vmatmul.mubr.f32.gmra.mrb[0].mxu0 %v65
  %v136 = vpop.f32.mrb[0].mxu0
  %v137 = vadd.f32 %v61, %v136
  %v138 = vpop.f32.mrb[0].mxu0
  %139 = vmatprep.mubr.f32.mxu0 0.0
  %140 = vmatmul.mubr.f32.gmra.mrb[0].mxu0 %v68
  %v141 = vpop.f32.mrb[0].mxu0
  %v142 = vadd.f32 %v61, %v141
  %v143 = vpop.f32.mrb[0].mxu0
  %144 = vdwg.mxu0
  %v145 = vmul.f32 %v137, 0.35355338
  %v146 = vmul.f32 %v142, 0.35355338
  %148 = vrot.lane.b32.xlu0 %v137, 96
  %v149 = vpop.permute.xlu0 %148
  %vm150 = vcmask 64512
  %v152 = vsel %vm150, %v145, 0
  %v154 = vsel %vm150, %v149, 0
  %156 = vmatprep.subr.mxu0 0.0
  %157 = vmatpush1.xpose.msra.mxu0 %v154
  %158 = vmatprep.subr.mxu0 0.0
  %159 = vmatpush1.xpose.msra.mxu0 0.0
  %160 = vmatprep.subr.mxu0 0.0
  %161 = vmatpush1.xpose.msra.mxu0 0.0
  %162 = vmatprep.subr.mxu0 0.0
  %163 = vmatpush1.xpose.msra.mxu0 0.0
  %164 = vmatprep.subr.mxu0 0.0
  %165 = vmatpush1.xpose.msra.mxu0 0.0
  %166 = vmatprep.subr.mxu0 0.0
  %167 = vmatpush1.xpose.msra.mxu0 0.0
  %168 = vmatprep.subr.mxu0 0.0
  %169 = vmatpush1.xpose.msra.mxu0 0.0
  %170 = vmatprep.subr.mxu0 0.0
  %171 = vmatpush1.xpose.msra.mxu0 0.0
  %172 = vmatprep.subr.mxu0 0.0
  %173 = vmatpush1.xpose.msra.mxu0 0.0
  %174 = vmatprep.subr.mxu0 0.0
  %175 = vmatpush1.xpose.msra.mxu0 0.0
  %176 = vmatprep.subr.mxu0 0.0
  %177 = vmatpush1.xpose.msra.mxu0 0.0
  %178 = vmatprep.subr.mxu0 0.0
  %179 = vmatpush1.xpose.msra.mxu0 0.0
  %180 = vmatprep.subr.mxu0 0.0
  %181 = vmatpush1.xpose.msra.mxu0 0.0
  %182 = vmatprep.subr.mxu0 0.0
  %183 = vmatpush1.xpose.msra.mxu0 0.0
  %184 = vmatprep.subr.mxu0 0.0
  %185 = vmatpush1.xpose.msra.mxu0 0.0
  %186 = vmatprep.subr.mxu0 0.0
  %187 = vmatpush1.xpose.msra.mxu0 0.0
  %188 = vmatprep.subr.mxu0 0.0
  %189 = vmatpush1.xpose.msra.mxu0 0.0
  %190 = vmatprep.subr.mxu0 0.0
  %191 = vmatpush1.xpose.msra.mxu0 0.0
  %192 = vmatprep.subr.mxu0 0.0
  %193 = vmatpush1.xpose.msra.mxu0 0.0
  %194 = vmatprep.subr.mxu0 0.0
  %195 = vmatpush1.xpose.msra.mxu0 0.0
  %196 = vmatprep.subr.mxu0 0.0
  %197 = vmatpush1.xpose.msra.mxu0 0.0
  %198 = vmatprep.subr.mxu0 0.0
  %199 = vmatpush1.xpose.msra.mxu0 0.0
  %200 = vmatprep.subr.mxu0 0.0
  %201 = vmatpush1.xpose.msra.mxu0 0.0
  %202 = vmatprep.subr.mxu0 0.0
  %203 = vmatpush1.xpose.msra.mxu0 0.0
  %204 = vmatprep.subr.mxu0 0.0
  %205 = vmatpush1.xpose.msra.mxu0 0.0
  %206 = vmatprep.subr.mxu0 0.0
  %207 = vmatpush1.xpose.msra.mxu0 0.0
  %208 = vmatprep.subr.mxu0 0.0
  %209 = vmatpush1.xpose.msra.mxu0 0.0
  %210 = vmatprep.subr.mxu0 0.0
  %211 = vmatpush1.xpose.msra.mxu0 0.0
  %212 = vmatprep.subr.mxu0 0.0
  %213 = vmatpush1.xpose.msra.mxu0 0.0
  %214 = vmatprep.subr.mxu0 0.0
  %215 = vmatpush1.xpose.msra.mxu0 0.0
  %216 = vmatprep.subr.mxu0 0.0
  %217 = vmatpush1.xpose.msra.mxu0 0.0
  %218 = vmatprep.subr.mxu0 0.0
  %219 = vmatpush1.xpose.msra.mxu0 0.0
  %220 = vmatprep.mubr.f32.mxu0 0.0
  %221 = vmatmul.mubr.f32.gmra.mrb[0].mxu0 %v152
  %v222 = vpop.f32.mrb[0].mxu0
  %v223 = vadd.f32 0.0, %v222
  %v224 = vpop.f32.mrb[0].mxu0
  %225 = vdwg.mxu0
  %227 = vrot.lane.b32.xlu0 %v142, 96
  %v228 = vpop.permute.xlu0 %227
  %v230 = vsel %vm150, %v146, 0
  %v232 = vsel %vm150, %v228, 0
  %234 = vmatprep.subr.mxu0 0.0
  %235 = vmatpush1.xpose.msra.mxu0 %v232
  %236 = vmatprep.subr.mxu0 0.0
  %237 = vmatpush1.xpose.msra.mxu0 0.0
  %238 = vmatprep.subr.mxu0 0.0
  %239 = vmatpush1.xpose.msra.mxu0 0.0
  %240 = vmatprep.subr.mxu0 0.0
  %241 = vmatpush1.xpose.msra.mxu0 0.0
  %242 = vmatprep.subr.mxu0 0.0
  %243 = vmatpush1.xpose.msra.mxu0 0.0
  %244 = vmatprep.subr.mxu0 0.0
  %245 = vmatpush1.xpose.msra.mxu0 0.0
  %246 = vmatprep.subr.mxu0 0.0
  %247 = vmatpush1.xpose.msra.mxu0 0.0
  %248 = vmatprep.subr.mxu0 0.0
  %249 = vmatpush1.xpose.msra.mxu0 0.0
  %250 = vmatprep.subr.mxu0 0.0
  %251 = vmatpush1.xpose.msra.mxu0 0.0
  %252 = vmatprep.subr.mxu0 0.0
  %253 = vmatpush1.xpose.msra.mxu0 0.0
  %254 = vmatprep.subr.mxu0 0.0
  %255 = vmatpush1.xpose.msra.mxu0 0.0
  %256 = vmatprep.subr.mxu0 0.0
  %257 = vmatpush1.xpose.msra.mxu0 0.0
  %258 = vmatprep.subr.mxu0 0.0
  %259 = vmatpush1.xpose.msra.mxu0 0.0
  %260 = vmatprep.subr.mxu0 0.0
  %261 = vmatpush1.xpose.msra.mxu0 0.0
  %262 = vmatprep.subr.mxu0 0.0
  %263 = vmatpush1.xpose.msra.mxu0 0.0
  %264 = vmatprep.subr.mxu0 0.0
  %265 = vmatpush1.xpose.msra.mxu0 0.0
  %266 = vmatprep.subr.mxu0 0.0
  %267 = vmatpush1.xpose.msra.mxu0 0.0
  %268 = vmatprep.subr.mxu0 0.0
  %269 = vmatpush1.xpose.msra.mxu0 0.0
  %270 = vmatprep.subr.mxu0 0.0
  %271 = vmatpush1.xpose.msra.mxu0 0.0
  %272 = vmatprep.subr.mxu0 0.0
  %273 = vmatpush1.xpose.msra.mxu0 0.0
  %274 = vmatprep.subr.mxu0 0.0
  %275 = vmatpush1.xpose.msra.mxu0 0.0
  %276 = vmatprep.subr.mxu0 0.0
  %277 = vmatpush1.xpose.msra.mxu0 0.0
  %278 = vmatprep.subr.mxu0 0.0
  %279 = vmatpush1.xpose.msra.mxu0 0.0
  %280 = vmatprep.subr.mxu0 0.0
  %281 = vmatpush1.xpose.msra.mxu0 0.0
  %282 = vmatprep.subr.mxu0 0.0
  %283 = vmatpush1.xpose.msra.mxu0 0.0
  %284 = vmatprep.subr.mxu0 0.0
  %285 = vmatpush1.xpose.msra.mxu0 0.0
  %286 = vmatprep.subr.mxu0 0.0
  %287 = vmatpush1.xpose.msra.mxu0 0.0
  %288 = vmatprep.subr.mxu0 0.0
  %289 = vmatpush1.xpose.msra.mxu0 0.0
  %290 = vmatprep.subr.mxu0 0.0
  %291 = vmatpush1.xpose.msra.mxu0 0.0
  %292 = vmatprep.subr.mxu0 0.0
  %293 = vmatpush1.xpose.msra.mxu0 0.0
  %294 = vmatprep.subr.mxu0 0.0
  %295 = vmatpush1.xpose.msra.mxu0 0.0
  %296 = vmatprep.subr.mxu0 0.0
  %297 = vmatpush1.xpose.msra.mxu0 0.0
  %298 = vmatprep.mubr.f32.mxu0 0.0
  %299 = vmatmul.mubr.f32.gmra.mrb[0].mxu0 %v230
  %v300 = vpop.f32.mrb[0].mxu0
  %v301 = vadd.f32 0.0, %v300
  %v302 = vpop.f32.mrb[0].mxu0
  %303 = vdwg.mxu0
  %v304 = vsel %vm150, %v223, -inf
  %305 = vmax.xlane.f32.xlu0 %v304
  %v306 = vpop.xlane.xlu0 %305
  %v307 = vsel %vm150, %v301, -inf
  %308 = vmax.xlane.f32.xlu0 %v307
  %v309 = vpop.xlane.xlu0 %308
  %v310 = vsub.f32 %v223, %v306
  %v311 = vsub.f32 %v301, %v309
  %v312 = vmul.f32 %v310, 1.442695
  %v313 = vpow.pop %v312
  %v314 = vmul.f32 %v311, 1.442695
  %v315 = vpow.pop %v314
  %v316 = vsel %vm150, %v313, 0.0
  %317 = vadd.xlane.f32.xlu0 %v316
  %v318 = vpop.xlane.xlu0 %317
  %v319 = vsel %vm150, %v315, 0.0
  %320 = vadd.xlane.f32.xlu0 %v319
  %v321 = vpop.xlane.xlu0 %320
  %v322 = vrcp.pop %v318
  %v323 = vrcp.pop %v321
  %v324 = vmul.f32 %v313, %v322
  %v325 = vmul.f32 %v315, %v323
  %326 = vrot.lane.b32.xlu0 %v137, 64
  %v327 = vpop.permute.xlu0 %326
  %v330 = vsel %vm150, %v324, 0
  %332 = vmatprep.subr.mxu0 0.0
  %333 = vmatpush1.msra.mxu0 %v327
  %334 = vmatprep.subr.mxu0 0.0
  %335 = vmatpush1.msra.mxu0 0.0
  %336 = vmatprep.subr.mxu0 0.0
  %337 = vmatpush1.msra.mxu0 0.0
  %338 = vmatprep.subr.mxu0 0.0
  %339 = vmatpush1.msra.mxu0 0.0
  %340 = vmatprep.subr.mxu0 0.0
  %341 = vmatpush1.msra.mxu0 0.0
  %342 = vmatprep.subr.mxu0 0.0
  %343 = vmatpush1.msra.mxu0 0.0
  %344 = vmatprep.subr.mxu0 0.0
  %345 = vmatpush1.msra.mxu0 0.0
  %346 = vmatprep.subr.mxu0 0.0
  %347 = vmatpush1.msra.mxu0 0.0
  %348 = vmatprep.subr.mxu0 0.0
  %349 = vmatpush1.msra.mxu0 0.0
  %350 = vmatprep.subr.mxu0 0.0
  %351 = vmatpush1.msra.mxu0 0.0
  %352 = vmatprep.subr.mxu0 0.0
  %353 = vmatpush1.msra.mxu0 0.0
  %354 = vmatprep.subr.mxu0 0.0
  %355 = vmatpush1.msra.mxu0 0.0
  %356 = vmatprep.subr.mxu0 0.0
  %357 = vmatpush1.msra.mxu0 0.0
  %358 = vmatprep.subr.mxu0 0.0
  %359 = vmatpush1.msra.mxu0 0.0
  %360 = vmatprep.subr.mxu0 0.0
  %361 = vmatpush1.msra.mxu0 0.0
  %362 = vmatprep.subr.mxu0 0.0
  %363 = vmatpush1.msra.mxu0 0.0
  %364 = vmatprep.subr.mxu0 0.0
  %365 = vmatpush1.msra.mxu0 0.0
  %366 = vmatprep.subr.mxu0 0.0
  %367 = vmatpush1.msra.mxu0 0.0
  %368 = vmatprep.subr.mxu0 0.0
  %369 = vmatpush1.msra.mxu0 0.0
  %370 = vmatprep.subr.mxu0 0.0
  %371 = vmatpush1.msra.mxu0 0.0
  %372 = vmatprep.subr.mxu0 0.0
  %373 = vmatpush1.msra.mxu0 0.0
  %374 = vmatprep.subr.mxu0 0.0
  %375 = vmatpush1.msra.mxu0 0.0
  %376 = vmatprep.subr.mxu0 0.0
  %377 = vmatpush1.msra.mxu0 0.0
  %378 = vmatprep.subr.mxu0 0.0
  %379 = vmatpush1.msra.mxu0 0.0
  %380 = vmatprep.subr.mxu0 0.0
  %381 = vmatpush1.msra.mxu0 0.0
  %382 = vmatprep.subr.mxu0 0.0
  %383 = vmatpush1.msra.mxu0 0.0
  %384 = vmatprep.subr.mxu0 0.0
  %385 = vmatpush1.msra.mxu0 0.0
  %386 = vmatprep.subr.mxu0 0.0
  %387 = vmatpush1.msra.mxu0 0.0
  %388 = vmatprep.subr.mxu0 0.0
  %389 = vmatpush1.msra.mxu0 0.0
  %390 = vmatprep.subr.mxu0 0.0
  %391 = vmatpush1.msra.mxu0 0.0
  %392 = vmatprep.subr.mxu0 0.0
  %393 = vmatpush1.msra.mxu0 0.0
  %394 = vmatprep.subr.mxu0 0.0
  %395 = vmatpush1.msra.mxu0 0.0
  %396 = vmatprep.mubr.f32.mxu0 0.0
  %397 = vmatmul.mubr.f32.gmra.mrb[0].mxu0 %v330
  %v398 = vpop.f32.mrb[0].mxu0
  %v399 = vadd.f32 0.0, %v398
  %v400 = vpop.f32.mrb[0].mxu0
  %401 = vdwg.mxu0
  %402 = vrot.lane.b32.xlu0 %v142, 64
  %v403 = vpop.permute.xlu0 %402
  %v406 = vsel %vm150, %v325, 0
  %408 = vmatprep.subr.mxu0 0.0
  %409 = vmatpush1.msra.mxu0 %v403
  %410 = vmatprep.subr.mxu0 0.0
  %411 = vmatpush1.msra.mxu0 0.0
  %412 = vmatprep.subr.mxu0 0.0
  %413 = vmatpush1.msra.mxu0 0.0
  %414 = vmatprep.subr.mxu0 0.0
  %415 = vmatpush1.msra.mxu0 0.0
  %416 = vmatprep.subr.mxu0 0.0
  %417 = vmatpush1.msra.mxu0 0.0
  %418 = vmatprep.subr.mxu0 0.0
  %419 = vmatpush1.msra.mxu0 0.0
  %420 = vmatprep.subr.mxu0 0.0
  %421 = vmatpush1.msra.mxu0 0.0
  %422 = vmatprep.subr.mxu0 0.0
  %423 = vmatpush1.msra.mxu0 0.0
  %424 = vmatprep.subr.mxu0 0.0
  %425 = vmatpush1.msra.mxu0 0.0
  %426 = vmatprep.subr.mxu0 0.0
  %427 = vmatpush1.msra.mxu0 0.0
  %428 = vmatprep.subr.mxu0 0.0
  %429 = vmatpush1.msra.mxu0 0.0
  %430 = vmatprep.subr.mxu0 0.0
  %431 = vmatpush1.msra.mxu0 0.0
  %432 = vmatprep.subr.mxu0 0.0
  %433 = vmatpush1.msra.mxu0 0.0
  %434 = vmatprep.subr.mxu0 0.0
  %435 = vmatpush1.msra.mxu0 0.0
  %436 = vmatprep.subr.mxu0 0.0
  %437 = vmatpush1.msra.mxu0 0.0
  %438 = vmatprep.subr.mxu0 0.0
  %439 = vmatpush1.msra.mxu0 0.0
  %440 = vmatprep.subr.mxu0 0.0
  %441 = vmatpush1.msra.mxu0 0.0
  %442 = vmatprep.subr.mxu0 0.0
  %443 = vmatpush1.msra.mxu0 0.0
  %444 = vmatprep.subr.mxu0 0.0
  %445 = vmatpush1.msra.mxu0 0.0
  %446 = vmatprep.subr.mxu0 0.0
  %447 = vmatpush1.msra.mxu0 0.0
  %448 = vmatprep.subr.mxu0 0.0
  %449 = vmatpush1.msra.mxu0 0.0
  %450 = vmatprep.subr.mxu0 0.0
  %451 = vmatpush1.msra.mxu0 0.0
  %452 = vmatprep.subr.mxu0 0.0
  %453 = vmatpush1.msra.mxu0 0.0
  %454 = vmatprep.subr.mxu0 0.0
  %455 = vmatpush1.msra.mxu0 0.0
  %456 = vmatprep.subr.mxu0 0.0
  %457 = vmatpush1.msra.mxu0 0.0
  %458 = vmatprep.subr.mxu0 0.0
  %459 = vmatpush1.msra.mxu0 0.0
  %460 = vmatprep.subr.mxu0 0.0
  %461 = vmatpush1.msra.mxu0 0.0
  %462 = vmatprep.subr.mxu0 0.0
  %463 = vmatpush1.msra.mxu0 0.0
  %464 = vmatprep.subr.mxu0 0.0
  %465 = vmatpush1.msra.mxu0 0.0
  %466 = vmatprep.subr.mxu0 0.0
  %467 = vmatpush1.msra.mxu0 0.0
  %468 = vmatprep.subr.mxu0 0.0
  %469 = vmatpush1.msra.mxu0 0.0
  %470 = vmatprep.subr.mxu0 0.0
  %471 = vmatpush1.msra.mxu0 0.0
  %472 = vmatprep.mubr.f32.mxu0 0.0
  %473 = vmatmul.mubr.f32.gmra.mrb[0].mxu0 %v406
  %v474 = vpop.f32.mrb[0].mxu0
  %v475 = vadd.f32 0.0, %v474
  %v476 = vpop.f32.mrb[0].mxu0
  %477 = vdwg.mxu0
  %478 = vrot.lane.b32.xlu0 %v145, 120
  %v479 = vpop.permute.xlu0 %478
  %480 = vrot.lane.b32.xlu0 %v137, 88
  %v481 = vpop.permute.xlu0 %480
  %v482 = vsel %vm150, %v479, 0
  %v484 = vsel %vm150, %v481, 0
  %486 = vmatprep.subr.mxu0 0.0
  %487 = vmatpush1.xpose.msra.mxu0 %v484
  %488 = vmatprep.subr.mxu0 0.0
  %489 = vmatpush1.xpose.msra.mxu0 0.0
  %490 = vmatprep.subr.mxu0 0.0
  %491 = vmatpush1.xpose.msra.mxu0 0.0
  %492 = vmatprep.subr.mxu0 0.0
  %493 = vmatpush1.xpose.msra.mxu0 0.0
  %494 = vmatprep.subr.mxu0 0.0
  %495 = vmatpush1.xpose.msra.mxu0 0.0
  %496 = vmatprep.subr.mxu0 0.0
  %497 = vmatpush1.xpose.msra.mxu0 0.0
  %498 = vmatprep.subr.mxu0 0.0
  %499 = vmatpush1.xpose.msra.mxu0 0.0
  %500 = vmatprep.subr.mxu0 0.0
  %501 = vmatpush1.xpose.msra.mxu0 0.0
  %502 = vmatprep.subr.mxu0 0.0
  %503 = vmatpush1.xpose.msra.mxu0 0.0
  %504 = vmatprep.subr.mxu0 0.0
  %505 = vmatpush1.xpose.msra.mxu0 0.0
  %506 = vmatprep.subr.mxu0 0.0
  %507 = vmatpush1.xpose.msra.mxu0 0.0
  %508 = vmatprep.subr.mxu0 0.0
  %509 = vmatpush1.xpose.msra.mxu0 0.0
  %510 = vmatprep.subr.mxu0 0.0
  %511 = vmatpush1.xpose.msra.mxu0 0.0
  %512 = vmatprep.subr.mxu0 0.0
  %513 = vmatpush1.xpose.msra.mxu0 0.0
  %514 = vmatprep.subr.mxu0 0.0
  %515 = vmatpush1.xpose.msra.mxu0 0.0
  %516 = vmatprep.subr.mxu0 0.0
  %517 = vmatpush1.xpose.msra.mxu0 0.0
  %518 = vmatprep.subr.mxu0 0.0
  %519 = vmatpush1.xpose.msra.mxu0 0.0
  %520 = vmatprep.subr.mxu0 0.0
  %521 = vmatpush1.xpose.msra.mxu0 0.0
  %522 = vmatprep.subr.mxu0 0.0
  %523 = vmatpush1.xpose.msra.mxu0 0.0
  %524 = vmatprep.subr.mxu0 0.0
  %525 = vmatpush1.xpose.msra.mxu0 0.0
  %526 = vmatprep.subr.mxu0 0.0
  %527 = vmatpush1.xpose.msra.mxu0 0.0
  %528 = vmatprep.subr.mxu0 0.0
  %529 = vmatpush1.xpose.msra.mxu0 0.0
  %530 = vmatprep.subr.mxu0 0.0
  %531 = vmatpush1.xpose.msra.mxu0 0.0
  %532 = vmatprep.subr.mxu0 0.0
  %533 = vmatpush1.xpose.msra.mxu0 0.0
  %534 = vmatprep.subr.mxu0 0.0
  %535 = vmatpush1.xpose.msra.mxu0 0.0
  %536 = vmatprep.subr.mxu0 0.0
  %537 = vmatpush1.xpose.msra.mxu0 0.0
  %538 = vmatprep.subr.mxu0 0.0
  %539 = vmatpush1.xpose.msra.mxu0 0.0
  %540 = vmatprep.subr.mxu0 0.0
  %541 = vmatpush1.xpose.msra.mxu0 0.0
  %542 = vmatprep.subr.mxu0 0.0
  %543 = vmatpush1.xpose.msra.mxu0 0.0
  %544 = vmatprep.subr.mxu0 0.0
  %545 = vmatpush1.xpose.msra.mxu0 0.0
  %546 = vmatprep.subr.mxu0 0.0
  %547 = vmatpush1.xpose.msra.mxu0 0.0
  %548 = vmatprep.subr.mxu0 0.0
  %549 = vmatpush1.xpose.msra.mxu0 0.0
  %550 = vmatprep.mubr.f32.mxu0 0.0
  %551 = vmatmul.mubr.f32.gmra.mrb[0].mxu0 %v482
  %v552 = vpop.f32.mrb[0].mxu0
  %v553 = vadd.f32 0.0, %v552
  %v554 = vpop.f32.mrb[0].mxu0
  %555 = vdwg.mxu0
  %556 = vrot.lane.b32.xlu0 %v146, 120
  %v557 = vpop.permute.xlu0 %556
  %558 = vrot.lane.b32.xlu0 %v142, 88
  %v559 = vpop.permute.xlu0 %558
  %v560 = vsel %vm150, %v557, 0
  %v562 = vsel %vm150, %v559, 0
  %564 = vmatprep.subr.mxu0 0.0
  %565 = vmatpush1.xpose.msra.mxu0 %v562
  %566 = vmatprep.subr.mxu0 0.0
  %567 = vmatpush1.xpose.msra.mxu0 0.0
  %568 = vmatprep.subr.mxu0 0.0
  %569 = vmatpush1.xpose.msra.mxu0 0.0
  %570 = vmatprep.subr.mxu0 0.0
  %571 = vmatpush1.xpose.msra.mxu0 0.0
  %572 = vmatprep.subr.mxu0 0.0
  %573 = vmatpush1.xpose.msra.mxu0 0.0
  %574 = vmatprep.subr.mxu0 0.0
  %575 = vmatpush1.xpose.msra.mxu0 0.0
  %576 = vmatprep.subr.mxu0 0.0
  %577 = vmatpush1.xpose.msra.mxu0 0.0
  %578 = vmatprep.subr.mxu0 0.0
  %579 = vmatpush1.xpose.msra.mxu0 0.0
  %580 = vmatprep.subr.mxu0 0.0
  %581 = vmatpush1.xpose.msra.mxu0 0.0
  %582 = vmatprep.subr.mxu0 0.0
  %583 = vmatpush1.xpose.msra.mxu0 0.0
  %584 = vmatprep.subr.mxu0 0.0
  %585 = vmatpush1.xpose.msra.mxu0 0.0
  %586 = vmatprep.subr.mxu0 0.0
  %587 = vmatpush1.xpose.msra.mxu0 0.0
  %588 = vmatprep.subr.mxu0 0.0
  %589 = vmatpush1.xpose.msra.mxu0 0.0
  %590 = vmatprep.subr.mxu0 0.0
  %591 = vmatpush1.xpose.msra.mxu0 0.0
  %592 = vmatprep.subr.mxu0 0.0
  %593 = vmatpush1.xpose.msra.mxu0 0.0
  %594 = vmatprep.subr.mxu0 0.0
  %595 = vmatpush1.xpose.msra.mxu0 0.0
  %596 = vmatprep.subr.mxu0 0.0
  %597 = vmatpush1.xpose.msra.mxu0 0.0
  %598 = vmatprep.subr.mxu0 0.0
  %599 = vmatpush1.xpose.msra.mxu0 0.0
  %600 = vmatprep.subr.mxu0 0.0
  %601 = vmatpush1.xpose.msra.mxu0 0.0
  %602 = vmatprep.subr.mxu0 0.0
  %603 = vmatpush1.xpose.msra.mxu0 0.0
  %604 = vmatprep.subr.mxu0 0.0
  %605 = vmatpush1.xpose.msra.mxu0 0.0
  %606 = vmatprep.subr.mxu0 0.0
  %607 = vmatpush1.xpose.msra.mxu0 0.0
  %608 = vmatprep.subr.mxu0 0.0
  %609 = vmatpush1.xpose.msra.mxu0 0.0
  %610 = vmatprep.subr.mxu0 0.0
  %611 = vmatpush1.xpose.msra.mxu0 0.0
  %612 = vmatprep.subr.mxu0 0.0
  %613 = vmatpush1.xpose.msra.mxu0 0.0
  %614 = vmatprep.subr.mxu0 0.0
  %615 = vmatpush1.xpose.msra.mxu0 0.0
  %616 = vmatprep.subr.mxu0 0.0
  %617 = vmatpush1.xpose.msra.mxu0 0.0
  %618 = vmatprep.subr.mxu0 0.0
  %619 = vmatpush1.xpose.msra.mxu0 0.0
  %620 = vmatprep.subr.mxu0 0.0
  %621 = vmatpush1.xpose.msra.mxu0 0.0
  %622 = vmatprep.subr.mxu0 0.0
  %623 = vmatpush1.xpose.msra.mxu0 0.0
  %624 = vmatprep.subr.mxu0 0.0
  %625 = vmatpush1.xpose.msra.mxu0 0.0
  %626 = vmatprep.subr.mxu0 0.0
  %627 = vmatpush1.xpose.msra.mxu0 0.0
  %628 = vmatprep.mubr.f32.mxu0 0.0
  %629 = vmatmul.mubr.f32.gmra.mrb[0].mxu0 %v560
  %v630 = vpop.f32.mrb[0].mxu0
  %v631 = vadd.f32 0.0, %v630
  %v632 = vpop.f32.mrb[0].mxu0
  %633 = vdwg.mxu0
  %v634 = vsel %vm150, %v553, -inf
  %635 = vmax.xlane.f32.xlu0 %v634
  %v636 = vpop.xlane.xlu0 %635
  %v637 = vsel %vm150, %v631, -inf
  %638 = vmax.xlane.f32.xlu0 %v637
  %v639 = vpop.xlane.xlu0 %638
  %v640 = vsub.f32 %v553, %v636
  %v641 = vsub.f32 %v631, %v639
  %v642 = vmul.f32 %v640, 1.442695
  %v643 = vpow.pop %v642
  %v644 = vmul.f32 %v641, 1.442695
  %v645 = vpow.pop %v644
  %v646 = vsel %vm150, %v643, 0.0
  %647 = vadd.xlane.f32.xlu0 %v646
  %v648 = vpop.xlane.xlu0 %647
  %v649 = vsel %vm150, %v645, 0.0
  %650 = vadd.xlane.f32.xlu0 %v649
  %v651 = vpop.xlane.xlu0 %650
  %v652 = vrcp.pop %v648
  %v653 = vrcp.pop %v651
  %v654 = vmul.f32 %v643, %v652
  %v655 = vmul.f32 %v645, %v653
  %656 = vrot.lane.b32.xlu0 %v137, 56
  %v657 = vpop.permute.xlu0 %656
  %v660 = vsel %vm150, %v654, 0
  %662 = vmatprep.subr.mxu0 0.0
  %663 = vmatpush1.msra.mxu0 %v657
  %664 = vmatprep.subr.mxu0 0.0
  %665 = vmatpush1.msra.mxu0 0.0
  %666 = vmatprep.subr.mxu0 0.0
  %667 = vmatpush1.msra.mxu0 0.0
  %668 = vmatprep.subr.mxu0 0.0
  %669 = vmatpush1.msra.mxu0 0.0
  %670 = vmatprep.subr.mxu0 0.0
  %671 = vmatpush1.msra.mxu0 0.0
  %672 = vmatprep.subr.mxu0 0.0
  %673 = vmatpush1.msra.mxu0 0.0
  %674 = vmatprep.subr.mxu0 0.0
  %675 = vmatpush1.msra.mxu0 0.0
  %676 = vmatprep.subr.mxu0 0.0
  %677 = vmatpush1.msra.mxu0 0.0
  %678 = vmatprep.subr.mxu0 0.0
  %679 = vmatpush1.msra.mxu0 0.0
  %680 = vmatprep.subr.mxu0 0.0
  %681 = vmatpush1.msra.mxu0 0.0
  %682 = vmatprep.subr.mxu0 0.0
  %683 = vmatpush1.msra.mxu0 0.0
  %684 = vmatprep.subr.mxu0 0.0
  %685 = vmatpush1.msra.mxu0 0.0
  %686 = vmatprep.subr.mxu0 0.0
  %687 = vmatpush1.msra.mxu0 0.0
  %688 = vmatprep.subr.mxu0 0.0
  %689 = vmatpush1.msra.mxu0 0.0
  %690 = vmatprep.subr.mxu0 0.0
  %691 = vmatpush1.msra.mxu0 0.0
  %692 = vmatprep.subr.mxu0 0.0
  %693 = vmatpush1.msra.mxu0 0.0
  %694 = vmatprep.subr.mxu0 0.0
  %695 = vmatpush1.msra.mxu0 0.0
  %696 = vmatprep.subr.mxu0 0.0
  %697 = vmatpush1.msra.mxu0 0.0
  %698 = vmatprep.subr.mxu0 0.0
  %699 = vmatpush1.msra.mxu0 0.0
  %700 = vmatprep.subr.mxu0 0.0
  %701 = vmatpush1.msra.mxu0 0.0
  %702 = vmatprep.subr.mxu0 0.0
  %703 = vmatpush1.msra.mxu0 0.0
  %704 = vmatprep.subr.mxu0 0.0
  %705 = vmatpush1.msra.mxu0 0.0
  %706 = vmatprep.subr.mxu0 0.0
  %707 = vmatpush1.msra.mxu0 0.0
  %708 = vmatprep.subr.mxu0 0.0
  %709 = vmatpush1.msra.mxu0 0.0
  %710 = vmatprep.subr.mxu0 0.0
  %711 = vmatpush1.msra.mxu0 0.0
  %712 = vmatprep.subr.mxu0 0.0
  %713 = vmatpush1.msra.mxu0 0.0
  %714 = vmatprep.subr.mxu0 0.0
  %715 = vmatpush1.msra.mxu0 0.0
  %716 = vmatprep.subr.mxu0 0.0
  %717 = vmatpush1.msra.mxu0 0.0
  %718 = vmatprep.subr.mxu0 0.0
  %719 = vmatpush1.msra.mxu0 0.0
  %720 = vmatprep.subr.mxu0 0.0
  %721 = vmatpush1.msra.mxu0 0.0
  %722 = vmatprep.subr.mxu0 0.0
  %723 = vmatpush1.msra.mxu0 0.0
  %724 = vmatprep.subr.mxu0 0.0
  %725 = vmatpush1.msra.mxu0 0.0
  %726 = vmatprep.mubr.f32.mxu0 0.0
  %727 = vmatmul.mubr.f32.gmra.mrb[0].mxu0 %v660
  %v728 = vpop.f32.mrb[0].mxu0
  %v729 = vadd.f32 0.0, %v728
  %v730 = vpop.f32.mrb[0].mxu0
  %731 = vdwg.mxu0
  %732 = vrot.lane.b32.xlu0 %v142, 56
  %v733 = vpop.permute.xlu0 %732
  %v736 = vsel %vm150, %v655, 0
  %738 = vmatprep.subr.mxu0 0.0
  %739 = vmatpush1.msra.mxu0 %v733
  %740 = vmatprep.subr.mxu0 0.0
  %741 = vmatpush1.msra.mxu0 0.0
  %742 = vmatprep.subr.mxu0 0.0
  %743 = vmatpush1.msra.mxu0 0.0
  %744 = vmatprep.subr.mxu0 0.0
  %745 = vmatpush1.msra.mxu0 0.0
  %746 = vmatprep.subr.mxu0 0.0
  %747 = vmatpush1.msra.mxu0 0.0
  %748 = vmatprep.subr.mxu0 0.0
  %749 = vmatpush1.msra.mxu0 0.0
  %750 = vmatprep.subr.mxu0 0.0
  %751 = vmatpush1.msra.mxu0 0.0
  %752 = vmatprep.subr.mxu0 0.0
  %753 = vmatpush1.msra.mxu0 0.0
  %754 = vmatprep.subr.mxu0 0.0
  %755 = vmatpush1.msra.mxu0 0.0
  %756 = vmatprep.subr.mxu0 0.0
  %757 = vmatpush1.msra.mxu0 0.0
  %758 = vmatprep.subr.mxu0 0.0
  %759 = vmatpush1.msra.mxu0 0.0
  %760 = vmatprep.subr.mxu0 0.0
  %761 = vmatpush1.msra.mxu0 0.0
  %762 = vmatprep.subr.mxu0 0.0
  %763 = vmatpush1.msra.mxu0 0.0
  %764 = vmatprep.subr.mxu0 0.0
  %765 = vmatpush1.msra.mxu0 0.0
  %766 = vmatprep.subr.mxu0 0.0
  %767 = vmatpush1.msra.mxu0 0.0
  %768 = vmatprep.subr.mxu0 0.0
  %769 = vmatpush1.msra.mxu0 0.0
  %770 = vmatprep.subr.mxu0 0.0
  %771 = vmatpush1.msra.mxu0 0.0
  %772 = vmatprep.subr.mxu0 0.0
  %773 = vmatpush1.msra.mxu0 0.0
  %774 = vmatprep.subr.mxu0 0.0
  %775 = vmatpush1.msra.mxu0 0.0
  %776 = vmatprep.subr.mxu0 0.0
  %777 = vmatpush1.msra.mxu0 0.0
  %778 = vmatprep.subr.mxu0 0.0
  %779 = vmatpush1.msra.mxu0 0.0
  %780 = vmatprep.subr.mxu0 0.0
  %781 = vmatpush1.msra.mxu0 0.0
  %782 = vmatprep.subr.mxu0 0.0
  %783 = vmatpush1.msra.mxu0 0.0
  %784 = vmatprep.subr.mxu0 0.0
  %785 = vmatpush1.msra.mxu0 0.0
  %786 = vmatprep.subr.mxu0 0.0
  %787 = vmatpush1.msra.mxu0 0.0
  %788 = vmatprep.subr.mxu0 0.0
  %789 = vmatpush1.msra.mxu0 0.0
  %790 = vmatprep.subr.mxu0 0.0
  %791 = vmatpush1.msra.mxu0 0.0
  %792 = vmatprep.subr.mxu0 0.0
  %793 = vmatpush1.msra.mxu0 0.0
  %794 = vmatprep.subr.mxu0 0.0
  %795 = vmatpush1.msra.mxu0 0.0
  %796 = vmatprep.subr.mxu0 0.0
  %797 = vmatpush1.msra.mxu0 0.0
  %798 = vmatprep.subr.mxu0 0.0
  %799 = vmatpush1.msra.mxu0 0.0
  %800 = vmatprep.subr.mxu0 0.0
  %801 = vmatpush1.msra.mxu0 0.0
  %802 = vmatprep.mubr.f32.mxu0 0.0
  %803 = vmatmul.mubr.f32.gmra.mrb[0].mxu0 %v736
  %v804 = vpop.f32.mrb[0].mxu0
  %v805 = vadd.f32 0.0, %v804
  %v806 = vpop.f32.mrb[0].mxu0
  %807 = vdwg.mxu0
  %808 = vrot.lane.b32.xlu0 %v145, 112
  %v809 = vpop.permute.xlu0 %808
  %810 = vrot.lane.b32.xlu0 %v137, 80
  %v811 = vpop.permute.xlu0 %810
  %v812 = vsel %vm150, %v809, 0
  %v814 = vsel %vm150, %v811, 0
  %816 = vmatprep.subr.mxu0 0.0
  %817 = vmatpush1.xpose.msra.mxu0 %v814
  %818 = vmatprep.subr.mxu0 0.0
  %819 = vmatpush1.xpose.msra.mxu0 0.0
  %820 = vmatprep.subr.mxu0 0.0
  %821 = vmatpush1.xpose.msra.mxu0 0.0
  %822 = vmatprep.subr.mxu0 0.0
  %823 = vmatpush1.xpose.msra.mxu0 0.0
  %824 = vmatprep.subr.mxu0 0.0
  %825 = vmatpush1.xpose.msra.mxu0 0.0
  %826 = vmatprep.subr.mxu0 0.0
  %827 = vmatpush1.xpose.msra.mxu0 0.0
  %828 = vmatprep.subr.mxu0 0.0
  %829 = vmatpush1.xpose.msra.mxu0 0.0
  %830 = vmatprep.subr.mxu0 0.0
  %831 = vmatpush1.xpose.msra.mxu0 0.0
  %832 = vmatprep.subr.mxu0 0.0
  %833 = vmatpush1.xpose.msra.mxu0 0.0
  %834 = vmatprep.subr.mxu0 0.0
  %835 = vmatpush1.xpose.msra.mxu0 0.0
  %836 = vmatprep.subr.mxu0 0.0
  %837 = vmatpush1.xpose.msra.mxu0 0.0
  %838 = vmatprep.subr.mxu0 0.0
  %839 = vmatpush1.xpose.msra.mxu0 0.0
  %840 = vmatprep.subr.mxu0 0.0
  %841 = vmatpush1.xpose.msra.mxu0 0.0
  %842 = vmatprep.subr.mxu0 0.0
  %843 = vmatpush1.xpose.msra.mxu0 0.0
  %844 = vmatprep.subr.mxu0 0.0
  %845 = vmatpush1.xpose.msra.mxu0 0.0
  %846 = vmatprep.subr.mxu0 0.0
  %847 = vmatpush1.xpose.msra.mxu0 0.0
  %848 = vmatprep.subr.mxu0 0.0
  %849 = vmatpush1.xpose.msra.mxu0 0.0
  %850 = vmatprep.subr.mxu0 0.0
  %851 = vmatpush1.xpose.msra.mxu0 0.0
  %852 = vmatprep.subr.mxu0 0.0
  %853 = vmatpush1.xpose.msra.mxu0 0.0
  %854 = vmatprep.subr.mxu0 0.0
  %855 = vmatpush1.xpose.msra.mxu0 0.0
  %856 = vmatprep.subr.mxu0 0.0
  %857 = vmatpush1.xpose.msra.mxu0 0.0
  %858 = vmatprep.subr.mxu0 0.0
  %859 = vmatpush1.xpose.msra.mxu0 0.0
  %860 = vmatprep.subr.mxu0 0.0
  %861 = vmatpush1.xpose.msra.mxu0 0.0
  %862 = vmatprep.subr.mxu0 0.0
  %863 = vmatpush1.xpose.msra.mxu0 0.0
  %864 = vmatprep.subr.mxu0 0.0
  %865 = vmatpush1.xpose.msra.mxu0 0.0
  %866 = vmatprep.subr.mxu0 0.0
  %867 = vmatpush1.xpose.msra.mxu0 0.0
  %868 = vmatprep.subr.mxu0 0.0
  %869 = vmatpush1.xpose.msra.mxu0 0.0
  %870 = vmatprep.subr.mxu0 0.0
  %871 = vmatpush1.xpose.msra.mxu0 0.0
  %872 = vmatprep.subr.mxu0 0.0
  %873 = vmatpush1.xpose.msra.mxu0 0.0
  %874 = vmatprep.subr.mxu0 0.0
  %875 = vmatpush1.xpose.msra.mxu0 0.0
  %876 = vmatprep.subr.mxu0 0.0
  %877 = vmatpush1.xpose.msra.mxu0 0.0
  %878 = vmatprep.subr.mxu0 0.0
  %879 = vmatpush1.xpose.msra.mxu0 0.0
  %880 = vmatprep.mubr.f32.mxu0 0.0
  %881 = vmatmul.mubr.f32.gmra.mrb[0].mxu0 %v812
  %v882 = vpop.f32.mrb[0].mxu0
  %v883 = vadd.f32 0.0, %v882
  %v884 = vpop.f32.mrb[0].mxu0
  %885 = vdwg.mxu0
  %886 = vrot.lane.b32.xlu0 %v146, 112
  %v887 = vpop.permute.xlu0 %886
  %888 = vrot.lane.b32.xlu0 %v142, 80
  %v889 = vpop.permute.xlu0 %888
  %v890 = vsel %vm150, %v887, 0
  %v892 = vsel %vm150, %v889, 0
  %894 = vmatprep.subr.mxu0 0.0
  %895 = vmatpush1.xpose.msra.mxu0 %v892
  %896 = vmatprep.subr.mxu0 0.0
  %897 = vmatpush1.xpose.msra.mxu0 0.0
  %898 = vmatprep.subr.mxu0 0.0
  %899 = vmatpush1.xpose.msra.mxu0 0.0
  %900 = vmatprep.subr.mxu0 0.0
  %901 = vmatpush1.xpose.msra.mxu0 0.0
  %902 = vmatprep.subr.mxu0 0.0
  %903 = vmatpush1.xpose.msra.mxu0 0.0
  %904 = vmatprep.subr.mxu0 0.0
  %905 = vmatpush1.xpose.msra.mxu0 0.0
  %906 = vmatprep.subr.mxu0 0.0
  %907 = vmatpush1.xpose.msra.mxu0 0.0
  %908 = vmatprep.subr.mxu0 0.0
  %909 = vmatpush1.xpose.msra.mxu0 0.0
  %910 = vmatprep.subr.mxu0 0.0
  %911 = vmatpush1.xpose.msra.mxu0 0.0
  %912 = vmatprep.subr.mxu0 0.0
  %913 = vmatpush1.xpose.msra.mxu0 0.0
  %914 = vmatprep.subr.mxu0 0.0
  %915 = vmatpush1.xpose.msra.mxu0 0.0
  %916 = vmatprep.subr.mxu0 0.0
  %917 = vmatpush1.xpose.msra.mxu0 0.0
  %918 = vmatprep.subr.mxu0 0.0
  %919 = vmatpush1.xpose.msra.mxu0 0.0
  %920 = vmatprep.subr.mxu0 0.0
  %921 = vmatpush1.xpose.msra.mxu0 0.0
  %922 = vmatprep.subr.mxu0 0.0
  %923 = vmatpush1.xpose.msra.mxu0 0.0
  %924 = vmatprep.subr.mxu0 0.0
  %925 = vmatpush1.xpose.msra.mxu0 0.0
  %926 = vmatprep.subr.mxu0 0.0
  %927 = vmatpush1.xpose.msra.mxu0 0.0
  %928 = vmatprep.subr.mxu0 0.0
  %929 = vmatpush1.xpose.msra.mxu0 0.0
  %930 = vmatprep.subr.mxu0 0.0
  %931 = vmatpush1.xpose.msra.mxu0 0.0
  %932 = vmatprep.subr.mxu0 0.0
  %933 = vmatpush1.xpose.msra.mxu0 0.0
  %934 = vmatprep.subr.mxu0 0.0
  %935 = vmatpush1.xpose.msra.mxu0 0.0
  %936 = vmatprep.subr.mxu0 0.0
  %937 = vmatpush1.xpose.msra.mxu0 0.0
  %938 = vmatprep.subr.mxu0 0.0
  %939 = vmatpush1.xpose.msra.mxu0 0.0
  %940 = vmatprep.subr.mxu0 0.0
  %941 = vmatpush1.xpose.msra.mxu0 0.0
  %942 = vmatprep.subr.mxu0 0.0
  %943 = vmatpush1.xpose.msra.mxu0 0.0
  %944 = vmatprep.subr.mxu0 0.0
  %945 = vmatpush1.xpose.msra.mxu0 0.0
  %946 = vmatprep.subr.mxu0 0.0
  %947 = vmatpush1.xpose.msra.mxu0 0.0
  %948 = vmatprep.subr.mxu0 0.0
  %949 = vmatpush1.xpose.msra.mxu0 0.0
  %950 = vmatprep.subr.mxu0 0.0
  %951 = vmatpush1.xpose.msra.mxu0 0.0
  %952 = vmatprep.subr.mxu0 0.0
  %953 = vmatpush1.xpose.msra.mxu0 0.0
  %954 = vmatprep.subr.mxu0 0.0
  %955 = vmatpush1.xpose.msra.mxu0 0.0
  %956 = vmatprep.subr.mxu0 0.0
  %957 = vmatpush1.xpose.msra.mxu0 0.0
  %958 = vmatprep.mubr.f32.mxu0 0.0
  %959 = vmatmul.mubr.f32.gmra.mrb[0].mxu0 %v890
  %v960 = vpop.f32.mrb[0].mxu0
  %v961 = vadd.f32 0.0, %v960
  %v962 = vpop.f32.mrb[0].mxu0
  %963 = vdwg.mxu0
  %v964 = vsel %vm150, %v883, -inf
  %965 = vmax.xlane.f32.xlu0 %v964
  %v966 = vpop.xlane.xlu0 %965
  %v967 = vsel %vm150, %v961, -inf
  %968 = vmax.xlane.f32.xlu0 %v967
  %v969 = vpop.xlane.xlu0 %968
  %v970 = vsub.f32 %v883, %v966
  %v971 = vsub.f32 %v961, %v969
  %v972 = vmul.f32 %v970, 1.442695
  %v973 = vpow.pop %v972
  %v974 = vmul.f32 %v971, 1.442695
  %v975 = vpow.pop %v974
  %v976 = vsel %vm150, %v973, 0.0
  %977 = vadd.xlane.f32.xlu0 %v976
  %v978 = vpop.xlane.xlu0 %977
  %v979 = vsel %vm150, %v975, 0.0
  %980 = vadd.xlane.f32.xlu0 %v979
  %v981 = vpop.xlane.xlu0 %980
  %v982 = vrcp.pop %v978
  %v983 = vrcp.pop %v981
  %v984 = vmul.f32 %v973, %v982
  %v985 = vmul.f32 %v975, %v983
  %986 = vrot.lane.b32.xlu0 %v137, 48
  %v987 = vpop.permute.xlu0 %986
  %v990 = vsel %vm150, %v984, 0
  %992 = vmatprep.subr.mxu0 0.0
  %993 = vmatpush1.msra.mxu0 %v987
  %994 = vmatprep.subr.mxu0 0.0
  %995 = vmatpush1.msra.mxu0 0.0
  %996 = vmatprep.subr.mxu0 0.0
  %997 = vmatpush1.msra.mxu0 0.0
  %998 = vmatprep.subr.mxu0 0.0
  %999 = vmatpush1.msra.mxu0 0.0
  %1000 = vmatprep.subr.mxu0 0.0
  %1001 = vmatpush1.msra.mxu0 0.0
  %1002 = vmatprep.subr.mxu0 0.0
  %1003 = vmatpush1.msra.mxu0 0.0
  %1004 = vmatprep.subr.mxu0 0.0
  %1005 = vmatpush1.msra.mxu0 0.0
  %1006 = vmatprep.subr.mxu0 0.0
  %1007 = vmatpush1.msra.mxu0 0.0
  %1008 = vmatprep.subr.mxu0 0.0
  %1009 = vmatpush1.msra.mxu0 0.0
  %1010 = vmatprep.subr.mxu0 0.0
  %1011 = vmatpush1.msra.mxu0 0.0
  %1012 = vmatprep.subr.mxu0 0.0
  %1013 = vmatpush1.msra.mxu0 0.0
  %1014 = vmatprep.subr.mxu0 0.0
  %1015 = vmatpush1.msra.mxu0 0.0
  %1016 = vmatprep.subr.mxu0 0.0
  %1017 = vmatpush1.msra.mxu0 0.0
  %1018 = vmatprep.subr.mxu0 0.0
  %1019 = vmatpush1.msra.mxu0 0.0
  %1020 = vmatprep.subr.mxu0 0.0
  %1021 = vmatpush1.msra.mxu0 0.0
  %1022 = vmatprep.subr.mxu0 0.0
  %1023 = vmatpush1.msra.mxu0 0.0
  %1024 = vmatprep.subr.mxu0 0.0
  %1025 = vmatpush1.msra.mxu0 0.0
  %1026 = vmatprep.subr.mxu0 0.0
  %1027 = vmatpush1.msra.mxu0 0.0
  %1028 = vmatprep.subr.mxu0 0.0
  %1029 = vmatpush1.msra.mxu0 0.0
  %1030 = vmatprep.subr.mxu0 0.0
  %1031 = vmatpush1.msra.mxu0 0.0
  %1032 = vmatprep.subr.mxu0 0.0
  %1033 = vmatpush1.msra.mxu0 0.0
  %1034 = vmatprep.subr.mxu0 0.0
  %1035 = vmatpush1.msra.mxu0 0.0
  %1036 = vmatprep.subr.mxu0 0.0
  %1037 = vmatpush1.msra.mxu0 0.0
  %1038 = vmatprep.subr.mxu0 0.0
  %1039 = vmatpush1.msra.mxu0 0.0
  %1040 = vmatprep.subr.mxu0 0.0
  %1041 = vmatpush1.msra.mxu0 0.0
  %1042 = vmatprep.subr.mxu0 0.0
  %1043 = vmatpush1.msra.mxu0 0.0
  %1044 = vmatprep.subr.mxu0 0.0
  %1045 = vmatpush1.msra.mxu0 0.0
  %1046 = vmatprep.subr.mxu0 0.0
  %1047 = vmatpush1.msra.mxu0 0.0
  %1048 = vmatprep.subr.mxu0 0.0
  %1049 = vmatpush1.msra.mxu0 0.0
  %1050 = vmatprep.subr.mxu0 0.0
  %1051 = vmatpush1.msra.mxu0 0.0
  %1052 = vmatprep.subr.mxu0 0.0
  %1053 = vmatpush1.msra.mxu0 0.0
  %1054 = vmatprep.subr.mxu0 0.0
  %1055 = vmatpush1.msra.mxu0 0.0
  %1056 = vmatprep.mubr.f32.mxu0 0.0
  %1057 = vmatmul.mubr.f32.gmra.mrb[0].mxu0 %v990
  %v1058 = vpop.f32.mrb[0].mxu0
  %v1059 = vadd.f32 0.0, %v1058
  %v1060 = vpop.f32.mrb[0].mxu0
  %1061 = vdwg.mxu0
  %1062 = vrot.lane.b32.xlu0 %v142, 48
  %v1063 = vpop.permute.xlu0 %1062
  %v1066 = vsel %vm150, %v985, 0
  %1068 = vmatprep.subr.mxu0 0.0
  %1069 = vmatpush1.msra.mxu0 %v1063
  %1070 = vmatprep.subr.mxu0 0.0
  %1071 = vmatpush1.msra.mxu0 0.0
  %1072 = vmatprep.subr.mxu0 0.0
  %1073 = vmatpush1.msra.mxu0 0.0
  %1074 = vmatprep.subr.mxu0 0.0
  %1075 = vmatpush1.msra.mxu0 0.0
  %1076 = vmatprep.subr.mxu0 0.0
  %1077 = vmatpush1.msra.mxu0 0.0
  %1078 = vmatprep.subr.mxu0 0.0
  %1079 = vmatpush1.msra.mxu0 0.0
  %1080 = vmatprep.subr.mxu0 0.0
  %1081 = vmatpush1.msra.mxu0 0.0
  %1082 = vmatprep.subr.mxu0 0.0
  %1083 = vmatpush1.msra.mxu0 0.0
  %1084 = vmatprep.subr.mxu0 0.0
  %1085 = vmatpush1.msra.mxu0 0.0
  %1086 = vmatprep.subr.mxu0 0.0
  %1087 = vmatpush1.msra.mxu0 0.0
  %1088 = vmatprep.subr.mxu0 0.0
  %1089 = vmatpush1.msra.mxu0 0.0
  %1090 = vmatprep.subr.mxu0 0.0
  %1091 = vmatpush1.msra.mxu0 0.0
  %1092 = vmatprep.subr.mxu0 0.0
  %1093 = vmatpush1.msra.mxu0 0.0
  %1094 = vmatprep.subr.mxu0 0.0
  %1095 = vmatpush1.msra.mxu0 0.0
  %1096 = vmatprep.subr.mxu0 0.0
  %1097 = vmatpush1.msra.mxu0 0.0
  %1098 = vmatprep.subr.mxu0 0.0
  %1099 = vmatpush1.msra.mxu0 0.0
  %1100 = vmatprep.subr.mxu0 0.0
  %1101 = vmatpush1.msra.mxu0 0.0
  %1102 = vmatprep.subr.mxu0 0.0
  %1103 = vmatpush1.msra.mxu0 0.0
  %1104 = vmatprep.subr.mxu0 0.0
  %1105 = vmatpush1.msra.mxu0 0.0
  %1106 = vmatprep.subr.mxu0 0.0
  %1107 = vmatpush1.msra.mxu0 0.0
  %1108 = vmatprep.subr.mxu0 0.0
  %1109 = vmatpush1.msra.mxu0 0.0
  %1110 = vmatprep.subr.mxu0 0.0
  %1111 = vmatpush1.msra.mxu0 0.0
  %1112 = vmatprep.subr.mxu0 0.0
  %1113 = vmatpush1.msra.mxu0 0.0
  %1114 = vmatprep.subr.mxu0 0.0
  %1115 = vmatpush1.msra.mxu0 0.0
  %1116 = vmatprep.subr.mxu0 0.0
  %1117 = vmatpush1.msra.mxu0 0.0
  %1118 = vmatprep.subr.mxu0 0.0
  %1119 = vmatpush1.msra.mxu0 0.0
  %1120 = vmatprep.subr.mxu0 0.0
  %1121 = vmatpush1.msra.mxu0 0.0
  %1122 = vmatprep.subr.mxu0 0.0
  %1123 = vmatpush1.msra.mxu0 0.0
  %1124 = vmatprep.subr.mxu0 0.0
  %1125 = vmatpush1.msra.mxu0 0.0
  %1126 = vmatprep.subr.mxu0 0.0
  %1127 = vmatpush1.msra.mxu0 0.0
  %1128 = vmatprep.subr.mxu0 0.0
  %1129 = vmatpush1.msra.mxu0 0.0
  %1130 = vmatprep.subr.mxu0 0.0
  %1131 = vmatpush1.msra.mxu0 0.0
  %1132 = vmatprep.mubr.f32.mxu0 0.0
  %1133 = vmatmul.mubr.f32.gmra.mrb[0].mxu0 %v1066
  %v1134 = vpop.f32.mrb[0].mxu0
  %v1135 = vadd.f32 0.0, %v1134
  %v1136 = vpop.f32.mrb[0].mxu0
  %1137 = vdwg.mxu0
  %1138 = vrot.lane.b32.xlu0 %v145, 104
  %v1139 = vpop.permute.xlu0 %1138
  %1140 = vrot.lane.b32.xlu0 %v137, 72
  %v1141 = vpop.permute.xlu0 %1140
  %v1142 = vsel %vm150, %v1139, 0
  %v1144 = vsel %vm150, %v1141, 0
  %1146 = vmatprep.subr.mxu0 0.0
  %1147 = vmatpush1.xpose.msra.mxu0 %v1144
  %1148 = vmatprep.subr.mxu0 0.0
  %1149 = vmatpush1.xpose.msra.mxu0 0.0
  %1150 = vmatprep.subr.mxu0 0.0
  %1151 = vmatpush1.xpose.msra.mxu0 0.0
  %1152 = vmatprep.subr.mxu0 0.0
  %1153 = vmatpush1.xpose.msra.mxu0 0.0
  %1154 = vmatprep.subr.mxu0 0.0
  %1155 = vmatpush1.xpose.msra.mxu0 0.0
  %1156 = vmatprep.subr.mxu0 0.0
  %1157 = vmatpush1.xpose.msra.mxu0 0.0
  %1158 = vmatprep.subr.mxu0 0.0
  %1159 = vmatpush1.xpose.msra.mxu0 0.0
  %1160 = vmatprep.subr.mxu0 0.0
  %1161 = vmatpush1.xpose.msra.mxu0 0.0
  %1162 = vmatprep.subr.mxu0 0.0
  %1163 = vmatpush1.xpose.msra.mxu0 0.0
  %1164 = vmatprep.subr.mxu0 0.0
  %1165 = vmatpush1.xpose.msra.mxu0 0.0
  %1166 = vmatprep.subr.mxu0 0.0
  %1167 = vmatpush1.xpose.msra.mxu0 0.0
  %1168 = vmatprep.subr.mxu0 0.0
  %1169 = vmatpush1.xpose.msra.mxu0 0.0
  %1170 = vmatprep.subr.mxu0 0.0
  %1171 = vmatpush1.xpose.msra.mxu0 0.0
  %1172 = vmatprep.subr.mxu0 0.0
  %1173 = vmatpush1.xpose.msra.mxu0 0.0
  %1174 = vmatprep.subr.mxu0 0.0
  %1175 = vmatpush1.xpose.msra.mxu0 0.0
  %1176 = vmatprep.subr.mxu0 0.0
  %1177 = vmatpush1.xpose.msra.mxu0 0.0
  %1178 = vmatprep.subr.mxu0 0.0
  %1179 = vmatpush1.xpose.msra.mxu0 0.0
  %1180 = vmatprep.subr.mxu0 0.0
  %1181 = vmatpush1.xpose.msra.mxu0 0.0
  %1182 = vmatprep.subr.mxu0 0.0
  %1183 = vmatpush1.xpose.msra.mxu0 0.0
  %1184 = vmatprep.subr.mxu0 0.0
  %1185 = vmatpush1.xpose.msra.mxu0 0.0
  %1186 = vmatprep.subr.mxu0 0.0
  %1187 = vmatpush1.xpose.msra.mxu0 0.0
  %1188 = vmatprep.subr.mxu0 0.0
  %1189 = vmatpush1.xpose.msra.mxu0 0.0
  %1190 = vmatprep.subr.mxu0 0.0
  %1191 = vmatpush1.xpose.msra.mxu0 0.0
  %1192 = vmatprep.subr.mxu0 0.0
  %1193 = vmatpush1.xpose.msra.mxu0 0.0
  %1194 = vmatprep.subr.mxu0 0.0
  %1195 = vmatpush1.xpose.msra.mxu0 0.0
  %1196 = vmatprep.subr.mxu0 0.0
  %1197 = vmatpush1.xpose.msra.mxu0 0.0
  %1198 = vmatprep.subr.mxu0 0.0
  %1199 = vmatpush1.xpose.msra.mxu0 0.0
  %1200 = vmatprep.subr.mxu0 0.0
  %1201 = vmatpush1.xpose.msra.mxu0 0.0
  %1202 = vmatprep.subr.mxu0 0.0
  %1203 = vmatpush1.xpose.msra.mxu0 0.0
  %1204 = vmatprep.subr.mxu0 0.0
  %1205 = vmatpush1.xpose.msra.mxu0 0.0
  %1206 = vmatprep.subr.mxu0 0.0
  %1207 = vmatpush1.xpose.msra.mxu0 0.0
  %1208 = vmatprep.subr.mxu0 0.0
  %1209 = vmatpush1.xpose.msra.mxu0 0.0
  %1210 = vmatprep.mubr.f32.mxu0 0.0
  %1211 = vmatmul.mubr.f32.gmra.mrb[0].mxu0 %v1142
  %v1212 = vpop.f32.mrb[0].mxu0
  %v1213 = vadd.f32 0.0, %v1212
  %v1214 = vpop.f32.mrb[0].mxu0
  %1215 = vdwg.mxu0
  %1216 = vrot.lane.b32.xlu0 %v146, 104
  %v1217 = vpop.permute.xlu0 %1216
  %1218 = vrot.lane.b32.xlu0 %v142, 72
  %v1219 = vpop.permute.xlu0 %1218
  %v1220 = vsel %vm150, %v1217, 0
  %v1222 = vsel %vm150, %v1219, 0
  %1224 = vmatprep.subr.mxu0 0.0
  %1225 = vmatpush1.xpose.msra.mxu0 %v1222
  %1226 = vmatprep.subr.mxu0 0.0
  %1227 = vmatpush1.xpose.msra.mxu0 0.0
  %1228 = vmatprep.subr.mxu0 0.0
  %1229 = vmatpush1.xpose.msra.mxu0 0.0
  %1230 = vmatprep.subr.mxu0 0.0
  %1231 = vmatpush1.xpose.msra.mxu0 0.0
  %1232 = vmatprep.subr.mxu0 0.0
  %1233 = vmatpush1.xpose.msra.mxu0 0.0
  %1234 = vmatprep.subr.mxu0 0.0
  %1235 = vmatpush1.xpose.msra.mxu0 0.0
  %1236 = vmatprep.subr.mxu0 0.0
  %1237 = vmatpush1.xpose.msra.mxu0 0.0
  %1238 = vmatprep.subr.mxu0 0.0
  %1239 = vmatpush1.xpose.msra.mxu0 0.0
  %1240 = vmatprep.subr.mxu0 0.0
  %1241 = vmatpush1.xpose.msra.mxu0 0.0
  %1242 = vmatprep.subr.mxu0 0.0
  %1243 = vmatpush1.xpose.msra.mxu0 0.0
  %1244 = vmatprep.subr.mxu0 0.0
  %1245 = vmatpush1.xpose.msra.mxu0 0.0
  %1246 = vmatprep.subr.mxu0 0.0
  %1247 = vmatpush1.xpose.msra.mxu0 0.0
  %1248 = vmatprep.subr.mxu0 0.0
  %1249 = vmatpush1.xpose.msra.mxu0 0.0
  %1250 = vmatprep.subr.mxu0 0.0
  %1251 = vmatpush1.xpose.msra.mxu0 0.0
  %1252 = vmatprep.subr.mxu0 0.0
  %1253 = vmatpush1.xpose.msra.mxu0 0.0
  %1254 = vmatprep.subr.mxu0 0.0
  %1255 = vmatpush1.xpose.msra.mxu0 0.0
  %1256 = vmatprep.subr.mxu0 0.0
  %1257 = vmatpush1.xpose.msra.mxu0 0.0
  %1258 = vmatprep.subr.mxu0 0.0
  %1259 = vmatpush1.xpose.msra.mxu0 0.0
  %1260 = vmatprep.subr.mxu0 0.0
  %1261 = vmatpush1.xpose.msra.mxu0 0.0
  %1262 = vmatprep.subr.mxu0 0.0
  %1263 = vmatpush1.xpose.msra.mxu0 0.0
  %1264 = vmatprep.subr.mxu0 0.0
  %1265 = vmatpush1.xpose.msra.mxu0 0.0
  %1266 = vmatprep.subr.mxu0 0.0
  %1267 = vmatpush1.xpose.msra.mxu0 0.0
  %1268 = vmatprep.subr.mxu0 0.0
  %1269 = vmatpush1.xpose.msra.mxu0 0.0
  %1270 = vmatprep.subr.mxu0 0.0
  %1271 = vmatpush1.xpose.msra.mxu0 0.0
  %1272 = vmatprep.subr.mxu0 0.0
  %1273 = vmatpush1.xpose.msra.mxu0 0.0
  %1274 = vmatprep.subr.mxu0 0.0
  %1275 = vmatpush1.xpose.msra.mxu0 0.0
  %1276 = vmatprep.subr.mxu0 0.0
  %1277 = vmatpush1.xpose.msra.mxu0 0.0
  %1278 = vmatprep.subr.mxu0 0.0
  %1279 = vmatpush1.xpose.msra.mxu0 0.0
  %1280 = vmatprep.subr.mxu0 0.0
  %1281 = vmatpush1.xpose.msra.mxu0 0.0
  %1282 = vmatprep.subr.mxu0 0.0
  %1283 = vmatpush1.xpose.msra.mxu0 0.0
  %1284 = vmatprep.subr.mxu0 0.0
  %1285 = vmatpush1.xpose.msra.mxu0 0.0
  %1286 = vmatprep.subr.mxu0 0.0
  %1287 = vmatpush1.xpose.msra.mxu0 0.0
  %1288 = vmatprep.mubr.f32.mxu0 0.0
  %1289 = vmatmul.mubr.f32.gmra.mrb[0].mxu0 %v1220
  %v1290 = vpop.f32.mrb[0].mxu0
  %v1291 = vadd.f32 0.0, %v1290
  %v1292 = vpop.f32.mrb[0].mxu0
  %1293 = vdwg.mxu0
  %v1294 = vsel %vm150, %v1213, -inf
  %1295 = vmax.xlane.f32.xlu0 %v1294
  %v1296 = vpop.xlane.xlu0 %1295
  %v1297 = vsel %vm150, %v1291, -inf
  %1298 = vmax.xlane.f32.xlu0 %v1297
  %v1299 = vpop.xlane.xlu0 %1298
  %v1300 = vsub.f32 %v1213, %v1296
  %v1301 = vsub.f32 %v1291, %v1299
  %v1302 = vmul.f32 %v1300, 1.442695
  %v1303 = vpow.pop %v1302
  %v1304 = vmul.f32 %v1301, 1.442695
  %v1305 = vpow.pop %v1304
  %v1306 = vsel %vm150, %v1303, 0.0
  %1307 = vadd.xlane.f32.xlu0 %v1306
  %v1308 = vpop.xlane.xlu0 %1307
  %v1309 = vsel %vm150, %v1305, 0.0
  %1310 = vadd.xlane.f32.xlu0 %v1309
  %v1311 = vpop.xlane.xlu0 %1310
  %v1312 = vrcp.pop %v1308
  %v1313 = vrcp.pop %v1311
  %v1314 = vmul.f32 %v1303, %v1312
  %v1315 = vmul.f32 %v1305, %v1313
  %1316 = vrot.lane.b32.xlu0 %v137, 40
  %v1317 = vpop.permute.xlu0 %1316
  %v1320 = vsel %vm150, %v1314, 0
  %1322 = vmatprep.subr.mxu0 0.0
  %1323 = vmatpush1.msra.mxu0 %v1317
  %1324 = vmatprep.subr.mxu0 0.0
  %1325 = vmatpush1.msra.mxu0 0.0
  %1326 = vmatprep.subr.mxu0 0.0
  %1327 = vmatpush1.msra.mxu0 0.0
  %1328 = vmatprep.subr.mxu0 0.0
  %1329 = vmatpush1.msra.mxu0 0.0
  %1330 = vmatprep.subr.mxu0 0.0
  %1331 = vmatpush1.msra.mxu0 0.0
  %1332 = vmatprep.subr.mxu0 0.0
  %1333 = vmatpush1.msra.mxu0 0.0
  %1334 = vmatprep.subr.mxu0 0.0
  %1335 = vmatpush1.msra.mxu0 0.0
  %1336 = vmatprep.subr.mxu0 0.0
  %1337 = vmatpush1.msra.mxu0 0.0
  %1338 = vmatprep.subr.mxu0 0.0
  %1339 = vmatpush1.msra.mxu0 0.0
  %1340 = vmatprep.subr.mxu0 0.0
  %1341 = vmatpush1.msra.mxu0 0.0
  %1342 = vmatprep.subr.mxu0 0.0
  %1343 = vmatpush1.msra.mxu0 0.0
  %1344 = vmatprep.subr.mxu0 0.0
  %1345 = vmatpush1.msra.mxu0 0.0
  %1346 = vmatprep.subr.mxu0 0.0
  %1347 = vmatpush1.msra.mxu0 0.0
  %1348 = vmatprep.subr.mxu0 0.0
  %1349 = vmatpush1.msra.mxu0 0.0
  %1350 = vmatprep.subr.mxu0 0.0
  %1351 = vmatpush1.msra.mxu0 0.0
  %1352 = vmatprep.subr.mxu0 0.0
  %1353 = vmatpush1.msra.mxu0 0.0
  %1354 = vmatprep.subr.mxu0 0.0
  %1355 = vmatpush1.msra.mxu0 0.0
  %1356 = vmatprep.subr.mxu0 0.0
  %1357 = vmatpush1.msra.mxu0 0.0
  %1358 = vmatprep.subr.mxu0 0.0
  %1359 = vmatpush1.msra.mxu0 0.0
  %1360 = vmatprep.subr.mxu0 0.0
  %1361 = vmatpush1.msra.mxu0 0.0
  %1362 = vmatprep.subr.mxu0 0.0
  %1363 = vmatpush1.msra.mxu0 0.0
  %1364 = vmatprep.subr.mxu0 0.0
  %1365 = vmatpush1.msra.mxu0 0.0
  %1366 = vmatprep.subr.mxu0 0.0
  %1367 = vmatpush1.msra.mxu0 0.0
  %1368 = vmatprep.subr.mxu0 0.0
  %1369 = vmatpush1.msra.mxu0 0.0
  %1370 = vmatprep.subr.mxu0 0.0
  %1371 = vmatpush1.msra.mxu0 0.0
  %1372 = vmatprep.subr.mxu0 0.0
  %1373 = vmatpush1.msra.mxu0 0.0
  %1374 = vmatprep.subr.mxu0 0.0
  %1375 = vmatpush1.msra.mxu0 0.0
  %1376 = vmatprep.subr.mxu0 0.0
  %1377 = vmatpush1.msra.mxu0 0.0
  %1378 = vmatprep.subr.mxu0 0.0
  %1379 = vmatpush1.msra.mxu0 0.0
  %1380 = vmatprep.subr.mxu0 0.0
  %1381 = vmatpush1.msra.mxu0 0.0
  %1382 = vmatprep.subr.mxu0 0.0
  %1383 = vmatpush1.msra.mxu0 0.0
  %1384 = vmatprep.subr.mxu0 0.0
  %1385 = vmatpush1.msra.mxu0 0.0
  %1386 = vmatprep.mubr.f32.mxu0 0.0
  %1387 = vmatmul.mubr.f32.gmra.mrb[0].mxu0 %v1320
  %v1388 = vpop.f32.mrb[0].mxu0
  %v1389 = vadd.f32 0.0, %v1388
  %v1390 = vpop.f32.mrb[0].mxu0
  %1391 = vdwg.mxu0
  %1392 = vrot.lane.b32.xlu0 %v142, 40
  %v1393 = vpop.permute.xlu0 %1392
  %v1396 = vsel %vm150, %v1315, 0
  %1398 = vmatprep.subr.mxu0 0.0
  %1399 = vmatpush1.msra.mxu0 %v1393
  %1400 = vmatprep.subr.mxu0 0.0
  %1401 = vmatpush1.msra.mxu0 0.0
  %1402 = vmatprep.subr.mxu0 0.0
  %1403 = vmatpush1.msra.mxu0 0.0
  %1404 = vmatprep.subr.mxu0 0.0
  %1405 = vmatpush1.msra.mxu0 0.0
  %1406 = vmatprep.subr.mxu0 0.0
  %1407 = vmatpush1.msra.mxu0 0.0
  %1408 = vmatprep.subr.mxu0 0.0
  %1409 = vmatpush1.msra.mxu0 0.0
  %1410 = vmatprep.subr.mxu0 0.0
  %1411 = vmatpush1.msra.mxu0 0.0
  %1412 = vmatprep.subr.mxu0 0.0
  %1413 = vmatpush1.msra.mxu0 0.0
  %1414 = vmatprep.subr.mxu0 0.0
  %1415 = vmatpush1.msra.mxu0 0.0
  %1416 = vmatprep.subr.mxu0 0.0
  %1417 = vmatpush1.msra.mxu0 0.0
  %1418 = vmatprep.subr.mxu0 0.0
  %1419 = vmatpush1.msra.mxu0 0.0
  %1420 = vmatprep.subr.mxu0 0.0
  %1421 = vmatpush1.msra.mxu0 0.0
  %1422 = vmatprep.subr.mxu0 0.0
  %1423 = vmatpush1.msra.mxu0 0.0
  %1424 = vmatprep.subr.mxu0 0.0
  %1425 = vmatpush1.msra.mxu0 0.0
  %1426 = vmatprep.subr.mxu0 0.0
  %1427 = vmatpush1.msra.mxu0 0.0
  %1428 = vmatprep.subr.mxu0 0.0
  %1429 = vmatpush1.msra.mxu0 0.0
  %1430 = vmatprep.subr.mxu0 0.0
  %1431 = vmatpush1.msra.mxu0 0.0
  %1432 = vmatprep.subr.mxu0 0.0
  %1433 = vmatpush1.msra.mxu0 0.0
  %1434 = vmatprep.subr.mxu0 0.0
  %1435 = vmatpush1.msra.mxu0 0.0
  %1436 = vmatprep.subr.mxu0 0.0
  %1437 = vmatpush1.msra.mxu0 0.0
  %1438 = vmatprep.subr.mxu0 0.0
  %1439 = vmatpush1.msra.mxu0 0.0
  %1440 = vmatprep.subr.mxu0 0.0
  %1441 = vmatpush1.msra.mxu0 0.0
  %1442 = vmatprep.subr.mxu0 0.0
  %1443 = vmatpush1.msra.mxu0 0.0
  %1444 = vmatprep.subr.mxu0 0.0
  %1445 = vmatpush1.msra.mxu0 0.0
  %1446 = vmatprep.subr.mxu0 0.0
  %1447 = vmatpush1.msra.mxu0 0.0
  %1448 = vmatprep.subr.mxu0 0.0
  %1449 = vmatpush1.msra.mxu0 0.0
  %1450 = vmatprep.subr.mxu0 0.0
  %1451 = vmatpush1.msra.mxu0 0.0
  %1452 = vmatprep.subr.mxu0 0.0
  %1453 = vmatpush1.msra.mxu0 0.0
  %1454 = vmatprep.subr.mxu0 0.0
  %1455 = vmatpush1.msra.mxu0 0.0
  %1456 = vmatprep.subr.mxu0 0.0
  %1457 = vmatpush1.msra.mxu0 0.0
  %1458 = vmatprep.subr.mxu0 0.0
  %1459 = vmatpush1.msra.mxu0 0.0
  %1460 = vmatprep.subr.mxu0 0.0
  %1461 = vmatpush1.msra.mxu0 0.0
  %1462 = vmatprep.mubr.f32.mxu0 0.0
  %1463 = vmatmul.mubr.f32.gmra.mrb[0].mxu0 %v1396
  %v1464 = vpop.f32.mrb[0].mxu0
  %v1465 = vadd.f32 0.0, %v1464
  %v1466 = vpop.f32.mrb[0].mxu0
  %1467 = vdwg.mxu0
  %1470 = vrot.lane.b32.xlu0 %v729, 8
  %v1471 = vpop.permute.xlu0 %1470
  %1472 = vrot.lane.b32.xlu0 %v805, 8
  %v1473 = vpop.permute.xlu0 %1472
  %1478 = vrot.lane.b32.xlu0 %v1059, 16
  %v1479 = vpop.permute.xlu0 %1478
  %1480 = vrot.lane.b32.xlu0 %v1135, 16
  %v1481 = vpop.permute.xlu0 %1480
  %1486 = vrot.lane.b32.xlu0 %v1389, 24
  %v1487 = vpop.permute.xlu0 %1486
  %1488 = vrot.lane.b32.xlu0 %v1465, 24
  %v1489 = vpop.permute.xlu0 %1488
  %v1492 = vsel %vm150, %v399, %v1471
  %v1493 = vsel %vm150, %v475, %v1473
  %vm1494 = vcmask 130048
  %v1495 = vsel %vm1494, %v1492, %v1479
  %v1496 = vsel %vm1494, %v1493, %v1481
  %vm1497 = vcmask 195584
  %v1498 = vsel %vm1497, %v1495, %v1487
  %v1499 = vsel %vm1497, %v1496, %v1489
  %v1500 = vld [vmem:[%s3] sm:$0xff]
  %v1501 = vld [vmem:[%s3 + $0x8] sm:$0xff]
  %v1502 = vld [vmem:[%s3 + $0x10] sm:$0xff]
  %v1503 = vld [vmem:[%s3 + $0x18] sm:$0xff]
  %v1504 = vld [vmem:[%s4] sm:$0x1]
  %v1506 = vlaneseq
  %v1507 = vshrl.u32 %v1506, 7
  %v1508 = vsub.s32 0, %v1507
  %v1509 = vrot.slane %v1504, %v1508
  %v1512 = vsel %vm63, %v1498, 0
  %v1515 = vsel %vm63, %v1499, 0
  %1517 = vmatprep.subr.mxu0 0.0
  %1518 = vmatpush1.msra.mxu0 %v1500
  %1519 = vmatprep.subr.mxu0 0.0
  %1520 = vmatpush1.msra.mxu0 %v1501
  %1521 = vmatprep.subr.mxu0 0.0
  %1522 = vmatpush1.msra.mxu0 %v1502
  %1523 = vmatprep.subr.mxu0 0.0
  %1524 = vmatpush1.msra.mxu0 %v1503
  %1525 = vmatprep.subr.mxu0 0.0
  %1526 = vmatpush1.msra.mxu0 0.0
  %1527 = vmatprep.subr.mxu0 0.0
  %1528 = vmatpush1.msra.mxu0 0.0
  %1529 = vmatprep.subr.mxu0 0.0
  %1530 = vmatpush1.msra.mxu0 0.0
  %1531 = vmatprep.subr.mxu0 0.0
  %1532 = vmatpush1.msra.mxu0 0.0
  %1533 = vmatprep.subr.mxu0 0.0
  %1534 = vmatpush1.msra.mxu0 0.0
  %1535 = vmatprep.subr.mxu0 0.0
  %1536 = vmatpush1.msra.mxu0 0.0
  %1537 = vmatprep.subr.mxu0 0.0
  %1538 = vmatpush1.msra.mxu0 0.0
  %1539 = vmatprep.subr.mxu0 0.0
  %1540 = vmatpush1.msra.mxu0 0.0
  %1541 = vmatprep.subr.mxu0 0.0
  %1542 = vmatpush1.msra.mxu0 0.0
  %1543 = vmatprep.subr.mxu0 0.0
  %1544 = vmatpush1.msra.mxu0 0.0
  %1545 = vmatprep.subr.mxu0 0.0
  %1546 = vmatpush1.msra.mxu0 0.0
  %1547 = vmatprep.subr.mxu0 0.0
  %1548 = vmatpush1.msra.mxu0 0.0
  %1549 = vmatprep.subr.mxu0 0.0
  %1550 = vmatpush1.msra.mxu0 0.0
  %1551 = vmatprep.subr.mxu0 0.0
  %1552 = vmatpush1.msra.mxu0 0.0
  %1553 = vmatprep.subr.mxu0 0.0
  %1554 = vmatpush1.msra.mxu0 0.0
  %1555 = vmatprep.subr.mxu0 0.0
  %1556 = vmatpush1.msra.mxu0 0.0
  %1557 = vmatprep.subr.mxu0 0.0
  %1558 = vmatpush1.msra.mxu0 0.0
  %1559 = vmatprep.subr.mxu0 0.0
  %1560 = vmatpush1.msra.mxu0 0.0
  %1561 = vmatprep.subr.mxu0 0.0
  %1562 = vmatpush1.msra.mxu0 0.0
  %1563 = vmatprep.subr.mxu0 0.0
  %1564 = vmatpush1.msra.mxu0 0.0
  %1565 = vmatprep.subr.mxu0 0.0
  %1566 = vmatpush1.msra.mxu0 0.0
  %1567 = vmatprep.subr.mxu0 0.0
  %1568 = vmatpush1.msra.mxu0 0.0
  %1569 = vmatprep.subr.mxu0 0.0
  %1570 = vmatpush1.msra.mxu0 0.0
  %1571 = vmatprep.subr.mxu0 0.0
  %1572 = vmatpush1.msra.mxu0 0.0
  %1573 = vmatprep.subr.mxu0 0.0
  %1574 = vmatpush1.msra.mxu0 0.0
  %1575 = vmatprep.subr.mxu0 0.0
  %1576 = vmatpush1.msra.mxu0 0.0
  %1577 = vmatprep.subr.mxu0 0.0
  %1578 = vmatpush1.msra.mxu0 0.0
  %1579 = vmatprep.subr.mxu0 0.0
  %1580 = vmatpush1.msra.mxu0 0.0
  %1581 = vmatprep.mubr.f32.mxu0 0.0
  %1582 = vmatmul.mubr.f32.gmra.mrb[0].mxu0 %v1512
  %v1583 = vpop.f32.mrb[0].mxu0
  %v1584 = vadd.f32 %v1509, %v1583
  %v1585 = vpop.f32.mrb[0].mxu0
  %1586 = vmatprep.mubr.f32.mxu0 0.0
  %1587 = vmatmul.mubr.f32.gmra.mrb[0].mxu0 %v1515
  %v1588 = vpop.f32.mrb[0].mxu0
  %v1589 = vadd.f32 %v1509, %v1588
  %v1590 = vpop.f32.mrb[0].mxu0
  %1591 = vdwg.mxu0
  %v1592 = vadd.f32 %v50, %v1584
  %v1593 = vadd.f32 %v51, %v1589
  %v1594 = vld [vmem:[%s5] sm:$0x1]
  %v1595 = vld [vmem:[%s6] sm:$0x1]
  %v1596 = vsel %vm63, %v1592, 0.0
  %1597 = vadd.xlane.f32.xlu0 %v1596
  %v1598 = vpop.xlane.xlu0 %1597
  %v1599 = vsel %vm63, %v1593, 0.0
  %1600 = vadd.xlane.f32.xlu0 %v1599
  %v1601 = vpop.xlane.xlu0 %1600
  %v1602 = vrcp.pop 32.0
  %v1603 = vmul.f32 %v1598, %v1602
  %v1604 = vmul.f32 %v1601, %v1602
  %v1605 = vsub.f32 %v1592, %v1603
  %v1606 = vsub.f32 %v1593, %v1604
  %v1607 = vmul.f32 %v1605, %v1605
  %v1608 = vmul.f32 %v1606, %v1606
  %v1609 = vsel %vm63, %v1607, 0.0
  %1610 = vadd.xlane.f32.xlu0 %v1609
  %v1611 = vpop.xlane.xlu0 %1610
  %v1612 = vsel %vm63, %v1608, 0.0
  %1613 = vadd.xlane.f32.xlu0 %v1612
  %v1614 = vpop.xlane.xlu0 %1613
  %v1615 = vmul.f32 %v1611, %v1602
  %v1616 = vmul.f32 %v1614, %v1602
  %v1617 = vadd.f32 %v1615, 1e-05
  %v1618 = vadd.f32 %v1616, 1e-05
  %v1619 = vrsqrt.pop %v1617
  %v1620 = vrsqrt.pop %v1618
  %v1621 = vmul.f32 %v1605, %v1619
  %v1622 = vmul.f32 %v1606, %v1620
  %v1624 = vlaneseq
  %v1625 = vshrl.u32 %v1624, 7
  %v1626 = vsub.s32 0, %v1625
  %v1627 = vrot.slane %v1594, %v1626
  %v1629 = vmul.f32 %v1621, %v1627
  %v1630 = vmul.f32 %v1622, %v1627
  %v1632 = vlaneseq
  %v1633 = vshrl.u32 %v1632, 7
  %v1634 = vsub.s32 0, %v1633
  %v1635 = vrot.slane %v1595, %v1634
  %v1637 = vadd.f32 %v1629, %v1635
  %v1638 = vadd.f32 %v1630, %v1635
  %v1639 = vld [vmem:[%s7] sm:$0xff]
  %v1640 = vld [vmem:[%s7 + $0x8] sm:$0xff]
  %v1641 = vld [vmem:[%s7 + $0x10] sm:$0xff]
  %v1642 = vld [vmem:[%s7 + $0x18] sm:$0xff]
  %v1643 = vld [vmem:[%s8] sm:$0x1]
  %v1645 = vlaneseq
  %v1646 = vshrl.u32 %v1645, 7
  %v1647 = vsub.s32 0, %v1646
  %v1648 = vrot.slane %v1643, %v1647
  %v1651 = vsel %vm63, %v1637, 0
  %v1654 = vsel %vm63, %v1638, 0
  %1656 = vmatprep.subr.mxu0 0.0
  %1657 = vmatpush1.msra.mxu0 %v1639
  %1658 = vmatprep.subr.mxu0 0.0
  %1659 = vmatpush1.msra.mxu0 %v1640
  %1660 = vmatprep.subr.mxu0 0.0
  %1661 = vmatpush1.msra.mxu0 %v1641
  %1662 = vmatprep.subr.mxu0 0.0
  %1663 = vmatpush1.msra.mxu0 %v1642
  %1664 = vmatprep.subr.mxu0 0.0
  %1665 = vmatpush1.msra.mxu0 0.0
  %1666 = vmatprep.subr.mxu0 0.0
  %1667 = vmatpush1.msra.mxu0 0.0
  %1668 = vmatprep.subr.mxu0 0.0
  %1669 = vmatpush1.msra.mxu0 0.0
  %1670 = vmatprep.subr.mxu0 0.0
  %1671 = vmatpush1.msra.mxu0 0.0
  %1672 = vmatprep.subr.mxu0 0.0
  %1673 = vmatpush1.msra.mxu0 0.0
  %1674 = vmatprep.subr.mxu0 0.0
  %1675 = vmatpush1.msra.mxu0 0.0
  %1676 = vmatprep.subr.mxu0 0.0
  %1677 = vmatpush1.msra.mxu0 0.0
  %1678 = vmatprep.subr.mxu0 0.0
  %1679 = vmatpush1.msra.mxu0 0.0
  %1680 = vmatprep.subr.mxu0 0.0
  %1681 = vmatpush1.msra.mxu0 0.0
  %1682 = vmatprep.subr.mxu0 0.0
  %1683 = vmatpush1.msra.mxu0 0.0
  %1684 = vmatprep.subr.mxu0 0.0
  %1685 = vmatpush1.msra.mxu0 0.0
  %1686 = vmatprep.subr.mxu0 0.0
  %1687 = vmatpush1.msra.mxu0 0.0
  %1688 = vmatprep.subr.mxu0 0.0
  %1689 = vmatpush1.msra.mxu0 0.0
  %1690 = vmatprep.subr.mxu0 0.0
  %1691 = vmatpush1.msra.mxu0 0.0
  %1692 = vmatprep.subr.mxu0 0.0
  %1693 = vmatpush1.msra.mxu0 0.0
  %1694 = vmatprep.subr.mxu0 0.0
  %1695 = vmatpush1.msra.mxu0 0.0
  %1696 = vmatprep.subr.mxu0 0.0
  %1697 = vmatpush1.msra.mxu0 0.0
  %1698 = vmatprep.subr.mxu0 0.0
  %1699 = vmatpush1.msra.mxu0 0.0
  %1700 = vmatprep.subr.mxu0 0.0
  %1701 = vmatpush1.msra.mxu0 0.0
  %1702 = vmatprep.subr.mxu0 0.0
  %1703 = vmatpush1.msra.mxu0 0.0
  %1704 = vmatprep.subr.mxu0 0.0
  %1705 = vmatpush1.msra.mxu0 0.0
  %1706 = vmatprep.subr.mxu0 0.0
  %1707 = vmatpush1.msra.mxu0 0.0
  %1708 = vmatprep.subr.mxu0 0.0
  %1709 = vmatpush1.msra.mxu0 0.0
  %1710 = vmatprep.subr.mxu0 0.0
  %1711 = vmatpush1.msra.mxu0 0.0
  %1712 = vmatprep.subr.mxu0 0.0
  %1713 = vmatpush1.msra.mxu0 0.0
  %1714 = vmatprep.subr.mxu0 0.0
  %1715 = vmatpush1.msra.mxu0 0.0
  %1716 = vmatprep.subr.mxu0 0.0
  %1717 = vmatpush1.msra.mxu0 0.0
  %1718 = vmatprep.subr.mxu0 0.0
  %1719 = vmatpush1.msra.mxu0 0.0
  %1720 = vmatprep.mubr.f32.mxu0 0.0
  %1721 = vmatmul.mubr.f32.gmra.mrb[0].mxu0 %v1651
  %v1722 = vpop.f32.mrb[0].mxu0
  %v1723 = vadd.f32 %v1648, %v1722
  %v1724 = vpop.f32.mrb[0].mxu0
  %1725 = vmatprep.mubr.f32.mxu0 0.0
  %1726 = vmatmul.mubr.f32.gmra.mrb[0].mxu0 %v1654
  %v1727 = vpop.f32.mrb[0].mxu0
  %v1728 = vadd.f32 %v1648, %v1727
  %v1729 = vpop.f32.mrb[0].mxu0
  %1730 = vdwg.mxu0
  %v1731 = vmul.f32 %v1723, 0.5
  %v1732 = vmul.f32 %v1728, 0.5
  %v1733 = vmul.f32 %v1723, 0.70710677
  %v1734 = vmul.f32 %v1728, 0.70710677
  %vm1735 = vcmp.ge.f32.partialorder %v1733, 0.0
  %vm1736 = vcmp.ge.f32.partialorder %v1734, 0.0
  %v1737 = vsel %vm1735, 1.0, -1.0
  %v1738 = vsel %vm1736, 1.0, -1.0
  %v1739 = vand.u32 2147483647, %v1733
  %v1740 = vand.u32 2147483647, %v1734
  %v1741 = vmul.f32 %v1739, 0.3275911
  %v1742 = vmul.f32 %v1740, 0.3275911
  %v1743 = vadd.f32 %v1741, 1.0
  %v1744 = vadd.f32 %v1742, 1.0
  %v1745 = vrcp.pop %v1743
  %v1746 = vmul.f32 1.0, %v1745
  %v1747 = vrcp.pop %v1744
  %v1748 = vmul.f32 1.0, %v1747
  %v1749 = vmul.f32 %v1746, 1.0614054
  %v1750 = vmul.f32 %v1748, 1.0614054
  %v1751 = vadd.f32 %v1749, -1.4531521
  %v1752 = vadd.f32 %v1750, -1.4531521
  %v1753 = vmul.f32 %v1751, %v1746
  %v1754 = vmul.f32 %v1752, %v1748
  %v1755 = vadd.f32 %v1753, 1.4214138
  %v1756 = vadd.f32 %v1754, 1.4214138
  %v1757 = vmul.f32 %v1755, %v1746
  %v1758 = vmul.f32 %v1756, %v1748
  %v1759 = vadd.f32 %v1757, -0.28449672
  %v1760 = vadd.f32 %v1758, -0.28449672
  %v1761 = vmul.f32 %v1759, %v1746
  %v1762 = vmul.f32 %v1760, %v1748
  %v1763 = vadd.f32 %v1761, 0.2548296
  %v1764 = vadd.f32 %v1762, 0.2548296
  %v1765 = vmul.f32 %v1763, %v1746
  %v1766 = vmul.f32 %v1764, %v1748
  %v1767 = vsub.f32 0.0, %v1739
  %v1768 = vsub.f32 0.0, %v1740
  %v1769 = vmul.f32 %v1767, %v1739
  %v1770 = vmul.f32 %v1768, %v1740
  %v1771 = vmul.f32 %v1769, 1.442695
  %v1772 = vpow.pop %v1771
  %v1773 = vmul.f32 %v1770, 1.442695
  %v1774 = vpow.pop %v1773
  %v1775 = vmul.f32 %v1765, %v1772
  %v1776 = vmul.f32 %v1766, %v1774
  %v1777 = vsub.f32 1.0, %v1775
  %v1778 = vsub.f32 1.0, %v1776
  %v1779 = vmul.f32 %v1737, %v1777
  %v1780 = vmul.f32 %v1738, %v1778
  %v1781 = vadd.f32 %v1779, 1.0
  %v1782 = vadd.f32 %v1780, 1.0
  %v1783 = vmul.f32 %v1731, %v1781
  %v1784 = vmul.f32 %v1732, %v1782
  %v1785 = vld [vmem:[%s9] sm:$0xff]
  %v1786 = vld [vmem:[%s9 + $0x8] sm:$0xff]
  %v1787 = vld [vmem:[%s9 + $0x10] sm:$0xff]
  %v1788 = vld [vmem:[%s9 + $0x18] sm:$0xff]
  %v1789 = vld [vmem:[%s9 + $0x20] sm:$0xff]
  %v1790 = vld [vmem:[%s9 + $0x28] sm:$0xff]
  %v1791 = vld [vmem:[%s9 + $0x30] sm:$0xff]
  %v1792 = vld [vmem:[%s9 + $0x38] sm:$0xff]
  %v1793 = vld [vmem:[%s9 + $0x40] sm:$0xff]
  %v1794 = vld [vmem:[%s9 + $0x48] sm:$0xff]
  %v1795 = vld [vmem:[%s9 + $0x50] sm:$0xff]
  %v1796 = vld [vmem:[%s9 + $0x58] sm:$0xff]
  %v1797 = vld [vmem:[%s9 + $0x60] sm:$0xff]
  %v1798 = vld [vmem:[%s9 + $0x68] sm:$0xff]
  %v1799 = vld [vmem:[%s9 + $0x70] sm:$0xff]
  %v1800 = vld [vmem:[%s9 + $0x78] sm:$0xff]
  %v1801 = vld [vmem:[%s10] sm:$0x1]
  %v1803 = vlaneseq
  %v1804 = vshrl.u32 %v1803, 7
  %v1805 = vsub.s32 0, %v1804
  %v1806 = vrot.slane %v1801, %v1805
  %1808 = vmatprep.subr.mxu0 0.0
  %1809 = vmatpush1.msra.mxu0 %v1785
  %1810 = vmatprep.subr.mxu0 0.0
  %1811 = vmatpush1.msra.mxu0 %v1786
  %1812 = vmatprep.subr.mxu0 0.0
  %1813 = vmatpush1.msra.mxu0 %v1787
  %1814 = vmatprep.subr.mxu0 0.0
  %1815 = vmatpush1.msra.mxu0 %v1788
  %1816 = vmatprep.subr.mxu0 0.0
  %1817 = vmatpush1.msra.mxu0 %v1789
  %1818 = vmatprep.subr.mxu0 0.0
  %1819 = vmatpush1.msra.mxu0 %v1790
  %1820 = vmatprep.subr.mxu0 0.0
  %1821 = vmatpush1.msra.mxu0 %v1791
  %1822 = vmatprep.subr.mxu0 0.0
  %1823 = vmatpush1.msra.mxu0 %v1792
  %1824 = vmatprep.subr.mxu0 0.0
  %1825 = vmatpush1.msra.mxu0 %v1793
  %1826 = vmatprep.subr.mxu0 0.0
  %1827 = vmatpush1.msra.mxu0 %v1794
  %1828 = vmatprep.subr.mxu0 0.0
  %1829 = vmatpush1.msra.mxu0 %v1795
  %1830 = vmatprep.subr.mxu0 0.0
  %1831 = vmatpush1.msra.mxu0 %v1796
  %1832 = vmatprep.subr.mxu0 0.0
  %1833 = vmatpush1.msra.mxu0 %v1797
  %1834 = vmatprep.subr.mxu0 0.0
  %1835 = vmatpush1.msra.mxu0 %v1798
  %1836 = vmatprep.subr.mxu0 0.0
  %1837 = vmatpush1.msra.mxu0 %v1799
  %1838 = vmatprep.subr.mxu0 0.0
  %1839 = vmatpush1.msra.mxu0 %v1800
  %1840 = vmatprep.subr.mxu0 0.0
  %1841 = vmatpush1.msra.mxu0 0.0
  %1842 = vmatprep.subr.mxu0 0.0
  %1843 = vmatpush1.msra.mxu0 0.0
  %1844 = vmatprep.subr.mxu0 0.0
  %1845 = vmatpush1.msra.mxu0 0.0
  %1846 = vmatprep.subr.mxu0 0.0
  %1847 = vmatpush1.msra.mxu0 0.0
  %1848 = vmatprep.subr.mxu0 0.0
  %1849 = vmatpush1.msra.mxu0 0.0
  %1850 = vmatprep.subr.mxu0 0.0
  %1851 = vmatpush1.msra.mxu0 0.0
  %1852 = vmatprep.subr.mxu0 0.0
  %1853 = vmatpush1.msra.mxu0 0.0
  %1854 = vmatprep.subr.mxu0 0.0
  %1855 = vmatpush1.msra.mxu0 0.0
  %1856 = vmatprep.subr.mxu0 0.0
  %1857 = vmatpush1.msra.mxu0 0.0
  %1858 = vmatprep.subr.mxu0 0.0
  %1859 = vmatpush1.msra.mxu0 0.0
  %1860 = vmatprep.subr.mxu0 0.0
  %1861 = vmatpush1.msra.mxu0 0.0
  %1862 = vmatprep.subr.mxu0 0.0
  %1863 = vmatpush1.msra.mxu0 0.0
  %1864 = vmatprep.subr.mxu0 0.0
  %1865 = vmatpush1.msra.mxu0 0.0
  %1866 = vmatprep.subr.mxu0 0.0
  %1867 = vmatpush1.msra.mxu0 0.0
  %1868 = vmatprep.subr.mxu0 0.0
  %1869 = vmatpush1.msra.mxu0 0.0
  %1870 = vmatprep.subr.mxu0 0.0
  %1871 = vmatpush1.msra.mxu0 0.0
  %1872 = vmatprep.mubr.f32.mxu0 0.0
  %1873 = vmatmul.mubr.f32.gmra.mrb[0].mxu0 %v1783
  %v1874 = vpop.f32.mrb[0].mxu0
  %v1875 = vadd.f32 %v1806, %v1874
  %v1876 = vpop.f32.mrb[0].mxu0
  %1877 = vmatprep.mubr.f32.mxu0 0.0
  %1878 = vmatmul.mubr.f32.gmra.mrb[0].mxu0 %v1784
  %v1879 = vpop.f32.mrb[0].mxu0
  %v1880 = vadd.f32 %v1806, %v1879
  %v1881 = vpop.f32.mrb[0].mxu0
  %1882 = vdwg.mxu0
  %v1883 = vadd.f32 %v1637, %v1875
  %v1884 = vadd.f32 %v1638, %v1880
  %v1885 = vld [vmem:[%s11] sm:$0x1]
  %v1886 = vld [vmem:[%s12] sm:$0x1]
  %v1887 = vsel %vm63, %v1883, 0.0
  %1888 = vadd.xlane.f32.xlu0 %v1887
  %v1889 = vpop.xlane.xlu0 %1888
  %v1890 = vsel %vm63, %v1884, 0.0
  %1891 = vadd.xlane.f32.xlu0 %v1890
  %v1892 = vpop.xlane.xlu0 %1891
  %v1893 = vmul.f32 %v1889, %v1602
  %v1894 = vmul.f32 %v1892, %v1602
  %v1895 = vsub.f32 %v1883, %v1893
  %v1896 = vsub.f32 %v1884, %v1894
  %v1897 = vmul.f32 %v1895, %v1895
  %v1898 = vmul.f32 %v1896, %v1896
  %v1899 = vsel %vm63, %v1897, 0.0
  %1900 = vadd.xlane.f32.xlu0 %v1899
  %v1901 = vpop.xlane.xlu0 %1900
  %v1902 = vsel %vm63, %v1898, 0.0
  %1903 = vadd.xlane.f32.xlu0 %v1902
  %v1904 = vpop.xlane.xlu0 %1903
  %v1905 = vmul.f32 %v1901, %v1602
  %v1906 = vmul.f32 %v1904, %v1602
  %v1907 = vadd.f32 %v1905, 1e-05
  %v1908 = vadd.f32 %v1906, 1e-05
  %v1909 = vrsqrt.pop %v1907
  %v1910 = vrsqrt.pop %v1908
  %v1911 = vmul.f32 %v1895, %v1909
  %v1912 = vmul.f32 %v1896, %v1910
  %v1914 = vlaneseq
  %v1915 = vshrl.u32 %v1914, 7
  %v1916 = vsub.s32 0, %v1915
  %v1917 = vrot.slane %v1885, %v1916
  %v1919 = vmul.f32 %v1911, %v1917
  %v1920 = vmul.f32 %v1912, %v1917
  %v1922 = vlaneseq
  %v1923 = vshrl.u32 %v1922, 7
  %v1924 = vsub.s32 0, %v1923
  %v1925 = vrot.slane %v1886, %v1924
  %v1927 = vadd.f32 %v1919, %v1925
  %v1928 = vadd.f32 %v1920, %v1925
  %s1929 = scalar_lea.vmem %s1, 32
  %v1930 = vld [vmem:[%s1929] sm:$0xff]
  %v1931 = vld [vmem:[%s1929 + $0x8] sm:$0xff]
  %v1932 = vld [vmem:[%s1929 + $0x10] sm:$0xff]
  %v1933 = vld [vmem:[%s1929 + $0x18] sm:$0xff]
  %s1934 = scalar_lea.vmem %s2, 1
  %v1935 = vld [vmem:[%s1934] sm:$0x1]
  %v1937 = vlaneseq
  %v1938 = vshrl.u32 %v1937, 7
  %v1939 = vsub.s32 0, %v1938
  %v1940 = vrot.slane %v1935, %v1939
  %v1943 = vsel %vm63, %v1927, 0
  %v1946 = vsel %vm63, %v1928, 0
  %1948 = vmatprep.subr.mxu0 0.0
  %1949 = vmatpush1.msra.mxu0 %v1930
  %1950 = vmatprep.subr.mxu0 0.0
  %1951 = vmatpush1.msra.mxu0 %v1931
  %1952 = vmatprep.subr.mxu0 0.0
  %1953 = vmatpush1.msra.mxu0 %v1932
  %1954 = vmatprep.subr.mxu0 0.0
  %1955 = vmatpush1.msra.mxu0 %v1933
  %1956 = vmatprep.subr.mxu0 0.0
  %1957 = vmatpush1.msra.mxu0 0.0
  %1958 = vmatprep.subr.mxu0 0.0
  %1959 = vmatpush1.msra.mxu0 0.0
  %1960 = vmatprep.subr.mxu0 0.0
  %1961 = vmatpush1.msra.mxu0 0.0
  %1962 = vmatprep.subr.mxu0 0.0
  %1963 = vmatpush1.msra.mxu0 0.0
  %1964 = vmatprep.subr.mxu0 0.0
  %1965 = vmatpush1.msra.mxu0 0.0
  %1966 = vmatprep.subr.mxu0 0.0
  %1967 = vmatpush1.msra.mxu0 0.0
  %1968 = vmatprep.subr.mxu0 0.0
  %1969 = vmatpush1.msra.mxu0 0.0
  %1970 = vmatprep.subr.mxu0 0.0
  %1971 = vmatpush1.msra.mxu0 0.0
  %1972 = vmatprep.subr.mxu0 0.0
  %1973 = vmatpush1.msra.mxu0 0.0
  %1974 = vmatprep.subr.mxu0 0.0
  %1975 = vmatpush1.msra.mxu0 0.0
  %1976 = vmatprep.subr.mxu0 0.0
  %1977 = vmatpush1.msra.mxu0 0.0
  %1978 = vmatprep.subr.mxu0 0.0
  %1979 = vmatpush1.msra.mxu0 0.0
  %1980 = vmatprep.subr.mxu0 0.0
  %1981 = vmatpush1.msra.mxu0 0.0
  %1982 = vmatprep.subr.mxu0 0.0
  %1983 = vmatpush1.msra.mxu0 0.0
  %1984 = vmatprep.subr.mxu0 0.0
  %1985 = vmatpush1.msra.mxu0 0.0
  %1986 = vmatprep.subr.mxu0 0.0
  %1987 = vmatpush1.msra.mxu0 0.0
  %1988 = vmatprep.subr.mxu0 0.0
  %1989 = vmatpush1.msra.mxu0 0.0
  %1990 = vmatprep.subr.mxu0 0.0
  %1991 = vmatpush1.msra.mxu0 0.0
  %1992 = vmatprep.subr.mxu0 0.0
  %1993 = vmatpush1.msra.mxu0 0.0
  %1994 = vmatprep.subr.mxu0 0.0
  %1995 = vmatpush1.msra.mxu0 0.0
  %1996 = vmatprep.subr.mxu0 0.0
  %1997 = vmatpush1.msra.mxu0 0.0
  %1998 = vmatprep.subr.mxu0 0.0
  %1999 = vmatpush1.msra.mxu0 0.0
  %2000 = vmatprep.subr.mxu0 0.0
  %2001 = vmatpush1.msra.mxu0 0.0
  %2002 = vmatprep.subr.mxu0 0.0
  %2003 = vmatpush1.msra.mxu0 0.0
  %2004 = vmatprep.subr.mxu0 0.0
  %2005 = vmatpush1.msra.mxu0 0.0
  %2006 = vmatprep.subr.mxu0 0.0
  %2007 = vmatpush1.msra.mxu0 0.0
  %2008 = vmatprep.subr.mxu0 0.0
  %2009 = vmatpush1.msra.mxu0 0.0
  %2010 = vmatprep.subr.mxu0 0.0
  %2011 = vmatpush1.msra.mxu0 0.0
  %2012 = vmatprep.mubr.f32.mxu0 0.0
  %2013 = vmatmul.mubr.f32.gmra.mrb[0].mxu0 %v1943
  %v2014 = vpop.f32.mrb[0].mxu0
  %v2015 = vadd.f32 %v1940, %v2014
  %v2016 = vpop.f32.mrb[0].mxu0
  %2017 = vmatprep.mubr.f32.mxu0 0.0
  %2018 = vmatmul.mubr.f32.gmra.mrb[0].mxu0 %v1946
  %v2019 = vpop.f32.mrb[0].mxu0
  %v2020 = vadd.f32 %v1940, %v2019
  %v2021 = vpop.f32.mrb[0].mxu0
  %2022 = vdwg.mxu0
  %v2023 = vmul.f32 %v2015, 0.35355338
  %v2024 = vmul.f32 %v2020, 0.35355338
  %2026 = vrot.lane.b32.xlu0 %v2015, 96
  %v2027 = vpop.permute.xlu0 %2026
  %v2029 = vsel %vm150, %v2023, 0
  %v2031 = vsel %vm150, %v2027, 0
  %2033 = vmatprep.subr.mxu0 0.0
  %2034 = vmatpush1.xpose.msra.mxu0 %v2031
  %2035 = vmatprep.subr.mxu0 0.0
  %2036 = vmatpush1.xpose.msra.mxu0 0.0
  %2037 = vmatprep.subr.mxu0 0.0
  %2038 = vmatpush1.xpose.msra.mxu0 0.0
  %2039 = vmatprep.subr.mxu0 0.0
  %2040 = vmatpush1.xpose.msra.mxu0 0.0
  %2041 = vmatprep.subr.mxu0 0.0
  %2042 = vmatpush1.xpose.msra.mxu0 0.0
  %2043 = vmatprep.subr.mxu0 0.0
  %2044 = vmatpush1.xpose.msra.mxu0 0.0
  %2045 = vmatprep.subr.mxu0 0.0
  %2046 = vmatpush1.xpose.msra.mxu0 0.0
  %2047 = vmatprep.subr.mxu0 0.0
  %2048 = vmatpush1.xpose.msra.mxu0 0.0
  %2049 = vmatprep.subr.mxu0 0.0
  %2050 = vmatpush1.xpose.msra.mxu0 0.0
  %2051 = vmatprep.subr.mxu0 0.0
  %2052 = vmatpush1.xpose.msra.mxu0 0.0
  %2053 = vmatprep.subr.mxu0 0.0
  %2054 = vmatpush1.xpose.msra.mxu0 0.0
  %2055 = vmatprep.subr.mxu0 0.0
  %2056 = vmatpush1.xpose.msra.mxu0 0.0
  %2057 = vmatprep.subr.mxu0 0.0
  %2058 = vmatpush1.xpose.msra.mxu0 0.0
  %2059 = vmatprep.subr.mxu0 0.0
  %2060 = vmatpush1.xpose.msra.mxu0 0.0
  %2061 = vmatprep.subr.mxu0 0.0
  %2062 = vmatpush1.xpose.msra.mxu0 0.0
  %2063 = vmatprep.subr.mxu0 0.0
  %2064 = vmatpush1.xpose.msra.mxu0 0.0
  %2065 = vmatprep.subr.mxu0 0.0
  %2066 = vmatpush1.xpose.msra.mxu0 0.0
  %2067 = vmatprep.subr.mxu0 0.0
  %2068 = vmatpush1.xpose.msra.mxu0 0.0
  %2069 = vmatprep.subr.mxu0 0.0
  %2070 = vmatpush1.xpose.msra.mxu0 0.0
  %2071 = vmatprep.subr.mxu0 0.0
  %2072 = vmatpush1.xpose.msra.mxu0 0.0
  %2073 = vmatprep.subr.mxu0 0.0
  %2074 = vmatpush1.xpose.msra.mxu0 0.0
  %2075 = vmatprep.subr.mxu0 0.0
  %2076 = vmatpush1.xpose.msra.mxu0 0.0
  %2077 = vmatprep.subr.mxu0 0.0
  %2078 = vmatpush1.xpose.msra.mxu0 0.0
  %2079 = vmatprep.subr.mxu0 0.0
  %2080 = vmatpush1.xpose.msra.mxu0 0.0
  %2081 = vmatprep.subr.mxu0 0.0
  %2082 = vmatpush1.xpose.msra.mxu0 0.0
  %2083 = vmatprep.subr.mxu0 0.0
  %2084 = vmatpush1.xpose.msra.mxu0 0.0
  %2085 = vmatprep.subr.mxu0 0.0
  %2086 = vmatpush1.xpose.msra.mxu0 0.0
  %2087 = vmatprep.subr.mxu0 0.0
  %2088 = vmatpush1.xpose.msra.mxu0 0.0
  %2089 = vmatprep.subr.mxu0 0.0
  %2090 = vmatpush1.xpose.msra.mxu0 0.0
  %2091 = vmatprep.subr.mxu0 0.0
  %2092 = vmatpush1.xpose.msra.mxu0 0.0
  %2093 = vmatprep.subr.mxu0 0.0
  %2094 = vmatpush1.xpose.msra.mxu0 0.0
  %2095 = vmatprep.subr.mxu0 0.0
  %2096 = vmatpush1.xpose.msra.mxu0 0.0
  %2097 = vmatprep.mubr.f32.mxu0 0.0
  %2098 = vmatmul.mubr.f32.gmra.mrb[0].mxu0 %v2029
  %v2099 = vpop.f32.mrb[0].mxu0
  %v2100 = vadd.f32 0.0, %v2099
  %v2101 = vpop.f32.mrb[0].mxu0
  %2102 = vdwg.mxu0
  %2104 = vrot.lane.b32.xlu0 %v2020, 96
  %v2105 = vpop.permute.xlu0 %2104
  %v2107 = vsel %vm150, %v2024, 0
  %v2109 = vsel %vm150, %v2105, 0
  %2111 = vmatprep.subr.mxu0 0.0
  %2112 = vmatpush1.xpose.msra.mxu0 %v2109
  %2113 = vmatprep.subr.mxu0 0.0
  %2114 = vmatpush1.xpose.msra.mxu0 0.0
  %2115 = vmatprep.subr.mxu0 0.0
  %2116 = vmatpush1.xpose.msra.mxu0 0.0
  %2117 = vmatprep.subr.mxu0 0.0
  %2118 = vmatpush1.xpose.msra.mxu0 0.0
  %2119 = vmatprep.subr.mxu0 0.0
  %2120 = vmatpush1.xpose.msra.mxu0 0.0
  %2121 = vmatprep.subr.mxu0 0.0
  %2122 = vmatpush1.xpose.msra.mxu0 0.0
  %2123 = vmatprep.subr.mxu0 0.0
  %2124 = vmatpush1.xpose.msra.mxu0 0.0
  %2125 = vmatprep.subr.mxu0 0.0
  %2126 = vmatpush1.xpose.msra.mxu0 0.0
  %2127 = vmatprep.subr.mxu0 0.0
  %2128 = vmatpush1.xpose.msra.mxu0 0.0
  %2129 = vmatprep.subr.mxu0 0.0
  %2130 = vmatpush1.xpose.msra.mxu0 0.0
  %2131 = vmatprep.subr.mxu0 0.0
  %2132 = vmatpush1.xpose.msra.mxu0 0.0
  %2133 = vmatprep.subr.mxu0 0.0
  %2134 = vmatpush1.xpose.msra.mxu0 0.0
  %2135 = vmatprep.subr.mxu0 0.0
  %2136 = vmatpush1.xpose.msra.mxu0 0.0
  %2137 = vmatprep.subr.mxu0 0.0
  %2138 = vmatpush1.xpose.msra.mxu0 0.0
  %2139 = vmatprep.subr.mxu0 0.0
  %2140 = vmatpush1.xpose.msra.mxu0 0.0
  %2141 = vmatprep.subr.mxu0 0.0
  %2142 = vmatpush1.xpose.msra.mxu0 0.0
  %2143 = vmatprep.subr.mxu0 0.0
  %2144 = vmatpush1.xpose.msra.mxu0 0.0
  %2145 = vmatprep.subr.mxu0 0.0
  %2146 = vmatpush1.xpose.msra.mxu0 0.0
  %2147 = vmatprep.subr.mxu0 0.0
  %2148 = vmatpush1.xpose.msra.mxu0 0.0
  %2149 = vmatprep.subr.mxu0 0.0
  %2150 = vmatpush1.xpose.msra.mxu0 0.0
  %2151 = vmatprep.subr.mxu0 0.0
  %2152 = vmatpush1.xpose.msra.mxu0 0.0
  %2153 = vmatprep.subr.mxu0 0.0
  %2154 = vmatpush1.xpose.msra.mxu0 0.0
  %2155 = vmatprep.subr.mxu0 0.0
  %2156 = vmatpush1.xpose.msra.mxu0 0.0
  %2157 = vmatprep.subr.mxu0 0.0
  %2158 = vmatpush1.xpose.msra.mxu0 0.0
  %2159 = vmatprep.subr.mxu0 0.0
  %2160 = vmatpush1.xpose.msra.mxu0 0.0
  %2161 = vmatprep.subr.mxu0 0.0
  %2162 = vmatpush1.xpose.msra.mxu0 0.0
  %2163 = vmatprep.subr.mxu0 0.0
  %2164 = vmatpush1.xpose.msra.mxu0 0.0
  %2165 = vmatprep.subr.mxu0 0.0
  %2166 = vmatpush1.xpose.msra.mxu0 0.0
  %2167 = vmatprep.subr.mxu0 0.0
  %2168 = vmatpush1.xpose.msra.mxu0 0.0
  %2169 = vmatprep.subr.mxu0 0.0
  %2170 = vmatpush1.xpose.msra.mxu0 0.0
  %2171 = vmatprep.subr.mxu0 0.0
  %2172 = vmatpush1.xpose.msra.mxu0 0.0
  %2173 = vmatprep.subr.mxu0 0.0
  %2174 = vmatpush1.xpose.msra.mxu0 0.0
  %2175 = vmatprep.mubr.f32.mxu0 0.0
  %2176 = vmatmul.mubr.f32.gmra.mrb[0].mxu0 %v2107
  %v2177 = vpop.f32.mrb[0].mxu0
  %v2178 = vadd.f32 0.0, %v2177
  %v2179 = vpop.f32.mrb[0].mxu0
  %2180 = vdwg.mxu0
  %v2181 = vsel %vm150, %v2100, -inf
  %2182 = vmax.xlane.f32.xlu0 %v2181
  %v2183 = vpop.xlane.xlu0 %2182
  %v2184 = vsel %vm150, %v2178, -inf
  %2185 = vmax.xlane.f32.xlu0 %v2184
  %v2186 = vpop.xlane.xlu0 %2185
  %v2187 = vsub.f32 %v2100, %v2183
  %v2188 = vsub.f32 %v2178, %v2186
  %v2189 = vmul.f32 %v2187, 1.442695
  %v2190 = vpow.pop %v2189
  %v2191 = vmul.f32 %v2188, 1.442695
  %v2192 = vpow.pop %v2191
  %v2193 = vsel %vm150, %v2190, 0.0
  %2194 = vadd.xlane.f32.xlu0 %v2193
  %v2195 = vpop.xlane.xlu0 %2194
  %v2196 = vsel %vm150, %v2192, 0.0
  %2197 = vadd.xlane.f32.xlu0 %v2196
  %v2198 = vpop.xlane.xlu0 %2197
  %v2199 = vrcp.pop %v2195
  %v2200 = vrcp.pop %v2198
  %v2201 = vmul.f32 %v2190, %v2199
  %v2202 = vmul.f32 %v2192, %v2200
  %2203 = vrot.lane.b32.xlu0 %v2015, 64
  %v2204 = vpop.permute.xlu0 %2203
  %v2207 = vsel %vm150, %v2201, 0
  %2209 = vmatprep.subr.mxu0 0.0
  %2210 = vmatpush1.msra.mxu0 %v2204
  %2211 = vmatprep.subr.mxu0 0.0
  %2212 = vmatpush1.msra.mxu0 0.0
  %2213 = vmatprep.subr.mxu0 0.0
  %2214 = vmatpush1.msra.mxu0 0.0
  %2215 = vmatprep.subr.mxu0 0.0
  %2216 = vmatpush1.msra.mxu0 0.0
  %2217 = vmatprep.subr.mxu0 0.0
  %2218 = vmatpush1.msra.mxu0 0.0
  %2219 = vmatprep.subr.mxu0 0.0
  %2220 = vmatpush1.msra.mxu0 0.0
  %2221 = vmatprep.subr.mxu0 0.0
  %2222 = vmatpush1.msra.mxu0 0.0
  %2223 = vmatprep.subr.mxu0 0.0
  %2224 = vmatpush1.msra.mxu0 0.0
  %2225 = vmatprep.subr.mxu0 0.0
  %2226 = vmatpush1.msra.mxu0 0.0
  %2227 = vmatprep.subr.mxu0 0.0
  %2228 = vmatpush1.msra.mxu0 0.0
  %2229 = vmatprep.subr.mxu0 0.0
  %2230 = vmatpush1.msra.mxu0 0.0
  %2231 = vmatprep.subr.mxu0 0.0
  %2232 = vmatpush1.msra.mxu0 0.0
  %2233 = vmatprep.subr.mxu0 0.0
  %2234 = vmatpush1.msra.mxu0 0.0
  %2235 = vmatprep.subr.mxu0 0.0
  %2236 = vmatpush1.msra.mxu0 0.0
  %2237 = vmatprep.subr.mxu0 0.0
  %2238 = vmatpush1.msra.mxu0 0.0
  %2239 = vmatprep.subr.mxu0 0.0
  %2240 = vmatpush1.msra.mxu0 0.0
  %2241 = vmatprep.subr.mxu0 0.0
  %2242 = vmatpush1.msra.mxu0 0.0
  %2243 = vmatprep.subr.mxu0 0.0
  %2244 = vmatpush1.msra.mxu0 0.0
  %2245 = vmatprep.subr.mxu0 0.0
  %2246 = vmatpush1.msra.mxu0 0.0
  %2247 = vmatprep.subr.mxu0 0.0
  %2248 = vmatpush1.msra.mxu0 0.0
  %2249 = vmatprep.subr.mxu0 0.0
  %2250 = vmatpush1.msra.mxu0 0.0
  %2251 = vmatprep.subr.mxu0 0.0
  %2252 = vmatpush1.msra.mxu0 0.0
  %2253 = vmatprep.subr.mxu0 0.0
  %2254 = vmatpush1.msra.mxu0 0.0
  %2255 = vmatprep.subr.mxu0 0.0
  %2256 = vmatpush1.msra.mxu0 0.0
  %2257 = vmatprep.subr.mxu0 0.0
  %2258 = vmatpush1.msra.mxu0 0.0
  %2259 = vmatprep.subr.mxu0 0.0
  %2260 = vmatpush1.msra.mxu0 0.0
  %2261 = vmatprep.subr.mxu0 0.0
  %2262 = vmatpush1.msra.mxu0 0.0
  %2263 = vmatprep.subr.mxu0 0.0
  %2264 = vmatpush1.msra.mxu0 0.0
  %2265 = vmatprep.subr.mxu0 0.0
  %2266 = vmatpush1.msra.mxu0 0.0
  %2267 = vmatprep.subr.mxu0 0.0
  %2268 = vmatpush1.msra.mxu0 0.0
  %2269 = vmatprep.subr.mxu0 0.0
  %2270 = vmatpush1.msra.mxu0 0.0
  %2271 = vmatprep.subr.mxu0 0.0
  %2272 = vmatpush1.msra.mxu0 0.0
  %2273 = vmatprep.mubr.f32.mxu0 0.0
  %2274 = vmatmul.mubr.f32.gmra.mrb[0].mxu0 %v2207
  %v2275 = vpop.f32.mrb[0].mxu0
  %v2276 = vadd.f32 0.0, %v2275
  %v2277 = vpop.f32.mrb[0].mxu0
  %2278 = vdwg.mxu0
  %2279 = vrot.lane.b32.xlu0 %v2020, 64
  %v2280 = vpop.permute.xlu0 %2279
  %v2283 = vsel %vm150, %v2202, 0
  %2285 = vmatprep.subr.mxu0 0.0
  %2286 = vmatpush1.msra.mxu0 %v2280
  %2287 = vmatprep.subr.mxu0 0.0
  %2288 = vmatpush1.msra.mxu0 0.0
  %2289 = vmatprep.subr.mxu0 0.0
  %2290 = vmatpush1.msra.mxu0 0.0
  %2291 = vmatprep.subr.mxu0 0.0
  %2292 = vmatpush1.msra.mxu0 0.0
  %2293 = vmatprep.subr.mxu0 0.0
  %2294 = vmatpush1.msra.mxu0 0.0
  %2295 = vmatprep.subr.mxu0 0.0
  %2296 = vmatpush1.msra.mxu0 0.0
  %2297 = vmatprep.subr.mxu0 0.0
  %2298 = vmatpush1.msra.mxu0 0.0
  %2299 = vmatprep.subr.mxu0 0.0
  %2300 = vmatpush1.msra.mxu0 0.0
  %2301 = vmatprep.subr.mxu0 0.0
  %2302 = vmatpush1.msra.mxu0 0.0
  %2303 = vmatprep.subr.mxu0 0.0
  %2304 = vmatpush1.msra.mxu0 0.0
  %2305 = vmatprep.subr.mxu0 0.0
  %2306 = vmatpush1.msra.mxu0 0.0
  %2307 = vmatprep.subr.mxu0 0.0
  %2308 = vmatpush1.msra.mxu0 0.0
  %2309 = vmatprep.subr.mxu0 0.0
  %2310 = vmatpush1.msra.mxu0 0.0
  %2311 = vmatprep.subr.mxu0 0.0
  %2312 = vmatpush1.msra.mxu0 0.0
  %2313 = vmatprep.subr.mxu0 0.0
  %2314 = vmatpush1.msra.mxu0 0.0
  %2315 = vmatprep.subr.mxu0 0.0
  %2316 = vmatpush1.msra.mxu0 0.0
  %2317 = vmatprep.subr.mxu0 0.0
  %2318 = vmatpush1.msra.mxu0 0.0
  %2319 = vmatprep.subr.mxu0 0.0
  %2320 = vmatpush1.msra.mxu0 0.0
  %2321 = vmatprep.subr.mxu0 0.0
  %2322 = vmatpush1.msra.mxu0 0.0
  %2323 = vmatprep.subr.mxu0 0.0
  %2324 = vmatpush1.msra.mxu0 0.0
  %2325 = vmatprep.subr.mxu0 0.0
  %2326 = vmatpush1.msra.mxu0 0.0
  %2327 = vmatprep.subr.mxu0 0.0
  %2328 = vmatpush1.msra.mxu0 0.0
  %2329 = vmatprep.subr.mxu0 0.0
  %2330 = vmatpush1.msra.mxu0 0.0
  %2331 = vmatprep.subr.mxu0 0.0
  %2332 = vmatpush1.msra.mxu0 0.0
  %2333 = vmatprep.subr.mxu0 0.0
  %2334 = vmatpush1.msra.mxu0 0.0
  %2335 = vmatprep.subr.mxu0 0.0
  %2336 = vmatpush1.msra.mxu0 0.0
  %2337 = vmatprep.subr.mxu0 0.0
  %2338 = vmatpush1.msra.mxu0 0.0
  %2339 = vmatprep.subr.mxu0 0.0
  %2340 = vmatpush1.msra.mxu0 0.0
  %2341 = vmatprep.subr.mxu0 0.0
  %2342 = vmatpush1.msra.mxu0 0.0
  %2343 = vmatprep.subr.mxu0 0.0
  %2344 = vmatpush1.msra.mxu0 0.0
  %2345 = vmatprep.subr.mxu0 0.0
  %2346 = vmatpush1.msra.mxu0 0.0
  %2347 = vmatprep.subr.mxu0 0.0
  %2348 = vmatpush1.msra.mxu0 0.0
  %2349 = vmatprep.mubr.f32.mxu0 0.0
  %2350 = vmatmul.mubr.f32.gmra.mrb[0].mxu0 %v2283
  %v2351 = vpop.f32.mrb[0].mxu0
  %v2352 = vadd.f32 0.0, %v2351
  %v2353 = vpop.f32.mrb[0].mxu0
  %2354 = vdwg.mxu0
  %2355 = vrot.lane.b32.xlu0 %v2023, 120
  %v2356 = vpop.permute.xlu0 %2355
  %2357 = vrot.lane.b32.xlu0 %v2015, 88
  %v2358 = vpop.permute.xlu0 %2357
  %v2359 = vsel %vm150, %v2356, 0
  %v2361 = vsel %vm150, %v2358, 0
  %2363 = vmatprep.subr.mxu0 0.0
  %2364 = vmatpush1.xpose.msra.mxu0 %v2361
  %2365 = vmatprep.subr.mxu0 0.0
  %2366 = vmatpush1.xpose.msra.mxu0 0.0
  %2367 = vmatprep.subr.mxu0 0.0
  %2368 = vmatpush1.xpose.msra.mxu0 0.0
  %2369 = vmatprep.subr.mxu0 0.0
  %2370 = vmatpush1.xpose.msra.mxu0 0.0
  %2371 = vmatprep.subr.mxu0 0.0
  %2372 = vmatpush1.xpose.msra.mxu0 0.0
  %2373 = vmatprep.subr.mxu0 0.0
  %2374 = vmatpush1.xpose.msra.mxu0 0.0
  %2375 = vmatprep.subr.mxu0 0.0
  %2376 = vmatpush1.xpose.msra.mxu0 0.0
  %2377 = vmatprep.subr.mxu0 0.0
  %2378 = vmatpush1.xpose.msra.mxu0 0.0
  %2379 = vmatprep.subr.mxu0 0.0
  %2380 = vmatpush1.xpose.msra.mxu0 0.0
  %2381 = vmatprep.subr.mxu0 0.0
  %2382 = vmatpush1.xpose.msra.mxu0 0.0
  %2383 = vmatprep.subr.mxu0 0.0
  %2384 = vmatpush1.xpose.msra.mxu0 0.0
  %2385 = vmatprep.subr.mxu0 0.0
  %2386 = vmatpush1.xpose.msra.mxu0 0.0
  %2387 = vmatprep.subr.mxu0 0.0
  %2388 = vmatpush1.xpose.msra.mxu0 0.0
  %2389 = vmatprep.subr.mxu0 0.0
  %2390 = vmatpush1.xpose.msra.mxu0 0.0
  %2391 = vmatprep.subr.mxu0 0.0
  %2392 = vmatpush1.xpose.msra.mxu0 0.0
  %2393 = vmatprep.subr.mxu0 0.0
  %2394 = vmatpush1.xpose.msra.mxu0 0.0
  %2395 = vmatprep.subr.mxu0 0.0
  %2396 = vmatpush1.xpose.msra.mxu0 0.0
  %2397 = vmatprep.subr.mxu0 0.0
  %2398 = vmatpush1.xpose.msra.mxu0 0.0
  %2399 = vmatprep.subr.mxu0 0.0
  %2400 = vmatpush1.xpose.msra.mxu0 0.0
  %2401 = vmatprep.subr.mxu0 0.0
  %2402 = vmatpush1.xpose.msra.mxu0 0.0
  %2403 = vmatprep.subr.mxu0 0.0
  %2404 = vmatpush1.xpose.msra.mxu0 0.0
  %2405 = vmatprep.subr.mxu0 0.0
  %2406 = vmatpush1.xpose.msra.mxu0 0.0
  %2407 = vmatprep.subr.mxu0 0.0
  %2408 = vmatpush1.xpose.msra.mxu0 0.0
  %2409 = vmatprep.subr.mxu0 0.0
  %2410 = vmatpush1.xpose.msra.mxu0 0.0
  %2411 = vmatprep.subr.mxu0 0.0
  %2412 = vmatpush1.xpose.msra.mxu0 0.0
  %2413 = vmatprep.subr.mxu0 0.0
  %2414 = vmatpush1.xpose.msra.mxu0 0.0
  %2415 = vmatprep.subr.mxu0 0.0
  %2416 = vmatpush1.xpose.msra.mxu0 0.0
  %2417 = vmatprep.subr.mxu0 0.0
  %2418 = vmatpush1.xpose.msra.mxu0 0.0
  %2419 = vmatprep.subr.mxu0 0.0
  %2420 = vmatpush1.xpose.msra.mxu0 0.0
  %2421 = vmatprep.subr.mxu0 0.0
  %2422 = vmatpush1.xpose.msra.mxu0 0.0
  %2423 = vmatprep.subr.mxu0 0.0
  %2424 = vmatpush1.xpose.msra.mxu0 0.0
  %2425 = vmatprep.subr.mxu0 0.0
  %2426 = vmatpush1.xpose.msra.mxu0 0.0
  %2427 = vmatprep.mubr.f32.mxu0 0.0
  %2428 = vmatmul.mubr.f32.gmra.mrb[0].mxu0 %v2359
  %v2429 = vpop.f32.mrb[0].mxu0
  %v2430 = vadd.f32 0.0, %v2429
  %v2431 = vpop.f32.mrb[0].mxu0
  %2432 = vdwg.mxu0
  %2433 = vrot.lane.b32.xlu0 %v2024, 120
  %v2434 = vpop.permute.xlu0 %2433
  %2435 = vrot.lane.b32.xlu0 %v2020, 88
  %v2436 = vpop.permute.xlu0 %2435
  %v2437 = vsel %vm150, %v2434, 0
  %v2439 = vsel %vm150, %v2436, 0
  %2441 = vmatprep.subr.mxu0 0.0
  %2442 = vmatpush1.xpose.msra.mxu0 %v2439
  %2443 = vmatprep.subr.mxu0 0.0
  %2444 = vmatpush1.xpose.msra.mxu0 0.0
  %2445 = vmatprep.subr.mxu0 0.0
  %2446 = vmatpush1.xpose.msra.mxu0 0.0
  %2447 = vmatprep.subr.mxu0 0.0
  %2448 = vmatpush1.xpose.msra.mxu0 0.0
  %2449 = vmatprep.subr.mxu0 0.0
  %2450 = vmatpush1.xpose.msra.mxu0 0.0
  %2451 = vmatprep.subr.mxu0 0.0
  %2452 = vmatpush1.xpose.msra.mxu0 0.0
  %2453 = vmatprep.subr.mxu0 0.0
  %2454 = vmatpush1.xpose.msra.mxu0 0.0
  %2455 = vmatprep.subr.mxu0 0.0
  %2456 = vmatpush1.xpose.msra.mxu0 0.0
  %2457 = vmatprep.subr.mxu0 0.0
  %2458 = vmatpush1.xpose.msra.mxu0 0.0
  %2459 = vmatprep.subr.mxu0 0.0
  %2460 = vmatpush1.xpose.msra.mxu0 0.0
  %2461 = vmatprep.subr.mxu0 0.0
  %2462 = vmatpush1.xpose.msra.mxu0 0.0
  %2463 = vmatprep.subr.mxu0 0.0
  %2464 = vmatpush1.xpose.msra.mxu0 0.0
  %2465 = vmatprep.subr.mxu0 0.0
  %2466 = vmatpush1.xpose.msra.mxu0 0.0
  %2467 = vmatprep.subr.mxu0 0.0
  %2468 = vmatpush1.xpose.msra.mxu0 0.0
  %2469 = vmatprep.subr.mxu0 0.0
  %2470 = vmatpush1.xpose.msra.mxu0 0.0
  %2471 = vmatprep.subr.mxu0 0.0
  %2472 = vmatpush1.xpose.msra.mxu0 0.0
  %2473 = vmatprep.subr.mxu0 0.0
  %2474 = vmatpush1.xpose.msra.mxu0 0.0
  %2475 = vmatprep.subr.mxu0 0.0
  %2476 = vmatpush1.xpose.msra.mxu0 0.0
  %2477 = vmatprep.subr.mxu0 0.0
  %2478 = vmatpush1.xpose.msra.mxu0 0.0
  %2479 = vmatprep.subr.mxu0 0.0
  %2480 = vmatpush1.xpose.msra.mxu0 0.0
  %2481 = vmatprep.subr.mxu0 0.0
  %2482 = vmatpush1.xpose.msra.mxu0 0.0
  %2483 = vmatprep.subr.mxu0 0.0
  %2484 = vmatpush1.xpose.msra.mxu0 0.0
  %2485 = vmatprep.subr.mxu0 0.0
  %2486 = vmatpush1.xpose.msra.mxu0 0.0
  %2487 = vmatprep.subr.mxu0 0.0
  %2488 = vmatpush1.xpose.msra.mxu0 0.0
  %2489 = vmatprep.subr.mxu0 0.0
  %2490 = vmatpush1.xpose.msra.mxu0 0.0
  %2491 = vmatprep.subr.mxu0 0.0
  %2492 = vmatpush1.xpose.msra.mxu0 0.0
  %2493 = vmatprep.subr.mxu0 0.0
  %2494 = vmatpush1.xpose.msra.mxu0 0.0
  %2495 = vmatprep.subr.mxu0 0.0
  %2496 = vmatpush1.xpose.msra.mxu0 0.0
  %2497 = vmatprep.subr.mxu0 0.0
  %2498 = vmatpush1.xpose.msra.mxu0 0.0
  %2499 = vmatprep.subr.mxu0 0.0
  %2500 = vmatpush1.xpose.msra.mxu0 0.0
  %2501 = vmatprep.subr.mxu0 0.0
  %2502 = vmatpush1.xpose.msra.mxu0 0.0
  %2503 = vmatprep.subr.mxu0 0.0
  %2504 = vmatpush1.xpose.msra.mxu0 0.0
  %2505 = vmatprep.mubr.f32.mxu0 0.0
  %2506 = vmatmul.mubr.f32.gmra.mrb[0].mxu0 %v2437
  %v2507 = vpop.f32.mrb[0].mxu0
  %v2508 = vadd.f32 0.0, %v2507
  %v2509 = vpop.f32.mrb[0].mxu0
  %2510 = vdwg.mxu0
  %v2511 = vsel %vm150, %v2430, -inf
  %2512 = vmax.xlane.f32.xlu0 %v2511
  %v2513 = vpop.xlane.xlu0 %2512
  %v2514 = vsel %vm150, %v2508, -inf
  %2515 = vmax.xlane.f32.xlu0 %v2514
  %v2516 = vpop.xlane.xlu0 %2515
  %v2517 = vsub.f32 %v2430, %v2513
  %v2518 = vsub.f32 %v2508, %v2516
  %v2519 = vmul.f32 %v2517, 1.442695
  %v2520 = vpow.pop %v2519
  %v2521 = vmul.f32 %v2518, 1.442695
  %v2522 = vpow.pop %v2521
  %v2523 = vsel %vm150, %v2520, 0.0
  %2524 = vadd.xlane.f32.xlu0 %v2523
  %v2525 = vpop.xlane.xlu0 %2524
  %v2526 = vsel %vm150, %v2522, 0.0
  %2527 = vadd.xlane.f32.xlu0 %v2526
  %v2528 = vpop.xlane.xlu0 %2527
  %v2529 = vrcp.pop %v2525
  %v2530 = vrcp.pop %v2528
  %v2531 = vmul.f32 %v2520, %v2529
  %v2532 = vmul.f32 %v2522, %v2530
  %2533 = vrot.lane.b32.xlu0 %v2015, 56
  %v2534 = vpop.permute.xlu0 %2533
  %v2537 = vsel %vm150, %v2531, 0
  %2539 = vmatprep.subr.mxu0 0.0
  %2540 = vmatpush1.msra.mxu0 %v2534
  %2541 = vmatprep.subr.mxu0 0.0
  %2542 = vmatpush1.msra.mxu0 0.0
  %2543 = vmatprep.subr.mxu0 0.0
  %2544 = vmatpush1.msra.mxu0 0.0
  %2545 = vmatprep.subr.mxu0 0.0
  %2546 = vmatpush1.msra.mxu0 0.0
  %2547 = vmatprep.subr.mxu0 0.0
  %2548 = vmatpush1.msra.mxu0 0.0
  %2549 = vmatprep.subr.mxu0 0.0
  %2550 = vmatpush1.msra.mxu0 0.0
  %2551 = vmatprep.subr.mxu0 0.0
  %2552 = vmatpush1.msra.mxu0 0.0
  %2553 = vmatprep.subr.mxu0 0.0
  %2554 = vmatpush1.msra.mxu0 0.0
  %2555 = vmatprep.subr.mxu0 0.0
  %2556 = vmatpush1.msra.mxu0 0.0
  %2557 = vmatprep.subr.mxu0 0.0
  %2558 = vmatpush1.msra.mxu0 0.0
  %2559 = vmatprep.subr.mxu0 0.0
  %2560 = vmatpush1.msra.mxu0 0.0
  %2561 = vmatprep.subr.mxu0 0.0
  %2562 = vmatpush1.msra.mxu0 0.0
  %2563 = vmatprep.subr.mxu0 0.0
  %2564 = vmatpush1.msra.mxu0 0.0
  %2565 = vmatprep.subr.mxu0 0.0
  %2566 = vmatpush1.msra.mxu0 0.0
  %2567 = vmatprep.subr.mxu0 0.0
  %2568 = vmatpush1.msra.mxu0 0.0
  %2569 = vmatprep.subr.mxu0 0.0
  %2570 = vmatpush1.msra.mxu0 0.0
  %2571 = vmatprep.subr.mxu0 0.0
  %2572 = vmatpush1.msra.mxu0 0.0
  %2573 = vmatprep.subr.mxu0 0.0
  %2574 = vmatpush1.msra.mxu0 0.0
  %2575 = vmatprep.subr.mxu0 0.0
  %2576 = vmatpush1.msra.mxu0 0.0
  %2577 = vmatprep.subr.mxu0 0.0
  %2578 = vmatpush1.msra.mxu0 0.0
  %2579 = vmatprep.subr.mxu0 0.0
  %2580 = vmatpush1.msra.mxu0 0.0
  %2581 = vmatprep.subr.mxu0 0.0
  %2582 = vmatpush1.msra.mxu0 0.0
  %2583 = vmatprep.subr.mxu0 0.0
  %2584 = vmatpush1.msra.mxu0 0.0
  %2585 = vmatprep.subr.mxu0 0.0
  %2586 = vmatpush1.msra.mxu0 0.0
  %2587 = vmatprep.subr.mxu0 0.0
  %2588 = vmatpush1.msra.mxu0 0.0
  %2589 = vmatprep.subr.mxu0 0.0
  %2590 = vmatpush1.msra.mxu0 0.0
  %2591 = vmatprep.subr.mxu0 0.0
  %2592 = vmatpush1.msra.mxu0 0.0
  %2593 = vmatprep.subr.mxu0 0.0
  %2594 = vmatpush1.msra.mxu0 0.0
  %2595 = vmatprep.subr.mxu0 0.0
  %2596 = vmatpush1.msra.mxu0 0.0
  %2597 = vmatprep.subr.mxu0 0.0
  %2598 = vmatpush1.msra.mxu0 0.0
  %2599 = vmatprep.subr.mxu0 0.0
  %2600 = vmatpush1.msra.mxu0 0.0
  %2601 = vmatprep.subr.mxu0 0.0
  %2602 = vmatpush1.msra.mxu0 0.0
  %2603 = vmatprep.mubr.f32.mxu0 0.0
  %2604 = vmatmul.mubr.f32.gmra.mrb[0].mxu0 %v2537
  %v2605 = vpop.f32.mrb[0].mxu0
  %v2606 = vadd.f32 0.0, %v2605
  %v2607 = vpop.f32.mrb[0].mxu0
  %2608 = vdwg.mxu0
  %2609 = vrot.lane.b32.xlu0 %v2020, 56
  %v2610 = vpop.permute.xlu0 %2609
  %v2613 = vsel %vm150, %v2532, 0
  %2615 = vmatprep.subr.mxu0 0.0
  %2616 = vmatpush1.msra.mxu0 %v2610
  %2617 = vmatprep.subr.mxu0 0.0
  %2618 = vmatpush1.msra.mxu0 0.0
  %2619 = vmatprep.subr.mxu0 0.0
  %2620 = vmatpush1.msra.mxu0 0.0
  %2621 = vmatprep.subr.mxu0 0.0
  %2622 = vmatpush1.msra.mxu0 0.0
  %2623 = vmatprep.subr.mxu0 0.0
  %2624 = vmatpush1.msra.mxu0 0.0
  %2625 = vmatprep.subr.mxu0 0.0
  %2626 = vmatpush1.msra.mxu0 0.0
  %2627 = vmatprep.subr.mxu0 0.0
  %2628 = vmatpush1.msra.mxu0 0.0
  %2629 = vmatprep.subr.mxu0 0.0
  %2630 = vmatpush1.msra.mxu0 0.0
  %2631 = vmatprep.subr.mxu0 0.0
  %2632 = vmatpush1.msra.mxu0 0.0
  %2633 = vmatprep.subr.mxu0 0.0
  %2634 = vmatpush1.msra.mxu0 0.0
  %2635 = vmatprep.subr.mxu0 0.0
  %2636 = vmatpush1.msra.mxu0 0.0
  %2637 = vmatprep.subr.mxu0 0.0
  %2638 = vmatpush1.msra.mxu0 0.0
  %2639 = vmatprep.subr.mxu0 0.0
  %2640 = vmatpush1.msra.mxu0 0.0
  %2641 = vmatprep.subr.mxu0 0.0
  %2642 = vmatpush1.msra.mxu0 0.0
  %2643 = vmatprep.subr.mxu0 0.0
  %2644 = vmatpush1.msra.mxu0 0.0
  %2645 = vmatprep.subr.mxu0 0.0
  %2646 = vmatpush1.msra.mxu0 0.0
  %2647 = vmatprep.subr.mxu0 0.0
  %2648 = vmatpush1.msra.mxu0 0.0
  %2649 = vmatprep.subr.mxu0 0.0
  %2650 = vmatpush1.msra.mxu0 0.0
  %2651 = vmatprep.subr.mxu0 0.0
  %2652 = vmatpush1.msra.mxu0 0.0
  %2653 = vmatprep.subr.mxu0 0.0
  %2654 = vmatpush1.msra.mxu0 0.0
  %2655 = vmatprep.subr.mxu0 0.0
  %2656 = vmatpush1.msra.mxu0 0.0
  %2657 = vmatprep.subr.mxu0 0.0
  %2658 = vmatpush1.msra.mxu0 0.0
  %2659 = vmatprep.subr.mxu0 0.0
  %2660 = vmatpush1.msra.mxu0 0.0
  %2661 = vmatprep.subr.mxu0 0.0
  %2662 = vmatpush1.msra.mxu0 0.0
  %2663 = vmatprep.subr.mxu0 0.0
  %2664 = vmatpush1.msra.mxu0 0.0
  %2665 = vmatprep.subr.mxu0 0.0
  %2666 = vmatpush1.msra.mxu0 0.0
  %2667 = vmatprep.subr.mxu0 0.0
  %2668 = vmatpush1.msra.mxu0 0.0
  %2669 = vmatprep.subr.mxu0 0.0
  %2670 = vmatpush1.msra.mxu0 0.0
  %2671 = vmatprep.subr.mxu0 0.0
  %2672 = vmatpush1.msra.mxu0 0.0
  %2673 = vmatprep.subr.mxu0 0.0
  %2674 = vmatpush1.msra.mxu0 0.0
  %2675 = vmatprep.subr.mxu0 0.0
  %2676 = vmatpush1.msra.mxu0 0.0
  %2677 = vmatprep.subr.mxu0 0.0
  %2678 = vmatpush1.msra.mxu0 0.0
  %2679 = vmatprep.mubr.f32.mxu0 0.0
  %2680 = vmatmul.mubr.f32.gmra.mrb[0].mxu0 %v2613
  %v2681 = vpop.f32.mrb[0].mxu0
  %v2682 = vadd.f32 0.0, %v2681
  %v2683 = vpop.f32.mrb[0].mxu0
  %2684 = vdwg.mxu0
  %2685 = vrot.lane.b32.xlu0 %v2023, 112
  %v2686 = vpop.permute.xlu0 %2685
  %2687 = vrot.lane.b32.xlu0 %v2015, 80
  %v2688 = vpop.permute.xlu0 %2687
  %v2689 = vsel %vm150, %v2686, 0
  %v2691 = vsel %vm150, %v2688, 0
  %2693 = vmatprep.subr.mxu0 0.0
  %2694 = vmatpush1.xpose.msra.mxu0 %v2691
  %2695 = vmatprep.subr.mxu0 0.0
  %2696 = vmatpush1.xpose.msra.mxu0 0.0
  %2697 = vmatprep.subr.mxu0 0.0
  %2698 = vmatpush1.xpose.msra.mxu0 0.0
  %2699 = vmatprep.subr.mxu0 0.0
  %2700 = vmatpush1.xpose.msra.mxu0 0.0
  %2701 = vmatprep.subr.mxu0 0.0
  %2702 = vmatpush1.xpose.msra.mxu0 0.0
  %2703 = vmatprep.subr.mxu0 0.0
  %2704 = vmatpush1.xpose.msra.mxu0 0.0
  %2705 = vmatprep.subr.mxu0 0.0
  %2706 = vmatpush1.xpose.msra.mxu0 0.0
  %2707 = vmatprep.subr.mxu0 0.0
  %2708 = vmatpush1.xpose.msra.mxu0 0.0
  %2709 = vmatprep.subr.mxu0 0.0
  %2710 = vmatpush1.xpose.msra.mxu0 0.0
  %2711 = vmatprep.subr.mxu0 0.0
  %2712 = vmatpush1.xpose.msra.mxu0 0.0
  %2713 = vmatprep.subr.mxu0 0.0
  %2714 = vmatpush1.xpose.msra.mxu0 0.0
  %2715 = vmatprep.subr.mxu0 0.0
  %2716 = vmatpush1.xpose.msra.mxu0 0.0
  %2717 = vmatprep.subr.mxu0 0.0
  %2718 = vmatpush1.xpose.msra.mxu0 0.0
  %2719 = vmatprep.subr.mxu0 0.0
  %2720 = vmatpush1.xpose.msra.mxu0 0.0
  %2721 = vmatprep.subr.mxu0 0.0
  %2722 = vmatpush1.xpose.msra.mxu0 0.0
  %2723 = vmatprep.subr.mxu0 0.0
  %2724 = vmatpush1.xpose.msra.mxu0 0.0
  %2725 = vmatprep.subr.mxu0 0.0
  %2726 = vmatpush1.xpose.msra.mxu0 0.0
  %2727 = vmatprep.subr.mxu0 0.0
  %2728 = vmatpush1.xpose.msra.mxu0 0.0
  %2729 = vmatprep.subr.mxu0 0.0
  %2730 = vmatpush1.xpose.msra.mxu0 0.0
  %2731 = vmatprep.subr.mxu0 0.0
  %2732 = vmatpush1.xpose.msra.mxu0 0.0
  %2733 = vmatprep.subr.mxu0 0.0
  %2734 = vmatpush1.xpose.msra.mxu0 0.0
  %2735 = vmatprep.subr.mxu0 0.0
  %2736 = vmatpush1.xpose.msra.mxu0 0.0
  %2737 = vmatprep.subr.mxu0 0.0
  %2738 = vmatpush1.xpose.msra.mxu0 0.0
  %2739 = vmatprep.subr.mxu0 0.0
  %2740 = vmatpush1.xpose.msra.mxu0 0.0
  %2741 = vmatprep.subr.mxu0 0.0
  %2742 = vmatpush1.xpose.msra.mxu0 0.0
  %2743 = vmatprep.subr.mxu0 0.0
  %2744 = vmatpush1.xpose.msra.mxu0 0.0
  %2745 = vmatprep.subr.mxu0 0.0
  %2746 = vmatpush1.xpose.msra.mxu0 0.0
  %2747 = vmatprep.subr.mxu0 0.0
  %2748 = vmatpush1.xpose.msra.mxu0 0.0
  %2749 = vmatprep.subr.mxu0 0.0
  %2750 = vmatpush1.xpose.msra.mxu0 0.0
  %2751 = vmatprep.subr.mxu0 0.0
  %2752 = vmatpush1.xpose.msra.mxu0 0.0
  %2753 = vmatprep.subr.mxu0 0.0
  %2754 = vmatpush1.xpose.msra.mxu0 0.0
  %2755 = vmatprep.subr.mxu0 0.0
  %2756 = vmatpush1.xpose.msra.mxu0 0.0
  %2757 = vmatprep.mubr.f32.mxu0 0.0
  %2758 = vmatmul.mubr.f32.gmra.mrb[0].mxu0 %v2689
  %v2759 = vpop.f32.mrb[0].mxu0
  %v2760 = vadd.f32 0.0, %v2759
  %v2761 = vpop.f32.mrb[0].mxu0
  %2762 = vdwg.mxu0
  %2763 = vrot.lane.b32.xlu0 %v2024, 112
  %v2764 = vpop.permute.xlu0 %2763
  %2765 = vrot.lane.b32.xlu0 %v2020, 80
  %v2766 = vpop.permute.xlu0 %2765
  %v2767 = vsel %vm150, %v2764, 0
  %v2769 = vsel %vm150, %v2766, 0
  %2771 = vmatprep.subr.mxu0 0.0
  %2772 = vmatpush1.xpose.msra.mxu0 %v2769
  %2773 = vmatprep.subr.mxu0 0.0
  %2774 = vmatpush1.xpose.msra.mxu0 0.0
  %2775 = vmatprep.subr.mxu0 0.0
  %2776 = vmatpush1.xpose.msra.mxu0 0.0
  %2777 = vmatprep.subr.mxu0 0.0
  %2778 = vmatpush1.xpose.msra.mxu0 0.0
  %2779 = vmatprep.subr.mxu0 0.0
  %2780 = vmatpush1.xpose.msra.mxu0 0.0
  %2781 = vmatprep.subr.mxu0 0.0
  %2782 = vmatpush1.xpose.msra.mxu0 0.0
  %2783 = vmatprep.subr.mxu0 0.0
  %2784 = vmatpush1.xpose.msra.mxu0 0.0
  %2785 = vmatprep.subr.mxu0 0.0
  %2786 = vmatpush1.xpose.msra.mxu0 0.0
  %2787 = vmatprep.subr.mxu0 0.0
  %2788 = vmatpush1.xpose.msra.mxu0 0.0
  %2789 = vmatprep.subr.mxu0 0.0
  %2790 = vmatpush1.xpose.msra.mxu0 0.0
  %2791 = vmatprep.subr.mxu0 0.0
  %2792 = vmatpush1.xpose.msra.mxu0 0.0
  %2793 = vmatprep.subr.mxu0 0.0
  %2794 = vmatpush1.xpose.msra.mxu0 0.0
  %2795 = vmatprep.subr.mxu0 0.0
  %2796 = vmatpush1.xpose.msra.mxu0 0.0
  %2797 = vmatprep.subr.mxu0 0.0
  %2798 = vmatpush1.xpose.msra.mxu0 0.0
  %2799 = vmatprep.subr.mxu0 0.0
  %2800 = vmatpush1.xpose.msra.mxu0 0.0
  %2801 = vmatprep.subr.mxu0 0.0
  %2802 = vmatpush1.xpose.msra.mxu0 0.0
  %2803 = vmatprep.subr.mxu0 0.0
  %2804 = vmatpush1.xpose.msra.mxu0 0.0
  %2805 = vmatprep.subr.mxu0 0.0
  %2806 = vmatpush1.xpose.msra.mxu0 0.0
  %2807 = vmatprep.subr.mxu0 0.0
  %2808 = vmatpush1.xpose.msra.mxu0 0.0
  %2809 = vmatprep.subr.mxu0 0.0
  %2810 = vmatpush1.xpose.msra.mxu0 0.0
  %2811 = vmatprep.subr.mxu0 0.0
  %2812 = vmatpush1.xpose.msra.mxu0 0.0
  %2813 = vmatprep.subr.mxu0 0.0
  %2814 = vmatpush1.xpose.msra.mxu0 0.0
  %2815 = vmatprep.subr.mxu0 0.0
  %2816 = vmatpush1.xpose.msra.mxu0 0.0
  %2817 = vmatprep.subr.mxu0 0.0
  %2818 = vmatpush1.xpose.msra.mxu0 0.0
  %2819 = vmatprep.subr.mxu0 0.0
  %2820 = vmatpush1.xpose.msra.mxu0 0.0
  %2821 = vmatprep.subr.mxu0 0.0
  %2822 = vmatpush1.xpose.msra.mxu0 0.0
  %2823 = vmatprep.subr.mxu0 0.0
  %2824 = vmatpush1.xpose.msra.mxu0 0.0
  %2825 = vmatprep.subr.mxu0 0.0
  %2826 = vmatpush1.xpose.msra.mxu0 0.0
  %2827 = vmatprep.subr.mxu0 0.0
  %2828 = vmatpush1.xpose.msra.mxu0 0.0
  %2829 = vmatprep.subr.mxu0 0.0
  %2830 = vmatpush1.xpose.msra.mxu0 0.0
  %2831 = vmatprep.subr.mxu0 0.0
  %2832 = vmatpush1.xpose.msra.mxu0 0.0
  %2833 = vmatprep.subr.mxu0 0.0
  %2834 = vmatpush1.xpose.msra.mxu0 0.0
  %2835 = vmatprep.mubr.f32.mxu0 0.0
  %2836 = vmatmul.mubr.f32.gmra.mrb[0].mxu0 %v2767
  %v2837 = vpop.f32.mrb[0].mxu0
  %v2838 = vadd.f32 0.0, %v2837
  %v2839 = vpop.f32.mrb[0].mxu0
  %2840 = vdwg.mxu0
  %v2841 = vsel %vm150, %v2760, -inf
  %2842 = vmax.xlane.f32.xlu0 %v2841
  %v2843 = vpop.xlane.xlu0 %2842
  %v2844 = vsel %vm150, %v2838, -inf
  %2845 = vmax.xlane.f32.xlu0 %v2844
  %v2846 = vpop.xlane.xlu0 %2845
  %v2847 = vsub.f32 %v2760, %v2843
  %v2848 = vsub.f32 %v2838, %v2846
  %v2849 = vmul.f32 %v2847, 1.442695
  %v2850 = vpow.pop %v2849
  %v2851 = vmul.f32 %v2848, 1.442695
  %v2852 = vpow.pop %v2851
  %v2853 = vsel %vm150, %v2850, 0.0
  %2854 = vadd.xlane.f32.xlu0 %v2853
  %v2855 = vpop.xlane.xlu0 %2854
  %v2856 = vsel %vm150, %v2852, 0.0
  %2857 = vadd.xlane.f32.xlu0 %v2856
  %v2858 = vpop.xlane.xlu0 %2857
  %v2859 = vrcp.pop %v2855
  %v2860 = vrcp.pop %v2858
  %v2861 = vmul.f32 %v2850, %v2859
  %v2862 = vmul.f32 %v2852, %v2860
  %2863 = vrot.lane.b32.xlu0 %v2015, 48
  %v2864 = vpop.permute.xlu0 %2863
  %v2867 = vsel %vm150, %v2861, 0
  %2869 = vmatprep.subr.mxu0 0.0
  %2870 = vmatpush1.msra.mxu0 %v2864
  %2871 = vmatprep.subr.mxu0 0.0
  %2872 = vmatpush1.msra.mxu0 0.0
  %2873 = vmatprep.subr.mxu0 0.0
  %2874 = vmatpush1.msra.mxu0 0.0
  %2875 = vmatprep.subr.mxu0 0.0
  %2876 = vmatpush1.msra.mxu0 0.0
  %2877 = vmatprep.subr.mxu0 0.0
  %2878 = vmatpush1.msra.mxu0 0.0
  %2879 = vmatprep.subr.mxu0 0.0
  %2880 = vmatpush1.msra.mxu0 0.0
  %2881 = vmatprep.subr.mxu0 0.0
  %2882 = vmatpush1.msra.mxu0 0.0
  %2883 = vmatprep.subr.mxu0 0.0
  %2884 = vmatpush1.msra.mxu0 0.0
  %2885 = vmatprep.subr.mxu0 0.0
  %2886 = vmatpush1.msra.mxu0 0.0
  %2887 = vmatprep.subr.mxu0 0.0
  %2888 = vmatpush1.msra.mxu0 0.0
  %2889 = vmatprep.subr.mxu0 0.0
  %2890 = vmatpush1.msra.mxu0 0.0
  %2891 = vmatprep.subr.mxu0 0.0
  %2892 = vmatpush1.msra.mxu0 0.0
  %2893 = vmatprep.subr.mxu0 0.0
  %2894 = vmatpush1.msra.mxu0 0.0
  %2895 = vmatprep.subr.mxu0 0.0
  %2896 = vmatpush1.msra.mxu0 0.0
  %2897 = vmatprep.subr.mxu0 0.0
  %2898 = vmatpush1.msra.mxu0 0.0
  %2899 = vmatprep.subr.mxu0 0.0
  %2900 = vmatpush1.msra.mxu0 0.0
  %2901 = vmatprep.subr.mxu0 0.0
  %2902 = vmatpush1.msra.mxu0 0.0
  %2903 = vmatprep.subr.mxu0 0.0
  %2904 = vmatpush1.msra.mxu0 0.0
  %2905 = vmatprep.subr.mxu0 0.0
  %2906 = vmatpush1.msra.mxu0 0.0
  %2907 = vmatprep.subr.mxu0 0.0
  %2908 = vmatpush1.msra.mxu0 0.0
  %2909 = vmatprep.subr.mxu0 0.0
  %2910 = vmatpush1.msra.mxu0 0.0
  %2911 = vmatprep.subr.mxu0 0.0
  %2912 = vmatpush1.msra.mxu0 0.0
  %2913 = vmatprep.subr.mxu0 0.0
  %2914 = vmatpush1.msra.mxu0 0.0
  %2915 = vmatprep.subr.mxu0 0.0
  %2916 = vmatpush1.msra.mxu0 0.0
  %2917 = vmatprep.subr.mxu0 0.0
  %2918 = vmatpush1.msra.mxu0 0.0
  %2919 = vmatprep.subr.mxu0 0.0
  %2920 = vmatpush1.msra.mxu0 0.0
  %2921 = vmatprep.subr.mxu0 0.0
  %2922 = vmatpush1.msra.mxu0 0.0
  %2923 = vmatprep.subr.mxu0 0.0
  %2924 = vmatpush1.msra.mxu0 0.0
  %2925 = vmatprep.subr.mxu0 0.0
  %2926 = vmatpush1.msra.mxu0 0.0
  %2927 = vmatprep.subr.mxu0 0.0
  %2928 = vmatpush1.msra.mxu0 0.0
  %2929 = vmatprep.subr.mxu0 0.0
  %2930 = vmatpush1.msra.mxu0 0.0
  %2931 = vmatprep.subr.mxu0 0.0
  %2932 = vmatpush1.msra.mxu0 0.0
  %2933 = vmatprep.mubr.f32.mxu0 0.0
  %2934 = vmatmul.mubr.f32.gmra.mrb[0].mxu0 %v2867
  %v2935 = vpop.f32.mrb[0].mxu0
  %v2936 = vadd.f32 0.0, %v2935
  %v2937 = vpop.f32.mrb[0].mxu0
  %2938 = vdwg.mxu0
  %2939 = vrot.lane.b32.xlu0 %v2020, 48
  %v2940 = vpop.permute.xlu0 %2939
  %v2943 = vsel %vm150, %v2862, 0
  %2945 = vmatprep.subr.mxu0 0.0
  %2946 = vmatpush1.msra.mxu0 %v2940
  %2947 = vmatprep.subr.mxu0 0.0
  %2948 = vmatpush1.msra.mxu0 0.0
  %2949 = vmatprep.subr.mxu0 0.0
  %2950 = vmatpush1.msra.mxu0 0.0
  %2951 = vmatprep.subr.mxu0 0.0
  %2952 = vmatpush1.msra.mxu0 0.0
  %2953 = vmatprep.subr.mxu0 0.0
  %2954 = vmatpush1.msra.mxu0 0.0
  %2955 = vmatprep.subr.mxu0 0.0
  %2956 = vmatpush1.msra.mxu0 0.0
  %2957 = vmatprep.subr.mxu0 0.0
  %2958 = vmatpush1.msra.mxu0 0.0
  %2959 = vmatprep.subr.mxu0 0.0
  %2960 = vmatpush1.msra.mxu0 0.0
  %2961 = vmatprep.subr.mxu0 0.0
  %2962 = vmatpush1.msra.mxu0 0.0
  %2963 = vmatprep.subr.mxu0 0.0
  %2964 = vmatpush1.msra.mxu0 0.0
  %2965 = vmatprep.subr.mxu0 0.0
  %2966 = vmatpush1.msra.mxu0 0.0
  %2967 = vmatprep.subr.mxu0 0.0
  %2968 = vmatpush1.msra.mxu0 0.0
  %2969 = vmatprep.subr.mxu0 0.0
  %2970 = vmatpush1.msra.mxu0 0.0
  %2971 = vmatprep.subr.mxu0 0.0
  %2972 = vmatpush1.msra.mxu0 0.0
  %2973 = vmatprep.subr.mxu0 0.0
  %2974 = vmatpush1.msra.mxu0 0.0
  %2975 = vmatprep.subr.mxu0 0.0
  %2976 = vmatpush1.msra.mxu0 0.0
  %2977 = vmatprep.subr.mxu0 0.0
  %2978 = vmatpush1.msra.mxu0 0.0
  %2979 = vmatprep.subr.mxu0 0.0
  %2980 = vmatpush1.msra.mxu0 0.0
  %2981 = vmatprep.subr.mxu0 0.0
  %2982 = vmatpush1.msra.mxu0 0.0
  %2983 = vmatprep.subr.mxu0 0.0
  %2984 = vmatpush1.msra.mxu0 0.0
  %2985 = vmatprep.subr.mxu0 0.0
  %2986 = vmatpush1.msra.mxu0 0.0
  %2987 = vmatprep.subr.mxu0 0.0
  %2988 = vmatpush1.msra.mxu0 0.0
  %2989 = vmatprep.subr.mxu0 0.0
  %2990 = vmatpush1.msra.mxu0 0.0
  %2991 = vmatprep.subr.mxu0 0.0
  %2992 = vmatpush1.msra.mxu0 0.0
  %2993 = vmatprep.subr.mxu0 0.0
  %2994 = vmatpush1.msra.mxu0 0.0
  %2995 = vmatprep.subr.mxu0 0.0
  %2996 = vmatpush1.msra.mxu0 0.0
  %2997 = vmatprep.subr.mxu0 0.0
  %2998 = vmatpush1.msra.mxu0 0.0
  %2999 = vmatprep.subr.mxu0 0.0
  %3000 = vmatpush1.msra.mxu0 0.0
  %3001 = vmatprep.subr.mxu0 0.0
  %3002 = vmatpush1.msra.mxu0 0.0
  %3003 = vmatprep.subr.mxu0 0.0
  %3004 = vmatpush1.msra.mxu0 0.0
  %3005 = vmatprep.subr.mxu0 0.0
  %3006 = vmatpush1.msra.mxu0 0.0
  %3007 = vmatprep.subr.mxu0 0.0
  %3008 = vmatpush1.msra.mxu0 0.0
  %3009 = vmatprep.mubr.f32.mxu0 0.0
  %3010 = vmatmul.mubr.f32.gmra.mrb[0].mxu0 %v2943
  %v3011 = vpop.f32.mrb[0].mxu0
  %v3012 = vadd.f32 0.0, %v3011
  %v3013 = vpop.f32.mrb[0].mxu0
  %3014 = vdwg.mxu0
  %3015 = vrot.lane.b32.xlu0 %v2023, 104
  %v3016 = vpop.permute.xlu0 %3015
  %3017 = vrot.lane.b32.xlu0 %v2015, 72
  %v3018 = vpop.permute.xlu0 %3017
  %v3019 = vsel %vm150, %v3016, 0
  %v3021 = vsel %vm150, %v3018, 0
  %3023 = vmatprep.subr.mxu0 0.0
  %3024 = vmatpush1.xpose.msra.mxu0 %v3021
  %3025 = vmatprep.subr.mxu0 0.0
  %3026 = vmatpush1.xpose.msra.mxu0 0.0
  %3027 = vmatprep.subr.mxu0 0.0
  %3028 = vmatpush1.xpose.msra.mxu0 0.0
  %3029 = vmatprep.subr.mxu0 0.0
  %3030 = vmatpush1.xpose.msra.mxu0 0.0
  %3031 = vmatprep.subr.mxu0 0.0
  %3032 = vmatpush1.xpose.msra.mxu0 0.0
  %3033 = vmatprep.subr.mxu0 0.0
  %3034 = vmatpush1.xpose.msra.mxu0 0.0
  %3035 = vmatprep.subr.mxu0 0.0
  %3036 = vmatpush1.xpose.msra.mxu0 0.0
  %3037 = vmatprep.subr.mxu0 0.0
  %3038 = vmatpush1.xpose.msra.mxu0 0.0
  %3039 = vmatprep.subr.mxu0 0.0
  %3040 = vmatpush1.xpose.msra.mxu0 0.0
  %3041 = vmatprep.subr.mxu0 0.0
  %3042 = vmatpush1.xpose.msra.mxu0 0.0
  %3043 = vmatprep.subr.mxu0 0.0
  %3044 = vmatpush1.xpose.msra.mxu0 0.0
  %3045 = vmatprep.subr.mxu0 0.0
  %3046 = vmatpush1.xpose.msra.mxu0 0.0
  %3047 = vmatprep.subr.mxu0 0.0
  %3048 = vmatpush1.xpose.msra.mxu0 0.0
  %3049 = vmatprep.subr.mxu0 0.0
  %3050 = vmatpush1.xpose.msra.mxu0 0.0
  %3051 = vmatprep.subr.mxu0 0.0
  %3052 = vmatpush1.xpose.msra.mxu0 0.0
  %3053 = vmatprep.subr.mxu0 0.0
  %3054 = vmatpush1.xpose.msra.mxu0 0.0
  %3055 = vmatprep.subr.mxu0 0.0
  %3056 = vmatpush1.xpose.msra.mxu0 0.0
  %3057 = vmatprep.subr.mxu0 0.0
  %3058 = vmatpush1.xpose.msra.mxu0 0.0
  %3059 = vmatprep.subr.mxu0 0.0
  %3060 = vmatpush1.xpose.msra.mxu0 0.0
  %3061 = vmatprep.subr.mxu0 0.0
  %3062 = vmatpush1.xpose.msra.mxu0 0.0
  %3063 = vmatprep.subr.mxu0 0.0
  %3064 = vmatpush1.xpose.msra.mxu0 0.0
  %3065 = vmatprep.subr.mxu0 0.0
  %3066 = vmatpush1.xpose.msra.mxu0 0.0
  %3067 = vmatprep.subr.mxu0 0.0
  %3068 = vmatpush1.xpose.msra.mxu0 0.0
  %3069 = vmatprep.subr.mxu0 0.0
  %3070 = vmatpush1.xpose.msra.mxu0 0.0
  %3071 = vmatprep.subr.mxu0 0.0
  %3072 = vmatpush1.xpose.msra.mxu0 0.0
  %3073 = vmatprep.subr.mxu0 0.0
  %3074 = vmatpush1.xpose.msra.mxu0 0.0
  %3075 = vmatprep.subr.mxu0 0.0
  %3076 = vmatpush1.xpose.msra.mxu0 0.0
  %3077 = vmatprep.subr.mxu0 0.0
  %3078 = vmatpush1.xpose.msra.mxu0 0.0
  %3079 = vmatprep.subr.mxu0 0.0
  %3080 = vmatpush1.xpose.msra.mxu0 0.0
  %3081 = vmatprep.subr.mxu0 0.0
  %3082 = vmatpush1.xpose.msra.mxu0 0.0
  %3083 = vmatprep.subr.mxu0 0.0
  %3084 = vmatpush1.xpose.msra.mxu0 0.0
  %3085 = vmatprep.subr.mxu0 0.0
  %3086 = vmatpush1.xpose.msra.mxu0 0.0
  %3087 = vmatprep.mubr.f32.mxu0 0.0
  %3088 = vmatmul.mubr.f32.gmra.mrb[0].mxu0 %v3019
  %v3089 = vpop.f32.mrb[0].mxu0
  %v3090 = vadd.f32 0.0, %v3089
  %v3091 = vpop.f32.mrb[0].mxu0
  %3092 = vdwg.mxu0
  %3093 = vrot.lane.b32.xlu0 %v2024, 104
  %v3094 = vpop.permute.xlu0 %3093
  %3095 = vrot.lane.b32.xlu0 %v2020, 72
  %v3096 = vpop.permute.xlu0 %3095
  %v3097 = vsel %vm150, %v3094, 0
  %v3099 = vsel %vm150, %v3096, 0
  %3101 = vmatprep.subr.mxu0 0.0
  %3102 = vmatpush1.xpose.msra.mxu0 %v3099
  %3103 = vmatprep.subr.mxu0 0.0
  %3104 = vmatpush1.xpose.msra.mxu0 0.0
  %3105 = vmatprep.subr.mxu0 0.0
  %3106 = vmatpush1.xpose.msra.mxu0 0.0
  %3107 = vmatprep.subr.mxu0 0.0
  %3108 = vmatpush1.xpose.msra.mxu0 0.0
  %3109 = vmatprep.subr.mxu0 0.0
  %3110 = vmatpush1.xpose.msra.mxu0 0.0
  %3111 = vmatprep.subr.mxu0 0.0
  %3112 = vmatpush1.xpose.msra.mxu0 0.0
  %3113 = vmatprep.subr.mxu0 0.0
  %3114 = vmatpush1.xpose.msra.mxu0 0.0
  %3115 = vmatprep.subr.mxu0 0.0
  %3116 = vmatpush1.xpose.msra.mxu0 0.0
  %3117 = vmatprep.subr.mxu0 0.0
  %3118 = vmatpush1.xpose.msra.mxu0 0.0
  %3119 = vmatprep.subr.mxu0 0.0
  %3120 = vmatpush1.xpose.msra.mxu0 0.0
  %3121 = vmatprep.subr.mxu0 0.0
  %3122 = vmatpush1.xpose.msra.mxu0 0.0
  %3123 = vmatprep.subr.mxu0 0.0
  %3124 = vmatpush1.xpose.msra.mxu0 0.0
  %3125 = vmatprep.subr.mxu0 0.0
  %3126 = vmatpush1.xpose.msra.mxu0 0.0
  %3127 = vmatprep.subr.mxu0 0.0
  %3128 = vmatpush1.xpose.msra.mxu0 0.0
  %3129 = vmatprep.subr.mxu0 0.0
  %3130 = vmatpush1.xpose.msra.mxu0 0.0
  %3131 = vmatprep.subr.mxu0 0.0
  %3132 = vmatpush1.xpose.msra.mxu0 0.0
  %3133 = vmatprep.subr.mxu0 0.0
  %3134 = vmatpush1.xpose.msra.mxu0 0.0
  %3135 = vmatprep.subr.mxu0 0.0
  %3136 = vmatpush1.xpose.msra.mxu0 0.0
  %3137 = vmatprep.subr.mxu0 0.0
  %3138 = vmatpush1.xpose.msra.mxu0 0.0
  %3139 = vmatprep.subr.mxu0 0.0
  %3140 = vmatpush1.xpose.msra.mxu0 0.0
  %3141 = vmatprep.subr.mxu0 0.0
  %3142 = vmatpush1.xpose.msra.mxu0 0.0
  %3143 = vmatprep.subr.mxu0 0.0
  %3144 = vmatpush1.xpose.msra.mxu0 0.0
  %3145 = vmatprep.subr.mxu0 0.0
  %3146 = vmatpush1.xpose.msra.mxu0 0.0
  %3147 = vmatprep.subr.mxu0 0.0
  %3148 = vmatpush1.xpose.msra.mxu0 0.0
  %3149 = vmatprep.subr.mxu0 0.0
  %3150 = vmatpush1.xpose.msra.mxu0 0.0
  %3151 = vmatprep.subr.mxu0 0.0
  %3152 = vmatpush1.xpose.msra.mxu0 0.0
  %3153 = vmatprep.subr.mxu0 0.0
  %3154 = vmatpush1.xpose.msra.mxu0 0.0
  %3155 = vmatprep.subr.mxu0 0.0
  %3156 = vmatpush1.xpose.msra.mxu0 0.0
  %3157 = vmatprep.subr.mxu0 0.0
  %3158 = vmatpush1.xpose.msra.mxu0 0.0
  %3159 = vmatprep.subr.mxu0 0.0
  %3160 = vmatpush1.xpose.msra.mxu0 0.0
  %3161 = vmatprep.subr.mxu0 0.0
  %3162 = vmatpush1.xpose.msra.mxu0 0.0
  %3163 = vmatprep.subr.mxu0 0.0
  %3164 = vmatpush1.xpose.msra.mxu0 0.0
  %3165 = vmatprep.mubr.f32.mxu0 0.0
  %3166 = vmatmul.mubr.f32.gmra.mrb[0].mxu0 %v3097
  %v3167 = vpop.f32.mrb[0].mxu0
  %v3168 = vadd.f32 0.0, %v3167
  %v3169 = vpop.f32.mrb[0].mxu0
  %3170 = vdwg.mxu0
  %v3171 = vsel %vm150, %v3090, -inf
  %3172 = vmax.xlane.f32.xlu0 %v3171
  %v3173 = vpop.xlane.xlu0 %3172
  %v3174 = vsel %vm150, %v3168, -inf
  %3175 = vmax.xlane.f32.xlu0 %v3174
  %v3176 = vpop.xlane.xlu0 %3175
  %v3177 = vsub.f32 %v3090, %v3173
  %v3178 = vsub.f32 %v3168, %v3176
  %v3179 = vmul.f32 %v3177, 1.442695
  %v3180 = vpow.pop %v3179
  %v3181 = vmul.f32 %v3178, 1.442695
  %v3182 = vpow.pop %v3181
  %v3183 = vsel %vm150, %v3180, 0.0
  %3184 = vadd.xlane.f32.xlu0 %v3183
  %v3185 = vpop.xlane.xlu0 %3184
  %v3186 = vsel %vm150, %v3182, 0.0
  %3187 = vadd.xlane.f32.xlu0 %v3186
  %v3188 = vpop.xlane.xlu0 %3187
  %v3189 = vrcp.pop %v3185
  %v3190 = vrcp.pop %v3188
  %v3191 = vmul.f32 %v3180, %v3189
  %v3192 = vmul.f32 %v3182, %v3190
  %3193 = vrot.lane.b32.xlu0 %v2015, 40
  %v3194 = vpop.permute.xlu0 %3193
  %v3197 = vsel %vm150, %v3191, 0
  %3199 = vmatprep.subr.mxu0 0.0
  %3200 = vmatpush1.msra.mxu0 %v3194
  %3201 = vmatprep.subr.mxu0 0.0
  %3202 = vmatpush1.msra.mxu0 0.0
  %3203 = vmatprep.subr.mxu0 0.0
  %3204 = vmatpush1.msra.mxu0 0.0
  %3205 = vmatprep.subr.mxu0 0.0
  %3206 = vmatpush1.msra.mxu0 0.0
  %3207 = vmatprep.subr.mxu0 0.0
  %3208 = vmatpush1.msra.mxu0 0.0
  %3209 = vmatprep.subr.mxu0 0.0
  %3210 = vmatpush1.msra.mxu0 0.0
  %3211 = vmatprep.subr.mxu0 0.0
  %3212 = vmatpush1.msra.mxu0 0.0
  %3213 = vmatprep.subr.mxu0 0.0
  %3214 = vmatpush1.msra.mxu0 0.0
  %3215 = vmatprep.subr.mxu0 0.0
  %3216 = vmatpush1.msra.mxu0 0.0
  %3217 = vmatprep.subr.mxu0 0.0
  %3218 = vmatpush1.msra.mxu0 0.0
  %3219 = vmatprep.subr.mxu0 0.0
  %3220 = vmatpush1.msra.mxu0 0.0
  %3221 = vmatprep.subr.mxu0 0.0
  %3222 = vmatpush1.msra.mxu0 0.0
  %3223 = vmatprep.subr.mxu0 0.0
  %3224 = vmatpush1.msra.mxu0 0.0
  %3225 = vmatprep.subr.mxu0 0.0
  %3226 = vmatpush1.msra.mxu0 0.0
  %3227 = vmatprep.subr.mxu0 0.0
  %3228 = vmatpush1.msra.mxu0 0.0
  %3229 = vmatprep.subr.mxu0 0.0
  %3230 = vmatpush1.msra.mxu0 0.0
  %3231 = vmatprep.subr.mxu0 0.0
  %3232 = vmatpush1.msra.mxu0 0.0
  %3233 = vmatprep.subr.mxu0 0.0
  %3234 = vmatpush1.msra.mxu0 0.0
  %3235 = vmatprep.subr.mxu0 0.0
  %3236 = vmatpush1.msra.mxu0 0.0
  %3237 = vmatprep.subr.mxu0 0.0
  %3238 = vmatpush1.msra.mxu0 0.0
  %3239 = vmatprep.subr.mxu0 0.0
  %3240 = vmatpush1.msra.mxu0 0.0
  %3241 = vmatprep.subr.mxu0 0.0
  %3242 = vmatpush1.msra.mxu0 0.0
  %3243 = vmatprep.subr.mxu0 0.0
  %3244 = vmatpush1.msra.mxu0 0.0
  %3245 = vmatprep.subr.mxu0 0.0
  %3246 = vmatpush1.msra.mxu0 0.0
  %3247 = vmatprep.subr.mxu0 0.0
  %3248 = vmatpush1.msra.mxu0 0.0
  %3249 = vmatprep.subr.mxu0 0.0
  %3250 = vmatpush1.msra.mxu0 0.0
  %3251 = vmatprep.subr.mxu0 0.0
  %3252 = vmatpush1.msra.mxu0 0.0
  %3253 = vmatprep.subr.mxu0 0.0
  %3254 = vmatpush1.msra.mxu0 0.0
  %3255 = vmatprep.subr.mxu0 0.0
  %3256 = vmatpush1.msra.mxu0 0.0
  %3257 = vmatprep.subr.mxu0 0.0
  %3258 = vmatpush1.msra.mxu0 0.0
  %3259 = vmatprep.subr.mxu0 0.0
  %3260 = vmatpush1.msra.mxu0 0.0
  %3261 = vmatprep.subr.mxu0 0.0
  %3262 = vmatpush1.msra.mxu0 0.0
  %3263 = vmatprep.mubr.f32.mxu0 0.0
  %3264 = vmatmul.mubr.f32.gmra.mrb[0].mxu0 %v3197
  %v3265 = vpop.f32.mrb[0].mxu0
  %v3266 = vadd.f32 0.0, %v3265
  %v3267 = vpop.f32.mrb[0].mxu0
  %3268 = vdwg.mxu0
  %3269 = vrot.lane.b32.xlu0 %v2020, 40
  %v3270 = vpop.permute.xlu0 %3269
  %v3273 = vsel %vm150, %v3192, 0
  %3275 = vmatprep.subr.mxu0 0.0
  %3276 = vmatpush1.msra.mxu0 %v3270
  %3277 = vmatprep.subr.mxu0 0.0
  %3278 = vmatpush1.msra.mxu0 0.0
  %3279 = vmatprep.subr.mxu0 0.0
  %3280 = vmatpush1.msra.mxu0 0.0
  %3281 = vmatprep.subr.mxu0 0.0
  %3282 = vmatpush1.msra.mxu0 0.0
  %3283 = vmatprep.subr.mxu0 0.0
  %3284 = vmatpush1.msra.mxu0 0.0
  %3285 = vmatprep.subr.mxu0 0.0
  %3286 = vmatpush1.msra.mxu0 0.0
  %3287 = vmatprep.subr.mxu0 0.0
  %3288 = vmatpush1.msra.mxu0 0.0
  %3289 = vmatprep.subr.mxu0 0.0
  %3290 = vmatpush1.msra.mxu0 0.0
  %3291 = vmatprep.subr.mxu0 0.0
  %3292 = vmatpush1.msra.mxu0 0.0
  %3293 = vmatprep.subr.mxu0 0.0
  %3294 = vmatpush1.msra.mxu0 0.0
  %3295 = vmatprep.subr.mxu0 0.0
  %3296 = vmatpush1.msra.mxu0 0.0
  %3297 = vmatprep.subr.mxu0 0.0
  %3298 = vmatpush1.msra.mxu0 0.0
  %3299 = vmatprep.subr.mxu0 0.0
  %3300 = vmatpush1.msra.mxu0 0.0
  %3301 = vmatprep.subr.mxu0 0.0
  %3302 = vmatpush1.msra.mxu0 0.0
  %3303 = vmatprep.subr.mxu0 0.0
  %3304 = vmatpush1.msra.mxu0 0.0
  %3305 = vmatprep.subr.mxu0 0.0
  %3306 = vmatpush1.msra.mxu0 0.0
  %3307 = vmatprep.subr.mxu0 0.0
  %3308 = vmatpush1.msra.mxu0 0.0
  %3309 = vmatprep.subr.mxu0 0.0
  %3310 = vmatpush1.msra.mxu0 0.0
  %3311 = vmatprep.subr.mxu0 0.0
  %3312 = vmatpush1.msra.mxu0 0.0
  %3313 = vmatprep.subr.mxu0 0.0
  %3314 = vmatpush1.msra.mxu0 0.0
  %3315 = vmatprep.subr.mxu0 0.0
  %3316 = vmatpush1.msra.mxu0 0.0
  %3317 = vmatprep.subr.mxu0 0.0
  %3318 = vmatpush1.msra.mxu0 0.0
  %3319 = vmatprep.subr.mxu0 0.0
  %3320 = vmatpush1.msra.mxu0 0.0
  %3321 = vmatprep.subr.mxu0 0.0
  %3322 = vmatpush1.msra.mxu0 0.0
  %3323 = vmatprep.subr.mxu0 0.0
  %3324 = vmatpush1.msra.mxu0 0.0
  %3325 = vmatprep.subr.mxu0 0.0
  %3326 = vmatpush1.msra.mxu0 0.0
  %3327 = vmatprep.subr.mxu0 0.0
  %3328 = vmatpush1.msra.mxu0 0.0
  %3329 = vmatprep.subr.mxu0 0.0
  %3330 = vmatpush1.msra.mxu0 0.0
  %3331 = vmatprep.subr.mxu0 0.0
  %3332 = vmatpush1.msra.mxu0 0.0
  %3333 = vmatprep.subr.mxu0 0.0
  %3334 = vmatpush1.msra.mxu0 0.0
  %3335 = vmatprep.subr.mxu0 0.0
  %3336 = vmatpush1.msra.mxu0 0.0
  %3337 = vmatprep.subr.mxu0 0.0
  %3338 = vmatpush1.msra.mxu0 0.0
  %3339 = vmatprep.mubr.f32.mxu0 0.0
  %3340 = vmatmul.mubr.f32.gmra.mrb[0].mxu0 %v3273
  %v3341 = vpop.f32.mrb[0].mxu0
  %v3342 = vadd.f32 0.0, %v3341
  %v3343 = vpop.f32.mrb[0].mxu0
  %3344 = vdwg.mxu0
  %3347 = vrot.lane.b32.xlu0 %v2606, 8
  %v3348 = vpop.permute.xlu0 %3347
  %3349 = vrot.lane.b32.xlu0 %v2682, 8
  %v3350 = vpop.permute.xlu0 %3349
  %3355 = vrot.lane.b32.xlu0 %v2936, 16
  %v3356 = vpop.permute.xlu0 %3355
  %3357 = vrot.lane.b32.xlu0 %v3012, 16
  %v3358 = vpop.permute.xlu0 %3357
  %3363 = vrot.lane.b32.xlu0 %v3266, 24
  %v3364 = vpop.permute.xlu0 %3363
  %3365 = vrot.lane.b32.xlu0 %v3342, 24
  %v3366 = vpop.permute.xlu0 %3365
  %v3369 = vsel %vm150, %v2276, %v3348
  %v3370 = vsel %vm150, %v2352, %v3350
  %v3371 = vsel %vm1494, %v3369, %v3356
  %v3372 = vsel %vm1494, %v3370, %v3358
  %v3373 = vsel %vm1497, %v3371, %v3364
  %v3374 = vsel %vm1497, %v3372, %v3366
  %s3375 = scalar_lea.vmem %s3, 32
  %v3376 = vld [vmem:[%s3375] sm:$0xff]
  %v3377 = vld [vmem:[%s3375 + $0x8] sm:$0xff]
  %v3378 = vld [vmem:[%s3375 + $0x10] sm:$0xff]
  %v3379 = vld [vmem:[%s3375 + $0x18] sm:$0xff]
  %s3380 = scalar_lea.vmem %s4, 1
  %v3381 = vld [vmem:[%s3380] sm:$0x1]
  %v3383 = vlaneseq
  %v3384 = vshrl.u32 %v3383, 7
  %v3385 = vsub.s32 0, %v3384
  %v3386 = vrot.slane %v3381, %v3385
  %v3389 = vsel %vm63, %v3373, 0
  %v3392 = vsel %vm63, %v3374, 0
  %3394 = vmatprep.subr.mxu0 0.0
  %3395 = vmatpush1.msra.mxu0 %v3376
  %3396 = vmatprep.subr.mxu0 0.0
  %3397 = vmatpush1.msra.mxu0 %v3377
  %3398 = vmatprep.subr.mxu0 0.0
  %3399 = vmatpush1.msra.mxu0 %v3378
  %3400 = vmatprep.subr.mxu0 0.0
  %3401 = vmatpush1.msra.mxu0 %v3379
  %3402 = vmatprep.subr.mxu0 0.0
  %3403 = vmatpush1.msra.mxu0 0.0
  %3404 = vmatprep.subr.mxu0 0.0
  %3405 = vmatpush1.msra.mxu0 0.0
  %3406 = vmatprep.subr.mxu0 0.0
  %3407 = vmatpush1.msra.mxu0 0.0
  %3408 = vmatprep.subr.mxu0 0.0
  %3409 = vmatpush1.msra.mxu0 0.0
  %3410 = vmatprep.subr.mxu0 0.0
  %3411 = vmatpush1.msra.mxu0 0.0
  %3412 = vmatprep.subr.mxu0 0.0
  %3413 = vmatpush1.msra.mxu0 0.0
  %3414 = vmatprep.subr.mxu0 0.0
  %3415 = vmatpush1.msra.mxu0 0.0
  %3416 = vmatprep.subr.mxu0 0.0
  %3417 = vmatpush1.msra.mxu0 0.0
  %3418 = vmatprep.subr.mxu0 0.0
  %3419 = vmatpush1.msra.mxu0 0.0
  %3420 = vmatprep.subr.mxu0 0.0
  %3421 = vmatpush1.msra.mxu0 0.0
  %3422 = vmatprep.subr.mxu0 0.0
  %3423 = vmatpush1.msra.mxu0 0.0
  %3424 = vmatprep.subr.mxu0 0.0
  %3425 = vmatpush1.msra.mxu0 0.0
  %3426 = vmatprep.subr.mxu0 0.0
  %3427 = vmatpush1.msra.mxu0 0.0
  %3428 = vmatprep.subr.mxu0 0.0
  %3429 = vmatpush1.msra.mxu0 0.0
  %3430 = vmatprep.subr.mxu0 0.0
  %3431 = vmatpush1.msra.mxu0 0.0
  %3432 = vmatprep.subr.mxu0 0.0
  %3433 = vmatpush1.msra.mxu0 0.0
  %3434 = vmatprep.subr.mxu0 0.0
  %3435 = vmatpush1.msra.mxu0 0.0
  %3436 = vmatprep.subr.mxu0 0.0
  %3437 = vmatpush1.msra.mxu0 0.0
  %3438 = vmatprep.subr.mxu0 0.0
  %3439 = vmatpush1.msra.mxu0 0.0
  %3440 = vmatprep.subr.mxu0 0.0
  %3441 = vmatpush1.msra.mxu0 0.0
  %3442 = vmatprep.subr.mxu0 0.0
  %3443 = vmatpush1.msra.mxu0 0.0
  %3444 = vmatprep.subr.mxu0 0.0
  %3445 = vmatpush1.msra.mxu0 0.0
  %3446 = vmatprep.subr.mxu0 0.0
  %3447 = vmatpush1.msra.mxu0 0.0
  %3448 = vmatprep.subr.mxu0 0.0
  %3449 = vmatpush1.msra.mxu0 0.0
  %3450 = vmatprep.subr.mxu0 0.0
  %3451 = vmatpush1.msra.mxu0 0.0
  %3452 = vmatprep.subr.mxu0 0.0
  %3453 = vmatpush1.msra.mxu0 0.0
  %3454 = vmatprep.subr.mxu0 0.0
  %3455 = vmatpush1.msra.mxu0 0.0
  %3456 = vmatprep.subr.mxu0 0.0
  %3457 = vmatpush1.msra.mxu0 0.0
  %3458 = vmatprep.mubr.f32.mxu0 0.0
  %3459 = vmatmul.mubr.f32.gmra.mrb[0].mxu0 %v3389
  %v3460 = vpop.f32.mrb[0].mxu0
  %v3461 = vadd.f32 %v3386, %v3460
  %v3462 = vpop.f32.mrb[0].mxu0
  %3463 = vmatprep.mubr.f32.mxu0 0.0
  %3464 = vmatmul.mubr.f32.gmra.mrb[0].mxu0 %v3392
  %v3465 = vpop.f32.mrb[0].mxu0
  %v3466 = vadd.f32 %v3386, %v3465
  %v3467 = vpop.f32.mrb[0].mxu0
  %3468 = vdwg.mxu0
  %v3469 = vadd.f32 %v1927, %v3461
  %v3470 = vadd.f32 %v1928, %v3466
  %s3471 = scalar_lea.vmem %s5, 1
  %v3472 = vld [vmem:[%s3471] sm:$0x1]
  %s3473 = scalar_lea.vmem %s6, 1
  %v3474 = vld [vmem:[%s3473] sm:$0x1]
  %v3475 = vsel %vm63, %v3469, 0.0
  %3476 = vadd.xlane.f32.xlu0 %v3475
  %v3477 = vpop.xlane.xlu0 %3476
  %v3478 = vsel %vm63, %v3470, 0.0
  %3479 = vadd.xlane.f32.xlu0 %v3478
  %v3480 = vpop.xlane.xlu0 %3479
  %v3481 = vmul.f32 %v3477, %v1602
  %v3482 = vmul.f32 %v3480, %v1602
  %v3483 = vsub.f32 %v3469, %v3481
  %v3484 = vsub.f32 %v3470, %v3482
  %v3485 = vmul.f32 %v3483, %v3483
  %v3486 = vmul.f32 %v3484, %v3484
  %v3487 = vsel %vm63, %v3485, 0.0
  %3488 = vadd.xlane.f32.xlu0 %v3487
  %v3489 = vpop.xlane.xlu0 %3488
  %v3490 = vsel %vm63, %v3486, 0.0
  %3491 = vadd.xlane.f32.xlu0 %v3490
  %v3492 = vpop.xlane.xlu0 %3491
  %v3493 = vmul.f32 %v3489, %v1602
  %v3494 = vmul.f32 %v3492, %v1602
  %v3495 = vadd.f32 %v3493, 1e-05
  %v3496 = vadd.f32 %v3494, 1e-05
  %v3497 = vrsqrt.pop %v3495
  %v3498 = vrsqrt.pop %v3496
  %v3499 = vmul.f32 %v3483, %v3497
  %v3500 = vmul.f32 %v3484, %v3498
  %v3502 = vlaneseq
  %v3503 = vshrl.u32 %v3502, 7
  %v3504 = vsub.s32 0, %v3503
  %v3505 = vrot.slane %v3472, %v3504
  %v3507 = vmul.f32 %v3499, %v3505
  %v3508 = vmul.f32 %v3500, %v3505
  %v3510 = vlaneseq
  %v3511 = vshrl.u32 %v3510, 7
  %v3512 = vsub.s32 0, %v3511
  %v3513 = vrot.slane %v3474, %v3512
  %v3515 = vadd.f32 %v3507, %v3513
  %v3516 = vadd.f32 %v3508, %v3513
  %s3517 = scalar_lea.vmem %s7, 32
  %v3518 = vld [vmem:[%s3517] sm:$0xff]
  %v3519 = vld [vmem:[%s3517 + $0x8] sm:$0xff]
  %v3520 = vld [vmem:[%s3517 + $0x10] sm:$0xff]
  %v3521 = vld [vmem:[%s3517 + $0x18] sm:$0xff]
  %s3522 = scalar_lea.vmem %s8, 1
  %v3523 = vld [vmem:[%s3522] sm:$0x1]
  %v3525 = vlaneseq
  %v3526 = vshrl.u32 %v3525, 7
  %v3527 = vsub.s32 0, %v3526
  %v3528 = vrot.slane %v3523, %v3527
  %v3531 = vsel %vm63, %v3515, 0
  %v3534 = vsel %vm63, %v3516, 0
  %3536 = vmatprep.subr.mxu0 0.0
  %3537 = vmatpush1.msra.mxu0 %v3518
  %3538 = vmatprep.subr.mxu0 0.0
  %3539 = vmatpush1.msra.mxu0 %v3519
  %3540 = vmatprep.subr.mxu0 0.0
  %3541 = vmatpush1.msra.mxu0 %v3520
  %3542 = vmatprep.subr.mxu0 0.0
  %3543 = vmatpush1.msra.mxu0 %v3521
  %3544 = vmatprep.subr.mxu0 0.0
  %3545 = vmatpush1.msra.mxu0 0.0
  %3546 = vmatprep.subr.mxu0 0.0
  %3547 = vmatpush1.msra.mxu0 0.0
  %3548 = vmatprep.subr.mxu0 0.0
  %3549 = vmatpush1.msra.mxu0 0.0
  %3550 = vmatprep.subr.mxu0 0.0
  %3551 = vmatpush1.msra.mxu0 0.0
  %3552 = vmatprep.subr.mxu0 0.0
  %3553 = vmatpush1.msra.mxu0 0.0
  %3554 = vmatprep.subr.mxu0 0.0
  %3555 = vmatpush1.msra.mxu0 0.0
  %3556 = vmatprep.subr.mxu0 0.0
  %3557 = vmatpush1.msra.mxu0 0.0
  %3558 = vmatprep.subr.mxu0 0.0
  %3559 = vmatpush1.msra.mxu0 0.0
  %3560 = vmatprep.subr.mxu0 0.0
  %3561 = vmatpush1.msra.mxu0 0.0
  %3562 = vmatprep.subr.mxu0 0.0
  %3563 = vmatpush1.msra.mxu0 0.0
  %3564 = vmatprep.subr.mxu0 0.0
  %3565 = vmatpush1.msra.mxu0 0.0
  %3566 = vmatprep.subr.mxu0 0.0
  %3567 = vmatpush1.msra.mxu0 0.0
  %3568 = vmatprep.subr.mxu0 0.0
  %3569 = vmatpush1.msra.mxu0 0.0
  %3570 = vmatprep.subr.mxu0 0.0
  %3571 = vmatpush1.msra.mxu0 0.0
  %3572 = vmatprep.subr.mxu0 0.0
  %3573 = vmatpush1.msra.mxu0 0.0
  %3574 = vmatprep.subr.mxu0 0.0
  %3575 = vmatpush1.msra.mxu0 0.0
  %3576 = vmatprep.subr.mxu0 0.0
  %3577 = vmatpush1.msra.mxu0 0.0
  %3578 = vmatprep.subr.mxu0 0.0
  %3579 = vmatpush1.msra.mxu0 0.0
  %3580 = vmatprep.subr.mxu0 0.0
  %3581 = vmatpush1.msra.mxu0 0.0
  %3582 = vmatprep.subr.mxu0 0.0
  %3583 = vmatpush1.msra.mxu0 0.0
  %3584 = vmatprep.subr.mxu0 0.0
  %3585 = vmatpush1.msra.mxu0 0.0
  %3586 = vmatprep.subr.mxu0 0.0
  %3587 = vmatpush1.msra.mxu0 0.0
  %3588 = vmatprep.subr.mxu0 0.0
  %3589 = vmatpush1.msra.mxu0 0.0
  %3590 = vmatprep.subr.mxu0 0.0
  %3591 = vmatpush1.msra.mxu0 0.0
  %3592 = vmatprep.subr.mxu0 0.0
  %3593 = vmatpush1.msra.mxu0 0.0
  %3594 = vmatprep.subr.mxu0 0.0
  %3595 = vmatpush1.msra.mxu0 0.0
  %3596 = vmatprep.subr.mxu0 0.0
  %3597 = vmatpush1.msra.mxu0 0.0
  %3598 = vmatprep.subr.mxu0 0.0
  %3599 = vmatpush1.msra.mxu0 0.0
  %3600 = vmatprep.mubr.f32.mxu0 0.0
  %3601 = vmatmul.mubr.f32.gmra.mrb[0].mxu0 %v3531
  %v3602 = vpop.f32.mrb[0].mxu0
  %v3603 = vadd.f32 %v3528, %v3602
  %v3604 = vpop.f32.mrb[0].mxu0
  %3605 = vmatprep.mubr.f32.mxu0 0.0
  %3606 = vmatmul.mubr.f32.gmra.mrb[0].mxu0 %v3534
  %v3607 = vpop.f32.mrb[0].mxu0
  %v3608 = vadd.f32 %v3528, %v3607
  %v3609 = vpop.f32.mrb[0].mxu0
  %3610 = vdwg.mxu0
  %v3611 = vmul.f32 %v3603, 0.5
  %v3612 = vmul.f32 %v3608, 0.5
  %v3613 = vmul.f32 %v3603, 0.70710677
  %v3614 = vmul.f32 %v3608, 0.70710677
  %vm3615 = vcmp.ge.f32.partialorder %v3613, 0.0
  %vm3616 = vcmp.ge.f32.partialorder %v3614, 0.0
  %v3617 = vsel %vm3615, 1.0, -1.0
  %v3618 = vsel %vm3616, 1.0, -1.0
  %v3619 = vand.u32 2147483647, %v3613
  %v3620 = vand.u32 2147483647, %v3614
  %v3621 = vmul.f32 %v3619, 0.3275911
  %v3622 = vmul.f32 %v3620, 0.3275911
  %v3623 = vadd.f32 %v3621, 1.0
  %v3624 = vadd.f32 %v3622, 1.0
  %v3625 = vrcp.pop %v3623
  %v3626 = vmul.f32 1.0, %v3625
  %v3627 = vrcp.pop %v3624
  %v3628 = vmul.f32 1.0, %v3627
  %v3629 = vmul.f32 %v3626, 1.0614054
  %v3630 = vmul.f32 %v3628, 1.0614054
  %v3631 = vadd.f32 %v3629, -1.4531521
  %v3632 = vadd.f32 %v3630, -1.4531521
  %v3633 = vmul.f32 %v3631, %v3626
  %v3634 = vmul.f32 %v3632, %v3628
  %v3635 = vadd.f32 %v3633, 1.4214138
  %v3636 = vadd.f32 %v3634, 1.4214138
  %v3637 = vmul.f32 %v3635, %v3626
  %v3638 = vmul.f32 %v3636, %v3628
  %v3639 = vadd.f32 %v3637, -0.28449672
  %v3640 = vadd.f32 %v3638, -0.28449672
  %v3641 = vmul.f32 %v3639, %v3626
  %v3642 = vmul.f32 %v3640, %v3628
  %v3643 = vadd.f32 %v3641, 0.2548296
  %v3644 = vadd.f32 %v3642, 0.2548296
  %v3645 = vmul.f32 %v3643, %v3626
  %v3646 = vmul.f32 %v3644, %v3628
  %v3647 = vsub.f32 0.0, %v3619
  %v3648 = vsub.f32 0.0, %v3620
  %v3649 = vmul.f32 %v3647, %v3619
  %v3650 = vmul.f32 %v3648, %v3620
  %v3651 = vmul.f32 %v3649, 1.442695
  %v3652 = vpow.pop %v3651
  %v3653 = vmul.f32 %v3650, 1.442695
  %v3654 = vpow.pop %v3653
  %v3655 = vmul.f32 %v3645, %v3652
  %v3656 = vmul.f32 %v3646, %v3654
  %v3657 = vsub.f32 1.0, %v3655
  %v3658 = vsub.f32 1.0, %v3656
  %v3659 = vmul.f32 %v3617, %v3657
  %v3660 = vmul.f32 %v3618, %v3658
  %v3661 = vadd.f32 %v3659, 1.0
  %v3662 = vadd.f32 %v3660, 1.0
  %v3663 = vmul.f32 %v3611, %v3661
  %v3664 = vmul.f32 %v3612, %v3662
  %s3665 = scalar_lea.vmem %s9, 128
  %v3666 = vld [vmem:[%s3665] sm:$0xff]
  %v3667 = vld [vmem:[%s3665 + $0x8] sm:$0xff]
  %v3668 = vld [vmem:[%s3665 + $0x10] sm:$0xff]
  %v3669 = vld [vmem:[%s3665 + $0x18] sm:$0xff]
  %v3670 = vld [vmem:[%s3665 + $0x20] sm:$0xff]
  %v3671 = vld [vmem:[%s3665 + $0x28] sm:$0xff]
  %v3672 = vld [vmem:[%s3665 + $0x30] sm:$0xff]
  %v3673 = vld [vmem:[%s3665 + $0x38] sm:$0xff]
  %v3674 = vld [vmem:[%s3665 + $0x40] sm:$0xff]
  %v3675 = vld [vmem:[%s3665 + $0x48] sm:$0xff]
  %v3676 = vld [vmem:[%s3665 + $0x50] sm:$0xff]
  %v3677 = vld [vmem:[%s3665 + $0x58] sm:$0xff]
  %v3678 = vld [vmem:[%s3665 + $0x60] sm:$0xff]
  %v3679 = vld [vmem:[%s3665 + $0x68] sm:$0xff]
  %v3680 = vld [vmem:[%s3665 + $0x70] sm:$0xff]
  %v3681 = vld [vmem:[%s3665 + $0x78] sm:$0xff]
  %s3682 = scalar_lea.vmem %s10, 1
  %v3683 = vld [vmem:[%s3682] sm:$0x1]
  %v3685 = vlaneseq
  %v3686 = vshrl.u32 %v3685, 7
  %v3687 = vsub.s32 0, %v3686
  %v3688 = vrot.slane %v3683, %v3687
  %3690 = vmatprep.subr.mxu0 0.0
  %3691 = vmatpush1.msra.mxu0 %v3666
  %3692 = vmatprep.subr.mxu0 0.0
  %3693 = vmatpush1.msra.mxu0 %v3667
  %3694 = vmatprep.subr.mxu0 0.0
  %3695 = vmatpush1.msra.mxu0 %v3668
  %3696 = vmatprep.subr.mxu0 0.0
  %3697 = vmatpush1.msra.mxu0 %v3669
  %3698 = vmatprep.subr.mxu0 0.0
  %3699 = vmatpush1.msra.mxu0 %v3670
  %3700 = vmatprep.subr.mxu0 0.0
  %3701 = vmatpush1.msra.mxu0 %v3671
  %3702 = vmatprep.subr.mxu0 0.0
  %3703 = vmatpush1.msra.mxu0 %v3672
  %3704 = vmatprep.subr.mxu0 0.0
  %3705 = vmatpush1.msra.mxu0 %v3673
  %3706 = vmatprep.subr.mxu0 0.0
  %3707 = vmatpush1.msra.mxu0 %v3674
  %3708 = vmatprep.subr.mxu0 0.0
  %3709 = vmatpush1.msra.mxu0 %v3675
  %3710 = vmatprep.subr.mxu0 0.0
  %3711 = vmatpush1.msra.mxu0 %v3676
  %3712 = vmatprep.subr.mxu0 0.0
  %3713 = vmatpush1.msra.mxu0 %v3677
  %3714 = vmatprep.subr.mxu0 0.0
  %3715 = vmatpush1.msra.mxu0 %v3678
  %3716 = vmatprep.subr.mxu0 0.0
  %3717 = vmatpush1.msra.mxu0 %v3679
  %3718 = vmatprep.subr.mxu0 0.0
  %3719 = vmatpush1.msra.mxu0 %v3680
  %3720 = vmatprep.subr.mxu0 0.0
  %3721 = vmatpush1.msra.mxu0 %v3681
  %3722 = vmatprep.subr.mxu0 0.0
  %3723 = vmatpush1.msra.mxu0 0.0
  %3724 = vmatprep.subr.mxu0 0.0
  %3725 = vmatpush1.msra.mxu0 0.0
  %3726 = vmatprep.subr.mxu0 0.0
  %3727 = vmatpush1.msra.mxu0 0.0
  %3728 = vmatprep.subr.mxu0 0.0
  %3729 = vmatpush1.msra.mxu0 0.0
  %3730 = vmatprep.subr.mxu0 0.0
  %3731 = vmatpush1.msra.mxu0 0.0
  %3732 = vmatprep.subr.mxu0 0.0
  %3733 = vmatpush1.msra.mxu0 0.0
  %3734 = vmatprep.subr.mxu0 0.0
  %3735 = vmatpush1.msra.mxu0 0.0
  %3736 = vmatprep.subr.mxu0 0.0
  %3737 = vmatpush1.msra.mxu0 0.0
  %3738 = vmatprep.subr.mxu0 0.0
  %3739 = vmatpush1.msra.mxu0 0.0
  %3740 = vmatprep.subr.mxu0 0.0
  %3741 = vmatpush1.msra.mxu0 0.0
  %3742 = vmatprep.subr.mxu0 0.0
  %3743 = vmatpush1.msra.mxu0 0.0
  %3744 = vmatprep.subr.mxu0 0.0
  %3745 = vmatpush1.msra.mxu0 0.0
  %3746 = vmatprep.subr.mxu0 0.0
  %3747 = vmatpush1.msra.mxu0 0.0
  %3748 = vmatprep.subr.mxu0 0.0
  %3749 = vmatpush1.msra.mxu0 0.0
  %3750 = vmatprep.subr.mxu0 0.0
  %3751 = vmatpush1.msra.mxu0 0.0
  %3752 = vmatprep.subr.mxu0 0.0
  %3753 = vmatpush1.msra.mxu0 0.0
  %3754 = vmatprep.mubr.f32.mxu0 0.0
  %3755 = vmatmul.mubr.f32.gmra.mrb[0].mxu0 %v3663
  %v3756 = vpop.f32.mrb[0].mxu0
  %v3757 = vadd.f32 %v3688, %v3756
  %v3758 = vpop.f32.mrb[0].mxu0
  %3759 = vmatprep.mubr.f32.mxu0 0.0
  %3760 = vmatmul.mubr.f32.gmra.mrb[0].mxu0 %v3664
  %v3761 = vpop.f32.mrb[0].mxu0
  %v3762 = vadd.f32 %v3688, %v3761
  %v3763 = vpop.f32.mrb[0].mxu0
  %3764 = vdwg.mxu0
  %v3765 = vadd.f32 %v3515, %v3757
  %v3766 = vadd.f32 %v3516, %v3762
  %s3767 = scalar_lea.vmem %s11, 1
  %v3768 = vld [vmem:[%s3767] sm:$0x1]
  %s3769 = scalar_lea.vmem %s12, 1
  %v3770 = vld [vmem:[%s3769] sm:$0x1]
  %v3771 = vsel %vm63, %v3765, 0.0
  %3772 = vadd.xlane.f32.xlu0 %v3771
  %v3773 = vpop.xlane.xlu0 %3772
  %v3774 = vsel %vm63, %v3766, 0.0
  %3775 = vadd.xlane.f32.xlu0 %v3774
  %v3776 = vpop.xlane.xlu0 %3775
  %v3777 = vmul.f32 %v3773, %v1602
  %v3778 = vmul.f32 %v3776, %v1602
  %v3779 = vsub.f32 %v3765, %v3777
  %v3780 = vsub.f32 %v3766, %v3778
  %v3781 = vmul.f32 %v3779, %v3779
  %v3782 = vmul.f32 %v3780, %v3780
  %v3783 = vsel %vm63, %v3781, 0.0
  %3784 = vadd.xlane.f32.xlu0 %v3783
  %v3785 = vpop.xlane.xlu0 %3784
  %v3786 = vsel %vm63, %v3782, 0.0
  %3787 = vadd.xlane.f32.xlu0 %v3786
  %v3788 = vpop.xlane.xlu0 %3787
  %v3789 = vmul.f32 %v3785, %v1602
  %v3790 = vmul.f32 %v3788, %v1602
  %v3791 = vadd.f32 %v3789, 1e-05
  %v3792 = vadd.f32 %v3790, 1e-05
  %v3793 = vrsqrt.pop %v3791
  %v3794 = vrsqrt.pop %v3792
  %v3795 = vmul.f32 %v3779, %v3793
  %v3796 = vmul.f32 %v3780, %v3794
  %v3798 = vlaneseq
  %v3799 = vshrl.u32 %v3798, 7
  %v3800 = vsub.s32 0, %v3799
  %v3801 = vrot.slane %v3768, %v3800
  %v3803 = vmul.f32 %v3795, %v3801
  %v3804 = vmul.f32 %v3796, %v3801
  %v3806 = vlaneseq
  %v3807 = vshrl.u32 %v3806, 7
  %v3808 = vsub.s32 0, %v3807
  %v3809 = vrot.slane %v3770, %v3808
  %v3811 = vadd.f32 %v3803, %v3809
  %v3812 = vadd.f32 %v3804, %v3809
  %v3813 = vld [vmem:[%s13] sm:$0xff]
  %v3814 = vld [vmem:[%s13 + $0x8] sm:$0xff]
  %v3815 = vld [vmem:[%s13 + $0x10] sm:$0xff]
  %v3816 = vld [vmem:[%s13 + $0x18] sm:$0xff]
  %v3817 = vld [vmem:[%s13 + $0x20] sm:$0xff]
  %v3818 = vld [vmem:[%s13 + $0x28] sm:$0xff]
  %v3819 = vld [vmem:[%s13 + $0x30] sm:$0xff]
  %v3820 = vld [vmem:[%s13 + $0x38] sm:$0xff]
  %v3821 = vld [vmem:[%s14] sm:$0x3]
  %v3823 = vlaneseq
  %v3824 = vshrl.u32 %v3823, 7
  %v3825 = vsub.s32 0, %v3824
  %v3826 = vrot.slane %v3821, %v3825
  %v3827 = vlaneseq
  %v3828 = vshrl.u32 %v3827, 7
  %v3829 = vsub.s32 1, %v3828
  %v3830 = vrot.slane %v3821, %v3829
  %v3834 = vsel %vm63, %v3811, 0
  %v3837 = vsel %vm63, %v3812, 0
  %3839 = vmatprep.subr.mxu0 %v3814
  %3840 = vmatpush1.msra.mxu0 %v3813
  %3841 = vmatprep.subr.mxu0 %v3816
  %3842 = vmatpush1.msra.mxu0 %v3815
  %3843 = vmatprep.subr.mxu0 %v3818
  %3844 = vmatpush1.msra.mxu0 %v3817
  %3845 = vmatprep.subr.mxu0 %v3820
  %3846 = vmatpush1.msra.mxu0 %v3819
  %3847 = vmatprep.subr.mxu0 0.0
  %3848 = vmatpush1.msra.mxu0 0.0
  %3849 = vmatprep.subr.mxu0 0.0
  %3850 = vmatpush1.msra.mxu0 0.0
  %3851 = vmatprep.subr.mxu0 0.0
  %3852 = vmatpush1.msra.mxu0 0.0
  %3853 = vmatprep.subr.mxu0 0.0
  %3854 = vmatpush1.msra.mxu0 0.0
  %3855 = vmatprep.subr.mxu0 0.0
  %3856 = vmatpush1.msra.mxu0 0.0
  %3857 = vmatprep.subr.mxu0 0.0
  %3858 = vmatpush1.msra.mxu0 0.0
  %3859 = vmatprep.subr.mxu0 0.0
  %3860 = vmatpush1.msra.mxu0 0.0
  %3861 = vmatprep.subr.mxu0 0.0
  %3862 = vmatpush1.msra.mxu0 0.0
  %3863 = vmatprep.subr.mxu0 0.0
  %3864 = vmatpush1.msra.mxu0 0.0
  %3865 = vmatprep.subr.mxu0 0.0
  %3866 = vmatpush1.msra.mxu0 0.0
  %3867 = vmatprep.subr.mxu0 0.0
  %3868 = vmatpush1.msra.mxu0 0.0
  %3869 = vmatprep.subr.mxu0 0.0
  %3870 = vmatpush1.msra.mxu0 0.0
  %3871 = vmatprep.subr.mxu0 0.0
  %3872 = vmatpush1.msra.mxu0 0.0
  %3873 = vmatprep.subr.mxu0 0.0
  %3874 = vmatpush1.msra.mxu0 0.0
  %3875 = vmatprep.subr.mxu0 0.0
  %3876 = vmatpush1.msra.mxu0 0.0
  %3877 = vmatprep.subr.mxu0 0.0
  %3878 = vmatpush1.msra.mxu0 0.0
  %3879 = vmatprep.subr.mxu0 0.0
  %3880 = vmatpush1.msra.mxu0 0.0
  %3881 = vmatprep.subr.mxu0 0.0
  %3882 = vmatpush1.msra.mxu0 0.0
  %3883 = vmatprep.subr.mxu0 0.0
  %3884 = vmatpush1.msra.mxu0 0.0
  %3885 = vmatprep.subr.mxu0 0.0
  %3886 = vmatpush1.msra.mxu0 0.0
  %3887 = vmatprep.subr.mxu0 0.0
  %3888 = vmatpush1.msra.mxu0 0.0
  %3889 = vmatprep.subr.mxu0 0.0
  %3890 = vmatpush1.msra.mxu0 0.0
  %3891 = vmatprep.subr.mxu0 0.0
  %3892 = vmatpush1.msra.mxu0 0.0
  %3893 = vmatprep.subr.mxu0 0.0
  %3894 = vmatpush1.msra.mxu0 0.0
  %3895 = vmatprep.subr.mxu0 0.0
  %3896 = vmatpush1.msra.mxu0 0.0
  %3897 = vmatprep.subr.mxu0 0.0
  %3898 = vmatpush1.msra.mxu0 0.0
  %3899 = vmatprep.subr.mxu0 0.0
  %3900 = vmatpush1.msra.mxu0 0.0
  %3901 = vmatprep.subr.mxu0 0.0
  %3902 = vmatpush1.msra.mxu0 0.0
  %3903 = vmatprep.mubr.f32.mxu0 0.0
  %3904 = vmatmul.mubr.f32.gmra.mrb[0].mxu0 %v3834
  %v3905 = vpop.f32.mrb[0].mxu0
  %v3906 = vadd.f32 %v3826, %v3905
  %v3907 = vpop.f32.mrb[0].mxu0
  %v3908 = vadd.f32 %v3830, %v3907
  %3909 = vmatprep.mubr.f32.mxu0 0.0
  %3910 = vmatmul.mubr.f32.gmra.mrb[0].mxu0 %v3837
  %v3911 = vpop.f32.mrb[0].mxu0
  %v3912 = vadd.f32 %v3826, %v3911
  %v3913 = vpop.f32.mrb[0].mxu0
  %v3914 = vadd.f32 %v3830, %v3913
  %3915 = vdwg.mxu0
  %3916 = vst [vmem:[%s15] sm:$0xff] %v3906
  %3917 = vst [vmem:[%s15 + $0x8] sm:$0xff] %v3908
  %3918 = vst [vmem:[%s15 + $0x10] sm:$0xff] %v3912
  %3919 = vst [vmem:[%s15 + $0x18] sm:$0xff] %v3914
  // Predicated region
  $region62: #{gpt2_decoder_forward.1} parent=0 // pred_check
    _
  $region63: #{gpt2_decoder_forward.1} parent=0 // pred_check_branch
    %3921 = sbr.rel (0) target = $region65
  $region64: #{gpt2_decoder_forward.1} parent=0 // pred_region
    _
  $region65: #{gpt2_decoder_forward.1} parent=0 // pred_fallthru
    _
  // Predicated region
  $region66: #{gpt2_decoder_forward.1} parent=0 // pred_check
    _
  $region67: #{gpt2_decoder_forward.1} parent=0 // pred_check_branch
    %3923 = sbr.rel (0) target = $region69
  $region68: #{gpt2_decoder_forward.1} parent=0 // pred_region
    _
  $region69: #{gpt2_decoder_forward.1} parent=0 // pred_fallthru
    _

</llo_original>
